<compile_context>
chip_gen: v7x
topology: tpu7x:2x2x1
jax: 0.10.0
libtpu: 0.0.40
codegen_flags: <defaults>
</compile_context>

<pallas_src>
import functools

import jax
import jax.numpy as jnp
from jax.experimental import pallas as pl
from jax.experimental.pallas import tpu as pltpu

EMBED_DIM = 42
EMBED_PAD = 128          # pad 42-dim input features to a full lane for the MXU
H1, H2, H3 = 256, 128, 64
OUT_LANES = 128          # lane-dense head output width (sliced back to 1 outside the kernel)
EPS = 1e-5               # torch_geometric GraphNorm eps
NEG_BIG = float(jnp.finfo(jnp.float32).min)
VMEM_LIMIT = 48 * 1024 * 1024


def _round_up(x, m):
    return (x + m - 1) // m * m


def _pick_tile(n_pad):
    for t in (512, 256, 128):
        if n_pad % t == 0:
            return t
    return n_pad


# ----------------------------------------------------------------------------- kernels
def gcn_layer_kernel(a_ref, x_ref, w_ref, b_ref, pool_ref, scat_ref,
                     gamma_ref, beta_ref, ms_ref, pw_ref, o_ref, acc_ref):
    # Accumulate A[:, k-panel] @ (X[k-panel, :] @ W) over the reduction grid axis, then
    # (at k == last) add bias, apply GraphNorm and PReLU, and emit bf16 node features.
    k = pl.program_id(0)

    @pl.when(k == 0)
    def _init():
        acc_ref[...] = jnp.zeros_like(acc_ref)

    xw = jnp.dot(x_ref[...], w_ref[...], preferred_element_type=jnp.float32)
    acc_ref[...] += jnp.dot(a_ref[...], xw.astype(jnp.bfloat16),
                            preferred_element_type=jnp.float32)

    @pl.when(k == pl.num_programs(0) - 1)
    def _finalize():
        h = acc_ref[...] + b_ref[...]                                              # conv bias
        # GraphNorm: centered = h - mean_scale * mean_g[batch]
        #            out = gamma * centered / sqrt(var_g[batch] + eps) + beta
        mean_g = jnp.dot(pool_ref[...], h, preferred_element_type=jnp.float32)     # (G, F)
        mean_n = jnp.dot(scat_ref[...], mean_g, preferred_element_type=jnp.float32)
        centered = h - ms_ref[...] * mean_n
        var_g = jnp.dot(pool_ref[...], centered * centered,
                        preferred_element_type=jnp.float32)                        # (G, F)
        var_n = jnp.dot(scat_ref[...], var_g, preferred_element_type=jnp.float32)
        normed = gamma_ref[...] * centered * jax.lax.rsqrt(var_n + EPS) + beta_ref[...]
        act = jnp.where(normed >= 0, normed, pw_ref[...] * normed)                 # PReLU
        o_ref[...] = act.astype(o_ref.dtype)


def pool_head_kernel(h_ref, pool_ref, scat_ref, w1_ref, b1_ref, pw1_ref,
                     w2_ref, b2_ref, pw2_ref, w3_ref, b3_ref, o_ref,
                     sum_acc, max_acc):
    # Single pass over row tiles of the node features: accumulate segment mean (via MXU)
    # and segment max (running accumulator). At the last tile, run the MLP head and write a
    # lane-dense (G, OUT_LANES) output.
    i = pl.program_id(0)

    @pl.when(i == 0)
    def _init():
        sum_acc[...] = jnp.zeros_like(sum_acc)
        max_acc[...] = jnp.full_like(max_acc, NEG_BIG)

    h = h_ref[...].astype(jnp.float32)                                             # (TM, F)
    # mean pool: pool rows already carry 1/count, so summing over tiles gives the mean.
    sum_acc[...] += jnp.dot(pool_ref[...], h, preferred_element_type=jnp.float32)

    # max pool: masked per-graph reduce over this tile only, running max across tiles.
    # TODO(synk): for batches with many graphs, switch to per-graph node slices via
    #             scalar-prefetched graph offsets (contiguous PyG batching) to make this O(N*F).
    num_graphs = scat_ref.shape[1]
    tile_max = []
    for gg in range(num_graphs):   # static unroll; G is small
        masked = jnp.where(scat_ref[:, gg:gg + 1] > 0.5, h, NEG_BIG)
        tile_max.append(jnp.max(masked, axis=0, keepdims=True))
    max_acc[...] = jnp.maximum(max_acc[...], jnp.concatenate(tile_max, axis=0))

    @pl.when(i == pl.num_programs(0) - 1)
    def _head():
        f = sum_acc.shape[1]
        # lin1 on concat([mean, max]) == mean @ W1[:F] + max @ W1[F:]
        z = (jnp.dot(sum_acc[...], w1_ref[:f, :], preferred_element_type=jnp.float32)
             + jnp.dot(max_acc[...], w1_ref[f:, :], preferred_element_type=jnp.float32)
             + b1_ref[...])
        z = jnp.where(z >= 0, z, pw1_ref[...] * z)                                 # PReLU(weight0)
        z = jnp.dot(z, w2_ref[...], preferred_element_type=jnp.float32) + b2_ref[...]
        z = jnp.where(z >= 0, z, pw2_ref[...] * z)                                 # PReLU(weight2)
        # lin3 has a single output unit: lane reduction instead of an N=1 matmul.
        y = jnp.sum(z * w3_ref[...], axis=-1, keepdims=True) + b3_ref[...]         # (G, 1)
        o_ref[...] = jnp.broadcast_to(y, o_ref.shape)                              # lane-dense store


# ----------------------------------------------------------------------------- wrappers
def gcn_graphnorm_prelu(a, x, w, b, pool, scat, gamma, beta, ms, pw):
    n_pad = a.shape[0]
    tk = _pick_tile(n_pad)
    fin, fout = w.shape
    g = pool.shape[0]
    const = lambda k: (0, 0)
    return pl.pallas_call(
        gcn_layer_kernel,
        out_shape=jax.ShapeDtypeStruct((n_pad, fout), jnp.bfloat16),
        grid_spec=pltpu.PrefetchScalarGridSpec(
            num_scalar_prefetch=0,
            grid=(n_pad // tk,),
            in_specs=[
                pl.BlockSpec((n_pad, tk), lambda k: (0, k)),   # A column panel (bf16)
                pl.BlockSpec((tk, fin), lambda k: (k, 0)),     # X row panel (bf16)
                pl.BlockSpec((fin, fout), const),              # conv weight (bf16)
                pl.BlockSpec((1, fout), const),                # conv bias
                pl.BlockSpec((g, n_pad), const),               # segment-mean matrix
                pl.BlockSpec((n_pad, g), const),               # one-hot membership matrix
                pl.BlockSpec((1, fout), const),                # GraphNorm weight
                pl.BlockSpec((1, fout), const),                # GraphNorm bias
                pl.BlockSpec((1, fout), const),                # GraphNorm mean_scale
                pl.BlockSpec((1, fout), const),                # PReLU weight
            ],
            out_specs=pl.BlockSpec((n_pad, fout), const),
            scratch_shapes=[pltpu.VMEM((n_pad, fout), jnp.float32)],
        ),
        compiler_params=pltpu.CompilerParams(
            dimension_semantics=("arbitrary",),
            vmem_limit_bytes=VMEM_LIMIT,
        ),
    )(a, x, w, b, pool, scat, gamma, beta, ms, pw)


def pool_mlp_head(h, pool, scat, params):
    n_pad, f = h.shape
    g = pool.shape[0]
    tm = _pick_tile(n_pad)
    const = lambda i: (0, 0)
    return pl.pallas_call(
        pool_head_kernel,
        out_shape=jax.ShapeDtypeStruct((g, OUT_LANES), jnp.float32),
        grid_spec=pltpu.PrefetchScalarGridSpec(
            num_scalar_prefetch=0,
            grid=(n_pad // tm,),
            in_specs=[
                pl.BlockSpec((tm, f), lambda i: (i, 0)),       # node features (bf16)
                pl.BlockSpec((g, tm), lambda i: (0, i)),       # segment-mean matrix panel
                pl.BlockSpec((tm, g), lambda i: (i, 0)),       # one-hot membership panel
                pl.BlockSpec((2 * f, f), const),               # lin1 weight
                pl.BlockSpec((1, f), const),                   # lin1 bias
                pl.BlockSpec((1, f), const),                   # PReLU weight0
                pl.BlockSpec((f, H3), const),                  # lin2 weight
                pl.BlockSpec((1, H3), const),                  # lin2 bias
                pl.BlockSpec((1, H3), const),                  # PReLU weight2
                pl.BlockSpec((1, H3), const),                  # lin3 weight (row)
                pl.BlockSpec((1, 1), const),                   # lin3 bias
            ],
            out_specs=pl.BlockSpec((g, OUT_LANES), const),
            scratch_shapes=[pltpu.VMEM((g, f), jnp.float32),   # mean accumulator
                            pltpu.VMEM((g, f), jnp.float32)],  # max accumulator
        ),
        compiler_params=pltpu.CompilerParams(
            dimension_semantics=("arbitrary",),
            vmem_limit_bytes=VMEM_LIMIT,
        ),
    )(h, pool, scat,
      params["w_lin1"], params["b_lin1"], params["prelu0"],
      params["w_lin2"], params["b_lin2"], params["prelu2"],
      params["w_lin3"], params["b_lin3"])


# ----------------------------------------------------------------------------- glue
def gcn_norm_dense(edge_index, edge_attr, num_nodes, num_nodes_pad):
    # Data-dependent scatter into a dense normalized adjacency A[target, source]
    # (PyG GCNConv: self-loops with weight 1, symmetric normalization, edge_attr weights).
    row, col = edge_index[0], edge_index[1]
    loop = jnp.arange(num_nodes, dtype=edge_index.dtype)
    row = jnp.concatenate([row, loop])
    col = jnp.concatenate([col, loop])
    ew = jnp.concatenate([edge_attr.astype(jnp.float32),
                          jnp.ones((num_nodes,), jnp.float32)])
    deg = jnp.zeros((num_nodes,), jnp.float32).at[col].add(ew)
    dinv = jnp.where(deg > 0, jax.lax.rsqrt(deg), 0.0)
    norm = dinv[row] * ew * dinv[col]
    a = jnp.zeros((num_nodes_pad, num_nodes_pad), jnp.float32).at[col, row].add(norm)
    return a


def net10_forward(params, x, edge_index, edge_attr, batch, num_graphs):
    n = x.shape[0]
    n_pad = _round_up(max(n, 128), 128)

    a = gcn_norm_dense(edge_index, edge_attr, n, n_pad).astype(jnp.bfloat16)

    # segment matrices; padded nodes get batch id -1 -> all-zero one-hot row (inert everywhere)
    batch_pad = (jnp.concatenate([batch, jnp.full((n_pad - n,), -1, batch.dtype)])
                 if n_pad > n else batch)
    scat = jax.nn.one_hot(batch_pad, num_graphs, dtype=jnp.float32)     # (N_pad, G)
    counts = jnp.sum(scat, axis=0)                                       # (G,)
    pool = (scat / counts[None, :]).T                                    # (G, N_pad)

    # pad the 42-dim features / conv1 weight rows to 128 lanes, cast matmul operands to bf16
    x_pad = jnp.zeros((n_pad, EMBED_PAD), jnp.bfloat16).at[:n, :EMBED_DIM].set(
        x.astype(jnp.bfloat16))
    w1 = jnp.zeros((EMBED_PAD, H1), jnp.bfloat16).at[:EMBED_DIM, :].set(
        params["w_conv1"].astype(jnp.bfloat16))
    w2 = params["w_conv2"].astype(jnp.bfloat16)

    # conv1 -> GraphNorm -> PReLU(weight1) -> dropout(identity)   (fused kernel)
    h = gcn_graphnorm_prelu(a, x_pad, w1, params["b_conv1"], pool, scat,
                            params["gn1_w"], params["gn1_b"], params["gn1_ms"],
                            params["prelu1"])
    # conv2 -> GraphNorm -> PReLU(weight0) -> dropout(identity)   (fused kernel)
    h = gcn_graphnorm_prelu(a, h, w2, params["b_conv2"], pool, scat,
                            params["gn2_w"], params["gn2_b"], params["gn2_ms"],
                            params["prelu0"])
    # [global_mean_pool || global_max_pool] -> lin1 -> PReLU -> lin2 -> PReLU -> lin3  (fused)
    out = pool_mlp_head(h, pool, scat, params)
    return jnp.squeeze(out[:, :1])          # matches x.squeeze()


# ----------------------------------------------------------------------------- params
def init_params(key):
    ks = jax.random.split(key, 8)
    scale = 0.1
    p = {
        # GCNConv 1 / 2 (weights stored as (in, out); conv bias included)
        "w_conv1": scale * jax.random.normal(ks[0], (EMBED_DIM, H1), jnp.float32),
        "b_conv1": jnp.zeros((1, H1), jnp.float32),
        "w_conv2": scale * jax.random.normal(ks[1], (H1, H2), jnp.float32),
        "b_conv2": jnp.zeros((1, H2), jnp.float32),
        # GraphNorm 1 / 2: weight=1, bias=0, mean_scale=1 (default init)
        "gn1_w": jnp.ones((1, H1), jnp.float32),
        "gn1_b": jnp.zeros((1, H1), jnp.float32),
        "gn1_ms": jnp.ones((1, H1), jnp.float32),
        "gn2_w": jnp.ones((1, H2), jnp.float32),
        "gn2_b": jnp.zeros((1, H2), jnp.float32),
        "gn2_ms": jnp.ones((1, H2), jnp.float32),
        # PReLU weights, all filled with 0.25 as in the module
        "prelu1": jnp.full((1, H1), 0.25, jnp.float32),
        "prelu0": jnp.full((1, H2), 0.25, jnp.float32),
        "prelu2": jnp.full((1, H3), 0.25, jnp.float32),
        # Linear layers (stored as (in, out))
        "w_lin1": scale * jax.random.normal(ks[2], (2 * H2, H2), jnp.float32),
        "b_lin1": scale * jax.random.normal(ks[3], (1, H2), jnp.float32),
        "w_lin2": scale * jax.random.normal(ks[4], (H2, H3), jnp.float32),
        "b_lin2": scale * jax.random.normal(ks[5], (1, H3), jnp.float32),
        "w_lin3": scale * jax.random.normal(ks[6], (1, H3), jnp.float32),  # lin3 weight row
        "b_lin3": scale * jax.random.normal(ks[7], (1, 1), jnp.float32),
    }
    return p


# ----------------------------------------------------------------------------- main
if __name__ == "__main__":
    key = jax.random.PRNGKey(0)
    k_param, k_x, k_e = jax.random.split(key, 3)

    num_nodes, num_graphs = 16, 2           # two graphs of 8 nodes each
    nodes_per_graph = num_nodes // num_graphs

    # node features
    x = jax.random.normal(k_x, (num_nodes, EMBED_DIM), jnp.float32)

    # bidirectional ring edges within each graph
    src, dst = [], []
    for base in range(0, num_nodes, nodes_per_graph):
        for i in range(nodes_per_graph):
            a_, b_ = base + i, base + (i + 1) % nodes_per_graph
            src += [a_, b_]
            dst += [b_, a_]
    edge_index = jnp.array([src, dst], dtype=jnp.int32)
    edge_attr = jax.random.uniform(k_e, (edge_index.shape[1],), jnp.float32,
                                   minval=0.5, maxval=1.5)
    batch = jnp.array([g for g in range(num_graphs) for _ in range(nodes_per_graph)],
                      dtype=jnp.int32)

    params = init_params(k_param)

    fwd = jax.jit(functools.partial(net10_forward, num_graphs=num_graphs))
    out = fwd(params, x, edge_index, edge_attr, batch)
    jax.block_until_ready(out)
    assert out.shape == (num_graphs,)
    print("KERNEL_OK")
</pallas_src>

<mosaic_0001>
module attributes {stable_mosaic.version = 11 : i64} {
  func.func private @main(%arg0: i32) attributes {dimension_semantics = [#tpu.dimension_semantics<core_parallel>], iteration_bounds = array<i64: 2>, tpu.core_type = #tpu.core_type<sc_scalar_subcore>, window_params = []} {
    return
  }
}

module attributes {stable_mosaic.version = 11 : i64} {
  func.func private @main(%arg0: i32) attributes {dimension_semantics = [#tpu.dimension_semantics<core_parallel>], iteration_bounds = array<i64: 2>, tpu.core_type = #tpu.core_type<sc_scalar_subcore>, window_params = []} {
    return
  }
}

module attributes {stable_mosaic.version = 11 : i64} {
  func.func @gcn_layer_kernel(%arg0: i32, %arg1: memref<128x128xbf16, #tpu.memory_space<vmem>>, %arg2: memref<128x256xbf16, #tpu.memory_space<vmem>>, %arg3: memref<256x128xbf16, #tpu.memory_space<vmem>>, %arg4: memref<1x128xf32, #tpu.memory_space<vmem>>, %arg5: memref<2x128xf32, #tpu.memory_space<vmem>>, %arg6: memref<128x2xf32, #tpu.memory_space<vmem>>, %arg7: memref<1x128xf32, #tpu.memory_space<vmem>>, %arg8: memref<1x128xf32, #tpu.memory_space<vmem>>, %arg9: memref<1x128xf32, #tpu.memory_space<vmem>>, %arg10: memref<1x128xf32, #tpu.memory_space<vmem>>, %arg11: memref<128x128xbf16, #tpu.memory_space<vmem>>, %arg12: memref<128x128xf32, #tpu.memory_space<vmem>>) attributes {dimension_semantics = [#tpu.dimension_semantics<arbitrary>], iteration_bounds = array<i64: 1>, scalar_prefetch = 0 : i64, scratch_operands = 1 : i64, tpu.core_type = #tpu.core_type<tc>, window_params = [{transform_indices = @transform_0, window_bounds = array<i64: 128, 128>}, {transform_indices = @transform_1, window_bounds = array<i64: 128, 256>}, {pipeline_mode = #tpu.pipeline_mode<synchronous>, transform_indices = @transform_2, window_bounds = array<i64: 256, 128>}, {pipeline_mode = #tpu.pipeline_mode<synchronous>, transform_indices = @transform_3, window_bounds = array<i64: 1, 128>}, {pipeline_mode = #tpu.pipeline_mode<synchronous>, transform_indices = @transform_4, window_bounds = array<i64: 2, 128>}, {pipeline_mode = #tpu.pipeline_mode<synchronous>, transform_indices = @transform_5, window_bounds = array<i64: 128, 2>}, {pipeline_mode = #tpu.pipeline_mode<synchronous>, transform_indices = @transform_6, window_bounds = array<i64: 1, 128>}, {pipeline_mode = #tpu.pipeline_mode<synchronous>, transform_indices = @transform_7, window_bounds = array<i64: 1, 128>}, {pipeline_mode = #tpu.pipeline_mode<synchronous>, transform_indices = @transform_8, window_bounds = array<i64: 1, 128>}, {pipeline_mode = #tpu.pipeline_mode<synchronous>, transform_indices = @transform_9, window_bounds = array<i64: 1, 128>}, {pipeline_mode = #tpu.pipeline_mode<synchronous>, transform_indices = @transform_10, window_bounds = array<i64: 128, 128>}]} {
    %c0_i32 = arith.constant 0 : i32
    %0 = arith.cmpi eq, %arg0, %c0_i32 : i32
    %1 = arith.extui %0 : i1 to i32
    %c0_i32_0 = arith.constant 0 : i32
    %2 = arith.cmpi ne, %1, %c0_i32_0 : i32
    scf.if %2 {
      %cst_13 = arith.constant 0.000000e+00 : f32
      %15 = vector.broadcast %cst_13 : f32 to vector<128x128xf32>
      %c0_14 = arith.constant 0 : index
      %c0_15 = arith.constant 0 : index
      %16 = vector.load %arg12[%c0_14, %c0_15] : memref<128x128xf32, #tpu.memory_space<vmem>>, vector<128x128xf32>
      tpu.vector_store %arg12[%c0_14, %c0_15], %15 {strides = array<i32>} : memref<128x128xf32, #tpu.memory_space<vmem>>, vector<128x128xf32>,
    } else {
    }
    %c0 = arith.constant 0 : index
    %c0_1 = arith.constant 0 : index
    %3 = vector.load %arg2[%c0, %c0_1] : memref<128x256xbf16, #tpu.memory_space<vmem>>, vector<128x256xbf16>
    %c0_2 = arith.constant 0 : index
    %c0_3 = arith.constant 0 : index
    %4 = vector.load %arg3[%c0_2, %c0_3] : memref<256x128xbf16, #tpu.memory_space<vmem>>, vector<256x128xbf16>
    %cst = arith.constant dense<0.000000e+00> : vector<128x128xf32>
    %5 = tpu.matmul %3, %4, %cst {dimension_numbers = #tpu.dot_dimension_numbers<[1], [0], [0], [1], [0, 0, 1, 1], [], []>} : vector<128x256xbf16>, vector<256x128xbf16>, vector<128x128xf32> -> vector<128x128xf32>
    %c0_4 = arith.constant 0 : index
    %c0_5 = arith.constant 0 : index
    %6 = vector.load %arg12[%c0_4, %c0_5] : memref<128x128xf32, #tpu.memory_space<vmem>>, vector<128x128xf32>
    %c0_6 = arith.constant 0 : index
    %c0_7 = arith.constant 0 : index
    %7 = vector.load %arg1[%c0_6, %c0_7] : memref<128x128xbf16, #tpu.memory_space<vmem>>, vector<128x128xbf16>
    %8 = arith.truncf %5 : vector<128x128xf32> to vector<128x128xbf16>
    %cst_8 = arith.constant dense<0.000000e+00> : vector<128x128xf32>
    %9 = tpu.matmul %7, %8, %cst_8 {dimension_numbers = #tpu.dot_dimension_numbers<[1], [0], [0], [1], [0, 0, 1, 1], [], []>} : vector<128x128xbf16>, vector<128x128xbf16>, vector<128x128xf32> -> vector<128x128xf32>
    %10 = arith.addf %6, %9 : vector<128x128xf32>
    %c0_9 = arith.constant 0 : index
    %c0_10 = arith.constant 0 : index
    %11 = vector.load %arg12[%c0_9, %c0_10] : memref<128x128xf32, #tpu.memory_space<vmem>>, vector<128x128xf32>
    tpu.vector_store %arg12[%c0_9, %c0_10], %10 {strides = array<i32>} : memref<128x128xf32, #tpu.memory_space<vmem>>, vector<128x128xf32>,
    %c0_i32_11 = arith.constant 0 : i32
    %12 = arith.cmpi eq, %arg0, %c0_i32_11 : i32
    %13 = arith.extui %12 : i1 to i32
    %c0_i32_12 = arith.constant 0 : i32
    %14 = arith.cmpi ne, %13, %c0_i32_12 : i32
    scf.if %14 {
      %c0_13 = arith.constant 0 : index
      %c0_14 = arith.constant 0 : index
      %15 = vector.load %arg12[%c0_13, %c0_14] : memref<128x128xf32, #tpu.memory_space<vmem>>, vector<128x128xf32>
      %c0_15 = arith.constant 0 : index
      %c0_16 = arith.constant 0 : index
      %16 = vector.load %arg4[%c0_15, %c0_16] : memref<1x128xf32, #tpu.memory_space<vmem>>, vector<1x128xf32>
      %17 = vector.broadcast %16 : vector<1x128xf32> to vector<128x128xf32>
      %18 = arith.addf %15, %17 : vector<128x128xf32>
      %c0_17 = arith.constant 0 : index
      %c0_18 = arith.constant 0 : index
      %19 = vector.load %arg5[%c0_17, %c0_18] : memref<2x128xf32, #tpu.memory_space<vmem>>, vector<2x128xf32>
      %cst_19 = arith.constant dense<0.000000e+00> : vector<2x128xf32>
      %20 = tpu.matmul %19, %18, %cst_19 {dimension_numbers = #tpu.dot_dimension_numbers<[1], [0], [0], [1], [0, 0, 1, 1], [], []>} : vector<2x128xf32>, vector<128x128xf32>, vector<2x128xf32> -> vector<2x128xf32>
      %c0_20 = arith.constant 0 : index
      %c0_21 = arith.constant 0 : index
      %21 = vector.load %arg6[%c0_20, %c0_21] : memref<128x2xf32, #tpu.memory_space<vmem>>, vector<128x2xf32>
      %cst_22 = arith.constant dense<0.000000e+00> : vector<128x128xf32>
      %22 = tpu.matmul %21, %20, %cst_22 {dimension_numbers = #tpu.dot_dimension_numbers<[1], [0], [0], [1], [0, 0, 1, 1], [], []>} : vector<128x2xf32>, vector<2x128xf32>, vector<128x128xf32> -> vector<128x128xf32>
      %c0_23 = arith.constant 0 : index
      %c0_24 = arith.constant 0 : index
      %23 = vector.load %arg9[%c0_23, %c0_24] : memref<1x128xf32, #tpu.memory_space<vmem>>, vector<1x128xf32>
      %24 = vector.broadcast %23 : vector<1x128xf32> to vector<128x128xf32>
      %25 = arith.mulf %24, %22 : vector<128x128xf32>
      %26 = arith.subf %18, %25 : vector<128x128xf32>
      %c0_25 = arith.constant 0 : index
      %c0_26 = arith.constant 0 : index
      %27 = vector.load %arg5[%c0_25, %c0_26] : memref<2x128xf32, #tpu.memory_space<vmem>>, vector<2x128xf32>
      %28 = arith.mulf %26, %26 : vector<128x128xf32>
      %cst_27 = arith.constant dense<0.000000e+00> : vector<2x128xf32>
      %29 = tpu.matmul %27, %28, %cst_27 {dimension_numbers = #tpu.dot_dimension_numbers<[1], [0], [0], [1], [0, 0, 1, 1], [], []>} : vector<2x128xf32>, vector<128x128xf32>, vector<2x128xf32> -> vector<2x128xf32>
      %c0_28 = arith.constant 0 : index
      %c0_29 = arith.constant 0 : index
      %30 = vector.load %arg6[%c0_28, %c0_29] : memref<128x2xf32, #tpu.memory_space<vmem>>, vector<128x2xf32>
      %cst_30 = arith.constant dense<0.000000e+00> : vector<128x128xf32>
      %31 = tpu.matmul %30, %29, %cst_30 {dimension_numbers = #tpu.dot_dimension_numbers<[1], [0], [0], [1], [0, 0, 1, 1], [], []>} : vector<128x2xf32>, vector<2x128xf32>, vector<128x128xf32> -> vector<128x128xf32>
      %c0_31 = arith.constant 0 : index
      %c0_32 = arith.constant 0 : index
      %32 = vector.load %arg7[%c0_31, %c0_32] : memref<1x128xf32, #tpu.memory_space<vmem>>, vector<1x128xf32>
      %33 = vector.broadcast %32 : vector<1x128xf32> to vector<128x128xf32>
      %34 = arith.mulf %33, %26 : vector<128x128xf32>
      %cst_33 = arith.constant 9.99999974E-6 : f32
      %35 = vector.broadcast %cst_33 : f32 to vector<128x128xf32>
      %36 = arith.addf %31, %35 : vector<128x128xf32>
      %37 = math.rsqrt %36 : vector<128x128xf32>
      %38 = arith.mulf %34, %37 : vector<128x128xf32>
      %c0_34 = arith.constant 0 : index
      %c0_35 = arith.constant 0 : index
      %39 = vector.load %arg8[%c0_34, %c0_35] : memref<1x128xf32, #tpu.memory_space<vmem>>, vector<1x128xf32>
      %40 = vector.broadcast %39 : vector<1x128xf32> to vector<128x128xf32>
      %41 = arith.addf %38, %40 : vector<128x128xf32>
      %cst_36 = arith.constant 0.000000e+00 : f32
      %42 = vector.broadcast %cst_36 : f32 to vector<128x128xf32>
      %43 = arith.cmpf oge, %41, %42 : vector<128x128xf32>
      %c0_37 = arith.constant 0 : index
      %c0_38 = arith.constant 0 : index
      %44 = vector.load %arg10[%c0_37, %c0_38] : memref<1x128xf32, #tpu.memory_space<vmem>>, vector<1x128xf32>
      %45 = vector.broadcast %44 : vector<1x128xf32> to vector<128x128xf32>
      %46 = arith.mulf %45, %41 : vector<128x128xf32>
      %47 = arith.select %43, %41, %46 : vector<128x128xi1>, vector<128x128xf32>
      %48 = arith.truncf %47 : vector<128x128xf32> to vector<128x128xbf16>
      %c0_39 = arith.constant 0 : index
      %c0_40 = arith.constant 0 : index
      %49 = vector.load %arg11[%c0_39, %c0_40] : memref<128x128xbf16, #tpu.memory_space<vmem>>, vector<128x128xbf16>
      tpu.vector_store %arg11[%c0_39, %c0_40], %48 {strides = array<i32>} : memref<128x128xbf16, #tpu.memory_space<vmem>>, vector<128x128xbf16>,
    } else {
    }
    return
  }
  func.func @transform_0(%arg0: i32) -> (i32, i32) {
    %c0_i32 = arith.constant 0 : i32
    %c0_i32_0 = arith.constant 0 : i32
    return %c0_i32, %arg0 : i32, i32
  }
  func.func @transform_1(%arg0: i32) -> (i32, i32) {
    %c0_i32 = arith.constant 0 : i32
    %c0_i32_0 = arith.constant 0 : i32
    return %arg0, %c0_i32 : i32, i32
  }
  func.func @transform_2(%arg0: i32) -> (i32, i32) {
    %c0_i32 = arith.constant 0 : i32
    %c0_i32_0 = arith.constant 0 : i32
    %c0_i32_1 = arith.constant 0 : i32
    return %c0_i32, %c0_i32_0 : i32, i32
  }
  func.func @transform_3(%arg0: i32) -> (i32, i32) {
    %c0_i32 = arith.constant 0 : i32
    %c0_i32_0 = arith.constant 0 : i32
    %c0_i32_1 = arith.constant 0 : i32
    return %c0_i32, %c0_i32_0 : i32, i32
  }
  func.func @transform_4(%arg0: i32) -> (i32, i32) {
    %c0_i32 = arith.constant 0 : i32
    %c0_i32_0 = arith.constant 0 : i32
    %c0_i32_1 = arith.constant 0 : i32
    return %c0_i32, %c0_i32_0 : i32, i32
  }
  func.func @transform_5(%arg0: i32) -> (i32, i32) {
    %c0_i32 = arith.constant 0 : i32
    %c0_i32_0 = arith.constant 0 : i32
    %c0_i32_1 = arith.constant 0 : i32
    return %c0_i32, %c0_i32_0 : i32, i32
  }
  func.func @transform_6(%arg0: i32) -> (i32, i32) {
    %c0_i32 = arith.constant 0 : i32
    %c0_i32_0 = arith.constant 0 : i32
    %c0_i32_1 = arith.constant 0 : i32
    return %c0_i32, %c0_i32_0 : i32, i32
  }
  func.func @transform_7(%arg0: i32) -> (i32, i32) {
    %c0_i32 = arith.constant 0 : i32
    %c0_i32_0 = arith.constant 0 : i32
    %c0_i32_1 = arith.constant 0 : i32
    return %c0_i32, %c0_i32_0 : i32, i32
  }
  func.func @transform_8(%arg0: i32) -> (i32, i32) {
    %c0_i32 = arith.constant 0 : i32
    %c0_i32_0 = arith.constant 0 : i32
    %c0_i32_1 = arith.constant 0 : i32
    return %c0_i32, %c0_i32_0 : i32, i32
  }
  func.func @transform_9(%arg0: i32) -> (i32, i32) {
    %c0_i32 = arith.constant 0 : i32
    %c0_i32_0 = arith.constant 0 : i32
    %c0_i32_1 = arith.constant 0 : i32
    return %c0_i32, %c0_i32_0 : i32, i32
  }
  func.func @transform_10(%arg0: i32) -> (i32, i32) {
    %c0_i32 = arith.constant 0 : i32
    %c0_i32_0 = arith.constant 0 : i32
    %c0_i32_1 = arith.constant 0 : i32
    return %c0_i32, %c0_i32_0 : i32, i32
  }
}

module attributes {stable_mosaic.version = 11 : i64} {
  func.func @gcn_layer_kernel(%arg0: i32, %arg1: memref<128x128xbf16, #tpu.memory_space<vmem>>, %arg2: memref<128x128xbf16, #tpu.memory_space<vmem>>, %arg3: memref<128x256xbf16, #tpu.memory_space<vmem>>, %arg4: memref<1x256xf32, #tpu.memory_space<vmem>>, %arg5: memref<2x128xf32, #tpu.memory_space<vmem>>, %arg6: memref<128x2xf32, #tpu.memory_space<vmem>>, %arg7: memref<1x256xf32, #tpu.memory_space<vmem>>, %arg8: memref<1x256xf32, #tpu.memory_space<vmem>>, %arg9: memref<1x256xf32, #tpu.memory_space<vmem>>, %arg10: memref<1x256xf32, #tpu.memory_space<vmem>>, %arg11: memref<128x256xbf16, #tpu.memory_space<vmem>>, %arg12: memref<128x256xf32, #tpu.memory_space<vmem>>) attributes {dimension_semantics = [#tpu.dimension_semantics<arbitrary>], iteration_bounds = array<i64: 1>, scalar_prefetch = 0 : i64, scratch_operands = 1 : i64, tpu.core_type = #tpu.core_type<tc>, window_params = [{transform_indices = @transform_0, window_bounds = array<i64: 128, 128>}, {transform_indices = @transform_1, window_bounds = array<i64: 128, 128>}, {pipeline_mode = #tpu.pipeline_mode<synchronous>, transform_indices = @transform_2, window_bounds = array<i64: 128, 256>}, {pipeline_mode = #tpu.pipeline_mode<synchronous>, transform_indices = @transform_3, window_bounds = array<i64: 1, 256>}, {pipeline_mode = #tpu.pipeline_mode<synchronous>, transform_indices = @transform_4, window_bounds = array<i64: 2, 128>}, {pipeline_mode = #tpu.pipeline_mode<synchronous>, transform_indices = @transform_5, window_bounds = array<i64: 128, 2>}, {pipeline_mode = #tpu.pipeline_mode<synchronous>, transform_indices = @transform_6, window_bounds = array<i64: 1, 256>}, {pipeline_mode = #tpu.pipeline_mode<synchronous>, transform_indices = @transform_7, window_bounds = array<i64: 1, 256>}, {pipeline_mode = #tpu.pipeline_mode<synchronous>, transform_indices = @transform_8, window_bounds = array<i64: 1, 256>}, {pipeline_mode = #tpu.pipeline_mode<synchronous>, transform_indices = @transform_9, window_bounds = array<i64: 1, 256>}, {pipeline_mode = #tpu.pipeline_mode<synchronous>, transform_indices = @transform_10, window_bounds = array<i64: 128, 256>}]} {
    %c0_i32 = arith.constant 0 : i32
    %0 = arith.cmpi eq, %arg0, %c0_i32 : i32
    %1 = arith.extui %0 : i1 to i32
    %c0_i32_0 = arith.constant 0 : i32
    %2 = arith.cmpi ne, %1, %c0_i32_0 : i32
    scf.if %2 {
      %cst_13 = arith.constant 0.000000e+00 : f32
      %15 = vector.broadcast %cst_13 : f32 to vector<128x256xf32>
      %c0_14 = arith.constant 0 : index
      %c0_15 = arith.constant 0 : index
      %16 = vector.load %arg12[%c0_14, %c0_15] : memref<128x256xf32, #tpu.memory_space<vmem>>, vector<128x256xf32>
      tpu.vector_store %arg12[%c0_14, %c0_15], %15 {strides = array<i32>} : memref<128x256xf32, #tpu.memory_space<vmem>>, vector<128x256xf32>,
    } else {
    }
    %c0 = arith.constant 0 : index
    %c0_1 = arith.constant 0 : index
    %3 = vector.load %arg2[%c0, %c0_1] : memref<128x128xbf16, #tpu.memory_space<vmem>>, vector<128x128xbf16>
    %c0_2 = arith.constant 0 : index
    %c0_3 = arith.constant 0 : index
    %4 = vector.load %arg3[%c0_2, %c0_3] : memref<128x256xbf16, #tpu.memory_space<vmem>>, vector<128x256xbf16>
    %cst = arith.constant dense<0.000000e+00> : vector<128x256xf32>
    %5 = tpu.matmul %3, %4, %cst {dimension_numbers = #tpu.dot_dimension_numbers<[1], [0], [0], [1], [0, 0, 1, 1], [], []>} : vector<128x128xbf16>, vector<128x256xbf16>, vector<128x256xf32> -> vector<128x256xf32>
    %c0_4 = arith.constant 0 : index
    %c0_5 = arith.constant 0 : index
    %6 = vector.load %arg12[%c0_4, %c0_5] : memref<128x256xf32, #tpu.memory_space<vmem>>, vector<128x256xf32>
    %c0_6 = arith.constant 0 : index
    %c0_7 = arith.constant 0 : index
    %7 = vector.load %arg1[%c0_6, %c0_7] : memref<128x128xbf16, #tpu.memory_space<vmem>>, vector<128x128xbf16>
    %8 = arith.truncf %5 : vector<128x256xf32> to vector<128x256xbf16>
    %cst_8 = arith.constant dense<0.000000e+00> : vector<128x256xf32>
    %9 = tpu.matmul %7, %8, %cst_8 {dimension_numbers = #tpu.dot_dimension_numbers<[1], [0], [0], [1], [0, 0, 1, 1], [], []>} : vector<128x128xbf16>, vector<128x256xbf16>, vector<128x256xf32> -> vector<128x256xf32>
    %10 = arith.addf %6, %9 : vector<128x256xf32>
    %c0_9 = arith.constant 0 : index
    %c0_10 = arith.constant 0 : index
    %11 = vector.load %arg12[%c0_9, %c0_10] : memref<128x256xf32, #tpu.memory_space<vmem>>, vector<128x256xf32>
    tpu.vector_store %arg12[%c0_9, %c0_10], %10 {strides = array<i32>} : memref<128x256xf32, #tpu.memory_space<vmem>>, vector<128x256xf32>,
    %c0_i32_11 = arith.constant 0 : i32
    %12 = arith.cmpi eq, %arg0, %c0_i32_11 : i32
    %13 = arith.extui %12 : i1 to i32
    %c0_i32_12 = arith.constant 0 : i32
    %14 = arith.cmpi ne, %13, %c0_i32_12 : i32
    scf.if %14 {
      %c0_13 = arith.constant 0 : index
      %c0_14 = arith.constant 0 : index
      %15 = vector.load %arg12[%c0_13, %c0_14] : memref<128x256xf32, #tpu.memory_space<vmem>>, vector<128x256xf32>
      %c0_15 = arith.constant 0 : index
      %c0_16 = arith.constant 0 : index
      %16 = vector.load %arg4[%c0_15, %c0_16] : memref<1x256xf32, #tpu.memory_space<vmem>>, vector<1x256xf32>
      %17 = vector.broadcast %16 : vector<1x256xf32> to vector<128x256xf32>
      %18 = arith.addf %15, %17 : vector<128x256xf32>
      %c0_17 = arith.constant 0 : index
      %c0_18 = arith.constant 0 : index
      %19 = vector.load %arg5[%c0_17, %c0_18] : memref<2x128xf32, #tpu.memory_space<vmem>>, vector<2x128xf32>
      %cst_19 = arith.constant dense<0.000000e+00> : vector<2x256xf32>
      %20 = tpu.matmul %19, %18, %cst_19 {dimension_numbers = #tpu.dot_dimension_numbers<[1], [0], [0], [1], [0, 0, 1, 1], [], []>} : vector<2x128xf32>, vector<128x256xf32>, vector<2x256xf32> -> vector<2x256xf32>
      %c0_20 = arith.constant 0 : index
      %c0_21 = arith.constant 0 : index
      %21 = vector.load %arg6[%c0_20, %c0_21] : memref<128x2xf32, #tpu.memory_space<vmem>>, vector<128x2xf32>
      %cst_22 = arith.constant dense<0.000000e+00> : vector<128x256xf32>
      %22 = tpu.matmul %21, %20, %cst_22 {dimension_numbers = #tpu.dot_dimension_numbers<[1], [0], [0], [1], [0, 0, 1, 1], [], []>} : vector<128x2xf32>, vector<2x256xf32>, vector<128x256xf32> -> vector<128x256xf32>
      %c0_23 = arith.constant 0 : index
      %c0_24 = arith.constant 0 : index
      %23 = vector.load %arg9[%c0_23, %c0_24] : memref<1x256xf32, #tpu.memory_space<vmem>>, vector<1x256xf32>
      %24 = vector.broadcast %23 : vector<1x256xf32> to vector<128x256xf32>
      %25 = arith.mulf %24, %22 : vector<128x256xf32>
      %26 = arith.subf %18, %25 : vector<128x256xf32>
      %c0_25 = arith.constant 0 : index
      %c0_26 = arith.constant 0 : index
      %27 = vector.load %arg5[%c0_25, %c0_26] : memref<2x128xf32, #tpu.memory_space<vmem>>, vector<2x128xf32>
      %28 = arith.mulf %26, %26 : vector<128x256xf32>
      %cst_27 = arith.constant dense<0.000000e+00> : vector<2x256xf32>
      %29 = tpu.matmul %27, %28, %cst_27 {dimension_numbers = #tpu.dot_dimension_numbers<[1], [0], [0], [1], [0, 0, 1, 1], [], []>} : vector<2x128xf32>, vector<128x256xf32>, vector<2x256xf32> -> vector<2x256xf32>
      %c0_28 = arith.constant 0 : index
      %c0_29 = arith.constant 0 : index
      %30 = vector.load %arg6[%c0_28, %c0_29] : memref<128x2xf32, #tpu.memory_space<vmem>>, vector<128x2xf32>
      %cst_30 = arith.constant dense<0.000000e+00> : vector<128x256xf32>
      %31 = tpu.matmul %30, %29, %cst_30 {dimension_numbers = #tpu.dot_dimension_numbers<[1], [0], [0], [1], [0, 0, 1, 1], [], []>} : vector<128x2xf32>, vector<2x256xf32>, vector<128x256xf32> -> vector<128x256xf32>
      %c0_31 = arith.constant 0 : index
      %c0_32 = arith.constant 0 : index
      %32 = vector.load %arg7[%c0_31, %c0_32] : memref<1x256xf32, #tpu.memory_space<vmem>>, vector<1x256xf32>
      %33 = vector.broadcast %32 : vector<1x256xf32> to vector<128x256xf32>
      %34 = arith.mulf %33, %26 : vector<128x256xf32>
      %cst_33 = arith.constant 9.99999974E-6 : f32
      %35 = vector.broadcast %cst_33 : f32 to vector<128x256xf32>
      %36 = arith.addf %31, %35 : vector<128x256xf32>
      %37 = math.rsqrt %36 : vector<128x256xf32>
      %38 = arith.mulf %34, %37 : vector<128x256xf32>
      %c0_34 = arith.constant 0 : index
      %c0_35 = arith.constant 0 : index
      %39 = vector.load %arg8[%c0_34, %c0_35] : memref<1x256xf32, #tpu.memory_space<vmem>>, vector<1x256xf32>
      %40 = vector.broadcast %39 : vector<1x256xf32> to vector<128x256xf32>
      %41 = arith.addf %38, %40 : vector<128x256xf32>
      %cst_36 = arith.constant 0.000000e+00 : f32
      %42 = vector.broadcast %cst_36 : f32 to vector<128x256xf32>
      %43 = arith.cmpf oge, %41, %42 : vector<128x256xf32>
      %c0_37 = arith.constant 0 : index
      %c0_38 = arith.constant 0 : index
      %44 = vector.load %arg10[%c0_37, %c0_38] : memref<1x256xf32, #tpu.memory_space<vmem>>, vector<1x256xf32>
      %45 = vector.broadcast %44 : vector<1x256xf32> to vector<128x256xf32>
      %46 = arith.mulf %45, %41 : vector<128x256xf32>
      %47 = arith.select %43, %41, %46 : vector<128x256xi1>, vector<128x256xf32>
      %48 = arith.truncf %47 : vector<128x256xf32> to vector<128x256xbf16>
      %c0_39 = arith.constant 0 : index
      %c0_40 = arith.constant 0 : index
      %49 = vector.load %arg11[%c0_39, %c0_40] : memref<128x256xbf16, #tpu.memory_space<vmem>>, vector<128x256xbf16>
      tpu.vector_store %arg11[%c0_39, %c0_40], %48 {strides = array<i32>} : memref<128x256xbf16, #tpu.memory_space<vmem>>, vector<128x256xbf16>,
    } else {
    }
    return
  }
  func.func @transform_0(%arg0: i32) -> (i32, i32) {
    %c0_i32 = arith.constant 0 : i32
    %c0_i32_0 = arith.constant 0 : i32
    return %c0_i32, %arg0 : i32, i32
  }
  func.func @transform_1(%arg0: i32) -> (i32, i32) {
    %c0_i32 = arith.constant 0 : i32
    %c0_i32_0 = arith.constant 0 : i32
    return %arg0, %c0_i32 : i32, i32
  }
  func.func @transform_2(%arg0: i32) -> (i32, i32) {
    %c0_i32 = arith.constant 0 : i32
    %c0_i32_0 = arith.constant 0 : i32
    %c0_i32_1 = arith.constant 0 : i32
    return %c0_i32, %c0_i32_0 : i32, i32
  }
  func.func @transform_3(%arg0: i32) -> (i32, i32) {
    %c0_i32 = arith.constant 0 : i32
    %c0_i32_0 = arith.constant 0 : i32
    %c0_i32_1 = arith.constant 0 : i32
    return %c0_i32, %c0_i32_0 : i32, i32
  }
  func.func @transform_4(%arg0: i32) -> (i32, i32) {
    %c0_i32 = arith.constant 0 : i32
    %c0_i32_0 = arith.constant 0 : i32
    %c0_i32_1 = arith.constant 0 : i32
    return %c0_i32, %c0_i32_0 : i32, i32
  }
  func.func @transform_5(%arg0: i32) -> (i32, i32) {
    %c0_i32 = arith.constant 0 : i32
    %c0_i32_0 = arith.constant 0 : i32
    %c0_i32_1 = arith.constant 0 : i32
    return %c0_i32, %c0_i32_0 : i32, i32
  }
  func.func @transform_6(%arg0: i32) -> (i32, i32) {
    %c0_i32 = arith.constant 0 : i32
    %c0_i32_0 = arith.constant 0 : i32
    %c0_i32_1 = arith.constant 0 : i32
    return %c0_i32, %c0_i32_0 : i32, i32
  }
  func.func @transform_7(%arg0: i32) -> (i32, i32) {
    %c0_i32 = arith.constant 0 : i32
    %c0_i32_0 = arith.constant 0 : i32
    %c0_i32_1 = arith.constant 0 : i32
    return %c0_i32, %c0_i32_0 : i32, i32
  }
  func.func @transform_8(%arg0: i32) -> (i32, i32) {
    %c0_i32 = arith.constant 0 : i32
    %c0_i32_0 = arith.constant 0 : i32
    %c0_i32_1 = arith.constant 0 : i32
    return %c0_i32, %c0_i32_0 : i32, i32
  }
  func.func @transform_9(%arg0: i32) -> (i32, i32) {
    %c0_i32 = arith.constant 0 : i32
    %c0_i32_0 = arith.constant 0 : i32
    %c0_i32_1 = arith.constant 0 : i32
    return %c0_i32, %c0_i32_0 : i32, i32
  }
  func.func @transform_10(%arg0: i32) -> (i32, i32) {
    %c0_i32 = arith.constant 0 : i32
    %c0_i32_0 = arith.constant 0 : i32
    %c0_i32_1 = arith.constant 0 : i32
    return %c0_i32, %c0_i32_0 : i32, i32
  }
}

module attributes {stable_mosaic.version = 11 : i64} {
  func.func @pool_head_kernel(%arg0: i32, %arg1: memref<128x128xbf16, #tpu.memory_space<vmem>>, %arg2: memref<2x128xf32, #tpu.memory_space<vmem>>, %arg3: memref<128x2xf32, #tpu.memory_space<vmem>>, %arg4: memref<256x128xf32, #tpu.memory_space<vmem>>, %arg5: memref<1x128xf32, #tpu.memory_space<vmem>>, %arg6: memref<1x128xf32, #tpu.memory_space<vmem>>, %arg7: memref<128x64xf32, #tpu.memory_space<vmem>>, %arg8: memref<1x64xf32, #tpu.memory_space<vmem>>, %arg9: memref<1x64xf32, #tpu.memory_space<vmem>>, %arg10: memref<1x64xf32, #tpu.memory_space<vmem>>, %arg11: memref<1x1xf32, #tpu.memory_space<vmem>>, %arg12: memref<2x128xf32, #tpu.memory_space<vmem>>, %arg13: memref<2x128xf32, #tpu.memory_space<vmem>>, %arg14: memref<2x128xf32, #tpu.memory_space<vmem>>) attributes {dimension_semantics = [#tpu.dimension_semantics<arbitrary>], iteration_bounds = array<i64: 1>, scalar_prefetch = 0 : i64, scratch_operands = 2 : i64, tpu.core_type = #tpu.core_type<tc>, window_params = [{transform_indices = @transform_0, window_bounds = array<i64: 128, 128>}, {transform_indices = @transform_1, window_bounds = array<i64: 2, 128>}, {transform_indices = @transform_2, window_bounds = array<i64: 128, 2>}, {pipeline_mode = #tpu.pipeline_mode<synchronous>, transform_indices = @transform_3, window_bounds = array<i64: 256, 128>}, {pipeline_mode = #tpu.pipeline_mode<synchronous>, transform_indices = @transform_4, window_bounds = array<i64: 1, 128>}, {pipeline_mode = #tpu.pipeline_mode<synchronous>, transform_indices = @transform_5, window_bounds = array<i64: 1, 128>}, {pipeline_mode = #tpu.pipeline_mode<synchronous>, transform_indices = @transform_6, window_bounds = array<i64: 128, 64>}, {pipeline_mode = #tpu.pipeline_mode<synchronous>, transform_indices = @transform_7, window_bounds = array<i64: 1, 64>}, {pipeline_mode = #tpu.pipeline_mode<synchronous>, transform_indices = @transform_8, window_bounds = array<i64: 1, 64>}, {pipeline_mode = #tpu.pipeline_mode<synchronous>, transform_indices = @transform_9, window_bounds = array<i64: 1, 64>}, {pipeline_mode = #tpu.pipeline_mode<synchronous>, transform_indices = @transform_10, window_bounds = array<i64: 1, 1>}, {pipeline_mode = #tpu.pipeline_mode<synchronous>, transform_indices = @transform_11, window_bounds = array<i64: 2, 128>}]} {
    %c0_i32 = arith.constant 0 : i32
    %0 = arith.cmpi eq, %arg0, %c0_i32 : i32
    %1 = arith.extui %0 : i1 to i32
    %c0_i32_0 = arith.constant 0 : i32
    %2 = arith.cmpi ne, %1, %c0_i32_0 : i32
    scf.if %2 {
      %cst_23 = arith.constant 0.000000e+00 : f32
      %35 = vector.broadcast %cst_23 : f32 to vector<2x128xf32>
      %c0_24 = arith.constant 0 : index
      %c0_25 = arith.constant 0 : index
      %36 = vector.load %arg13[%c0_24, %c0_25] : memref<2x128xf32, #tpu.memory_space<vmem>>, vector<2x128xf32>
      tpu.vector_store %arg13[%c0_24, %c0_25], %35 {strides = array<i32>} : memref<2x128xf32, #tpu.memory_space<vmem>>, vector<2x128xf32>,
      %cst_26 = arith.constant -3.40282347E+38 : f32
      %37 = vector.broadcast %cst_26 : f32 to vector<2x128xf32>
      %c0_27 = arith.constant 0 : index
      %c0_28 = arith.constant 0 : index
      %38 = vector.load %arg14[%c0_27, %c0_28] : memref<2x128xf32, #tpu.memory_space<vmem>>, vector<2x128xf32>
      tpu.vector_store %arg14[%c0_27, %c0_28], %37 {strides = array<i32>} : memref<2x128xf32, #tpu.memory_space<vmem>>, vector<2x128xf32>,
    } else {
    }
    %c0 = arith.constant 0 : index
    %c0_1 = arith.constant 0 : index
    %3 = vector.load %arg1[%c0, %c0_1] : memref<128x128xbf16, #tpu.memory_space<vmem>>, vector<128x128xbf16>
    %4 = arith.extf %3 : vector<128x128xbf16> to vector<128x128xf32>
    %c0_2 = arith.constant 0 : index
    %c0_3 = arith.constant 0 : index
    %5 = vector.load %arg13[%c0_2, %c0_3] : memref<2x128xf32, #tpu.memory_space<vmem>>, vector<2x128xf32>
    %c0_4 = arith.constant 0 : index
    %c0_5 = arith.constant 0 : index
    %6 = vector.load %arg2[%c0_4, %c0_5] : memref<2x128xf32, #tpu.memory_space<vmem>>, vector<2x128xf32>
    %cst = arith.constant dense<0.000000e+00> : vector<2x128xf32>
    %7 = tpu.matmul %6, %4, %cst {dimension_numbers = #tpu.dot_dimension_numbers<[1], [0], [0], [1], [0, 0, 1, 1], [], []>} : vector<2x128xf32>, vector<128x128xf32>, vector<2x128xf32> -> vector<2x128xf32>
    %8 = arith.addf %5, %7 : vector<2x128xf32>
    %c0_6 = arith.constant 0 : index
    %c0_7 = arith.constant 0 : index
    %9 = vector.load %arg13[%c0_6, %c0_7] : memref<2x128xf32, #tpu.memory_space<vmem>>, vector<2x128xf32>
    tpu.vector_store %arg13[%c0_6, %c0_7], %8 {strides = array<i32>} : memref<2x128xf32, #tpu.memory_space<vmem>>, vector<2x128xf32>,
    %c0_8 = arith.constant 0 : index
    %c0_9 = arith.constant 0 : index
    %10 = vector.load %arg3[%c0_8, %c0_9] : memref<128x2xf32, #tpu.memory_space<vmem>>, vector<128x1xf32>
    %cst_10 = arith.constant 5.000000e-01 : f32
    %11 = vector.broadcast %cst_10 : f32 to vector<128x1xf32>
    %12 = arith.cmpf ogt, %10, %11 : vector<128x1xf32>
    %cst_11 = arith.constant -3.40282347E+38 : f32
    %13 = vector.shape_cast %12 : vector<128x1xi1> to vector<128x1xi1>
    %14 = vector.broadcast %13 : vector<128x1xi1> to vector<128x128xi1>
    %15 = vector.broadcast %cst_11 : f32 to vector<128x128xf32>
    %16 = arith.select %14, %4, %15 : vector<128x128xi1>, vector<128x128xf32>
    %cst_12 = arith.constant dense<0xFF800000> : vector<128xf32>
    %17 = vector.multi_reduction <maximumf>, %16, %cst_12 [0] : vector<128x128xf32> to vector<128xf32>
    %18 = vector.shape_cast %17 : vector<128xf32> to vector<1x128xf32>
    %c0_13 = arith.constant 0 : index
    %c1 = arith.constant 1 : index
    %19 = vector.load %arg3[%c0_13, %c1] : memref<128x2xf32, #tpu.memory_space<vmem>>, vector<128x1xf32>
    %cst_14 = arith.constant 5.000000e-01 : f32
    %20 = vector.broadcast %cst_14 : f32 to vector<128x1xf32>
    %21 = arith.cmpf ogt, %19, %20 : vector<128x1xf32>
    %cst_15 = arith.constant -3.40282347E+38 : f32
    %22 = vector.shape_cast %21 : vector<128x1xi1> to vector<128x1xi1>
    %23 = vector.broadcast %22 : vector<128x1xi1> to vector<128x128xi1>
    %24 = vector.broadcast %cst_15 : f32 to vector<128x128xf32>
    %25 = arith.select %23, %4, %24 : vector<128x128xi1>, vector<128x128xf32>
    %cst_16 = arith.constant dense<0xFF800000> : vector<128xf32>
    %26 = vector.multi_reduction <maximumf>, %25, %cst_16 [0] : vector<128x128xf32> to vector<128xf32>
    %27 = vector.shape_cast %26 : vector<128xf32> to vector<1x128xf32>
    %c0_17 = arith.constant 0 : index
    %c0_18 = arith.constant 0 : index
    %28 = vector.load %arg14[%c0_17, %c0_18] : memref<2x128xf32, #tpu.memory_space<vmem>>, vector<2x128xf32>
    %29 = tpu.concatenate %18, %27 in 0 : vector<1x128xf32>, vector<1x128xf32> -> vector<2x128xf32>
    %30 = arith.maximumf %28, %29 : vector<2x128xf32>
    %c0_19 = arith.constant 0 : index
    %c0_20 = arith.constant 0 : index
    %31 = vector.load %arg14[%c0_19, %c0_20] : memref<2x128xf32, #tpu.memory_space<vmem>>, vector<2x128xf32>
    tpu.vector_store %arg14[%c0_19, %c0_20], %30 {strides = array<i32>} : memref<2x128xf32, #tpu.memory_space<vmem>>, vector<2x128xf32>,
    %c0_i32_21 = arith.constant 0 : i32
    %32 = arith.cmpi eq, %arg0, %c0_i32_21 : i32
    %33 = arith.extui %32 : i1 to i32
    %c0_i32_22 = arith.constant 0 : i32
    %34 = arith.cmpi ne, %33, %c0_i32_22 : i32
    scf.if %34 {
      %c0_23 = arith.constant 0 : index
      %c0_24 = arith.constant 0 : index
      %35 = vector.load %arg13[%c0_23, %c0_24] : memref<2x128xf32, #tpu.memory_space<vmem>>, vector<2x128xf32>
      %c0_25 = arith.constant 0 : index
      %c0_26 = arith.constant 0 : index
      %36 = vector.load %arg4[%c0_25, %c0_26] : memref<256x128xf32, #tpu.memory_space<vmem>>, vector<128x128xf32>
      %cst_27 = arith.constant dense<0.000000e+00> : vector<2x128xf32>
      %37 = tpu.matmul %35, %36, %cst_27 {dimension_numbers = #tpu.dot_dimension_numbers<[1], [0], [0], [1], [0, 0, 1, 1], [], []>} : vector<2x128xf32>, vector<128x128xf32>, vector<2x128xf32> -> vector<2x128xf32>
      %c0_28 = arith.constant 0 : index
      %c0_29 = arith.constant 0 : index
      %38 = vector.load %arg14[%c0_28, %c0_29] : memref<2x128xf32, #tpu.memory_space<vmem>>, vector<2x128xf32>
      %c128 = arith.constant 128 : index
      %c0_30 = arith.constant 0 : index
      %39 = vector.load %arg4[%c128, %c0_30] : memref<256x128xf32, #tpu.memory_space<vmem>>, vector<128x128xf32>
      %cst_31 = arith.constant dense<0.000000e+00> : vector<2x128xf32>
      %40 = tpu.matmul %38, %39, %cst_31 {dimension_numbers = #tpu.dot_dimension_numbers<[1], [0], [0], [1], [0, 0, 1, 1], [], []>} : vector<2x128xf32>, vector<128x128xf32>, vector<2x128xf32> -> vector<2x128xf32>
      %41 = arith.addf %37, %40 : vector<2x128xf32>
      %c0_32 = arith.constant 0 : index
      %c0_33 = arith.constant 0 : index
      %42 = vector.load %arg5[%c0_32, %c0_33] : memref<1x128xf32, #tpu.memory_space<vmem>>, vector<1x128xf32>
      %43 = vector.broadcast %42 : vector<1x128xf32> to vector<2x128xf32>
      %44 = arith.addf %41, %43 : vector<2x128xf32>
      %cst_34 = arith.constant 0.000000e+00 : f32
      %45 = vector.broadcast %cst_34 : f32 to vector<2x128xf32>
      %46 = arith.cmpf oge, %44, %45 : vector<2x128xf32>
      %c0_35 = arith.constant 0 : index
      %c0_36 = arith.constant 0 : index
      %47 = vector.load %arg6[%c0_35, %c0_36] : memref<1x128xf32, #tpu.memory_space<vmem>>, vector<1x128xf32>
      %48 = vector.broadcast %47 : vector<1x128xf32> to vector<2x128xf32>
      %49 = arith.mulf %48, %44 : vector<2x128xf32>
      %50 = arith.select %46, %44, %49 : vector<2x128xi1>, vector<2x128xf32>
      %c0_37 = arith.constant 0 : index
      %c0_38 = arith.constant 0 : index
      %51 = vector.load %arg7[%c0_37, %c0_38] : memref<128x64xf32, #tpu.memory_space<vmem>>, vector<128x64xf32>
      %cst_39 = arith.constant dense<0.000000e+00> : vector<2x64xf32>
      %52 = tpu.matmul %50, %51, %cst_39 {dimension_numbers = #tpu.dot_dimension_numbers<[1], [0], [0], [1], [0, 0, 1, 1], [], []>} : vector<2x128xf32>, vector<128x64xf32>, vector<2x64xf32> -> vector<2x64xf32>
      %c0_40 = arith.constant 0 : index
      %c0_41 = arith.constant 0 : index
      %53 = vector.load %arg8[%c0_40, %c0_41] : memref<1x64xf32, #tpu.memory_space<vmem>>, vector<1x64xf32>
      %54 = vector.broadcast %53 : vector<1x64xf32> to vector<2x64xf32>
      %55 = arith.addf %52, %54 : vector<2x64xf32>
      %cst_42 = arith.constant 0.000000e+00 : f32
      %56 = vector.broadcast %cst_42 : f32 to vector<2x64xf32>
      %57 = arith.cmpf oge, %55, %56 : vector<2x64xf32>
      %c0_43 = arith.constant 0 : index
      %c0_44 = arith.constant 0 : index
      %58 = vector.load %arg9[%c0_43, %c0_44] : memref<1x64xf32, #tpu.memory_space<vmem>>, vector<1x64xf32>
      %59 = vector.broadcast %58 : vector<1x64xf32> to vector<2x64xf32>
      %60 = arith.mulf %59, %55 : vector<2x64xf32>
      %61 = arith.select %57, %55, %60 : vector<2x64xi1>, vector<2x64xf32>
      %c0_45 = arith.constant 0 : index
      %c0_46 = arith.constant 0 : index
      %62 = vector.load %arg10[%c0_45, %c0_46] : memref<1x64xf32, #tpu.memory_space<vmem>>, vector<1x64xf32>
      %63 = vector.broadcast %62 : vector<1x64xf32> to vector<2x64xf32>
      %64 = arith.mulf %61, %63 : vector<2x64xf32>
      %cst_47 = arith.constant dense<0.000000e+00> : vector<2xf32>
      %65 = vector.multi_reduction <add>, %64, %cst_47 [1] : vector<2x64xf32> to vector<2xf32>
      %66 = vector.shape_cast %65 : vector<2xf32> to vector<2x1xf32>
      %c0_48 = arith.constant 0 : index
      %c0_49 = arith.constant 0 : index
      %67 = vector.load %arg11[%c0_48, %c0_49] : memref<1x1xf32, #tpu.memory_space<vmem>>, vector<1x1xf32>
      %68 = vector.broadcast %67 : vector<1x1xf32> to vector<2x1xf32>
      %69 = arith.addf %66, %68 : vector<2x1xf32>
      %70 = vector.shape_cast %69 : vector<2x1xf32> to vector<2x1xf32>
      %71 = vector.broadcast %70 : vector<2x1xf32> to vector<2x128xf32>
      %c0_50 = arith.constant 0 : index
      %c0_51 = arith.constant 0 : index
      %72 = vector.load %arg12[%c0_50, %c0_51] : memref<2x128xf32, #tpu.memory_space<vmem>>, vector<2x128xf32>
      tpu.vector_store %arg12[%c0_50, %c0_51], %71 {strides = array<i32>} : memref<2x128xf32, #tpu.memory_space<vmem>>, vector<2x128xf32>,
    } else {
    }
    return
  }
  func.func @transform_0(%arg0: i32) -> (i32, i32) {
    %c0_i32 = arith.constant 0 : i32
    %c0_i32_0 = arith.constant 0 : i32
    return %arg0, %c0_i32 : i32, i32
  }
  func.func @transform_1(%arg0: i32) -> (i32, i32) {
    %c0_i32 = arith.constant 0 : i32
    %c0_i32_0 = arith.constant 0 : i32
    return %c0_i32, %arg0 : i32, i32
  }
  func.func @transform_2(%arg0: i32) -> (i32, i32) {
    %c0_i32 = arith.constant 0 : i32
    %c0_i32_0 = arith.constant 0 : i32
    return %arg0, %c0_i32 : i32, i32
  }
  func.func @transform_3(%arg0: i32) -> (i32, i32) {
    %c0_i32 = arith.constant 0 : i32
    %c0_i32_0 = arith.constant 0 : i32
    %c0_i32_1 = arith.constant 0 : i32
    return %c0_i32, %c0_i32_0 : i32, i32
  }
  func.func @transform_4(%arg0: i32) -> (i32, i32) {
    %c0_i32 = arith.constant 0 : i32
    %c0_i32_0 = arith.constant 0 : i32
    %c0_i32_1 = arith.constant 0 : i32
    return %c0_i32, %c0_i32_0 : i32, i32
  }
  func.func @transform_5(%arg0: i32) -> (i32, i32) {
    %c0_i32 = arith.constant 0 : i32
    %c0_i32_0 = arith.constant 0 : i32
    %c0_i32_1 = arith.constant 0 : i32
    return %c0_i32, %c0_i32_0 : i32, i32
  }
  func.func @transform_6(%arg0: i32) -> (i32, i32) {
    %c0_i32 = arith.constant 0 : i32
    %c0_i32_0 = arith.constant 0 : i32
    %c0_i32_1 = arith.constant 0 : i32
    return %c0_i32, %c0_i32_0 : i32, i32
  }
  func.func @transform_7(%arg0: i32) -> (i32, i32) {
    %c0_i32 = arith.constant 0 : i32
    %c0_i32_0 = arith.constant 0 : i32
    %c0_i32_1 = arith.constant 0 : i32
    return %c0_i32, %c0_i32_0 : i32, i32
  }
  func.func @transform_8(%arg0: i32) -> (i32, i32) {
    %c0_i32 = arith.constant 0 : i32
    %c0_i32_0 = arith.constant 0 : i32
    %c0_i32_1 = arith.constant 0 : i32
    return %c0_i32, %c0_i32_0 : i32, i32
  }
  func.func @transform_9(%arg0: i32) -> (i32, i32) {
    %c0_i32 = arith.constant 0 : i32
    %c0_i32_0 = arith.constant 0 : i32
    %c0_i32_1 = arith.constant 0 : i32
    return %c0_i32, %c0_i32_0 : i32, i32
  }
  func.func @transform_10(%arg0: i32) -> (i32, i32) {
    %c0_i32 = arith.constant 0 : i32
    %c0_i32_0 = arith.constant 0 : i32
    %c0_i32_1 = arith.constant 0 : i32
    return %c0_i32, %c0_i32_0 : i32, i32
  }
  func.func @transform_11(%arg0: i32) -> (i32, i32) {
    %c0_i32 = arith.constant 0 : i32
    %c0_i32_0 = arith.constant 0 : i32
    %c0_i32_1 = arith.constant 0 : i32
    return %c0_i32, %c0_i32_0 : i32, i32
  }
}

</mosaic_0001>

<llo_original>
// kernel: net10_forward.4
$region0: #{net10_forward.4}
  #allocation0 [shape = 'u32[]', space=smem, size = 0x4, offset = 0x4, fixed_abs, tag = 'smem constant byte address 0x4 - core index']
  #allocation1 [shape = 'u32[144,128]{1,0:T(1,128)}', space=vmem, size = 0x12000, scoped, tag = 'internal scratch']
  #allocation2 [shape = 'f32[128,128]{1,0:T(8,128)}', space=vmem, size = 0x10000, scoped, tag = 'scratch operand']
  %s0 = inlined_call_operand.vmem [shape: bf16[128,128], index: 0, kind: input, shape index: {}]
  %s1 = inlined_call_operand.vmem [shape: bf16[128,256], index: 1, kind: input, shape index: {}]
  %s2 = inlined_call_operand.vmem [shape: bf16[256,128], index: 2, kind: input, shape index: {}]
  %s3 = inlined_call_operand.vmem [shape: f32[1,128], index: 3, kind: input, shape index: {}]
  %s4 = inlined_call_operand.vmem [shape: f32[2,128], index: 4, kind: input, shape index: {}]
  %s5 = inlined_call_operand.vmem [shape: f32[128,2], index: 5, kind: input, shape index: {}]
  %s6 = inlined_call_operand.vmem [shape: f32[1,128], index: 6, kind: input, shape index: {}]
  %s7 = inlined_call_operand.vmem [shape: f32[1,128], index: 7, kind: input, shape index: {}]
  %s8 = inlined_call_operand.vmem [shape: f32[1,128], index: 8, kind: input, shape index: {}]
  %s9 = inlined_call_operand.vmem [shape: f32[1,128], index: 9, kind: input, shape index: {}]
  %s10 = inlined_call_operand.vmem [shape: bf16[128,128], index: 10, kind: output, shape index: {}]
  %s11 = sld [smem:[#allocation0]]
  $region58: #{net10_forward.4} parent=0
    _
  %s13 = ssub.s32 1, %s11
  %s14 = scalar_select 0, %s13, %s11
  // Predicated region
  $region2: #{net10_forward.4} parent=0 // pred_check
    _
  $region3: #{net10_forward.4} parent=0 // pred_check_branch
    %16 = sbr.rel (0) target = $region5
  $region4: #{net10_forward.4} parent=0 // pred_region
    _
  $region5: #{net10_forward.4} parent=0 // pred_fallthru
    _
  // Predicated region
  $region6: #{net10_forward.4} parent=0 // pred_check
    _
  $region7: #{net10_forward.4} parent=0 // pred_check_branch
    %18 = sbr.rel (0) target = $region9
  $region8: #{net10_forward.4} parent=0 // pred_region
    _
  $region9: #{net10_forward.4} parent=0 // pred_fallthru
    _
  // Predicated region
  $region10: #{net10_forward.4} parent=0 // pred_check
    _
  $region11: #{net10_forward.4} parent=0 // pred_check_branch
    %20 = sbr.rel (0) target = $region13
  $region12: #{net10_forward.4} parent=0 // pred_region
    _
  $region13: #{net10_forward.4} parent=0 // pred_fallthru
    _
  // Predicated region
  $region14: #{net10_forward.4} parent=0 // pred_check
    _
  $region15: #{net10_forward.4} parent=0 // pred_check_branch
    %22 = sbr.rel (0) target = $region17
  $region16: #{net10_forward.4} parent=0 // pred_region
    _
  $region17: #{net10_forward.4} parent=0 // pred_fallthru
    _
  // Predicated region
  $region18: #{net10_forward.4} parent=0 // pred_check
    _
  $region19: #{net10_forward.4} parent=0 // pred_check_branch
    %24 = sbr.rel (0) target = $region21
  $region20: #{net10_forward.4} parent=0 // pred_region
    _
  $region21: #{net10_forward.4} parent=0 // pred_fallthru
    _
  // Predicated region
  $region22: #{net10_forward.4} parent=0 // pred_check
    _
  $region23: #{net10_forward.4} parent=0 // pred_check_branch
    %26 = sbr.rel (0) target = $region25
  $region24: #{net10_forward.4} parent=0 // pred_region
    _
  $region25: #{net10_forward.4} parent=0 // pred_fallthru
    _
  // Predicated region
  $region26: #{net10_forward.4} parent=0 // pred_check
    _
  $region27: #{net10_forward.4} parent=0 // pred_check_branch
    %28 = sbr.rel (0) target = $region29
  $region28: #{net10_forward.4} parent=0 // pred_region
    _
  $region29: #{net10_forward.4} parent=0 // pred_fallthru
    _
  // Predicated region
  $region30: #{net10_forward.4} parent=0 // pred_check
    _
  $region31: #{net10_forward.4} parent=0 // pred_check_branch
    %30 = sbr.rel (0) target = $region33
  $region32: #{net10_forward.4} parent=0 // pred_region
    _
  $region33: #{net10_forward.4} parent=0 // pred_fallthru
    _
  // Predicated region
  $region34: #{net10_forward.4} parent=0 // pred_check
    _
  $region35: #{net10_forward.4} parent=0 // pred_check_branch
    %32 = sbr.rel (0) target = $region37
  $region36: #{net10_forward.4} parent=0 // pred_region
    _
  $region37: #{net10_forward.4} parent=0 // pred_fallthru
    _
  // Predicated region
  $region38: #{net10_forward.4} parent=0 // pred_check
    _
  $region39: #{net10_forward.4} parent=0 // pred_check_branch
    %34 = sbr.rel (0) target = $region41
  $region40: #{net10_forward.4} parent=0 // pred_region
    _
  $region41: #{net10_forward.4} parent=0 // pred_fallthru
    _
  %p36 = scmp.eq.s32.totalorder 0, 0
  // Predicated region
  $region42: #{net10_forward.4} parent=0 // pred_check
    %p37 = pneg %p36
  $region43: #{net10_forward.4} parent=0 // pred_check_branch
    %39 = sbr.rel (%p37) target = $region45
  $region44: #{net10_forward.4} parent=0 // pred_region
    %40 = vst [vmem:[#allocation2] sm:$0xff] 0.0
    %41 = vst [vmem:[#allocation2 + $0x8] sm:$0xff] 0.0
    %42 = vst [vmem:[#allocation2 + $0x10] sm:$0xff] 0.0
    %43 = vst [vmem:[#allocation2 + $0x18] sm:$0xff] 0.0
    %44 = vst [vmem:[#allocation2 + $0x20] sm:$0xff] 0.0
    %45 = vst [vmem:[#allocation2 + $0x28] sm:$0xff] 0.0
    %46 = vst [vmem:[#allocation2 + $0x30] sm:$0xff] 0.0
    %47 = vst [vmem:[#allocation2 + $0x38] sm:$0xff] 0.0
    %48 = vst [vmem:[#allocation2 + $0x40] sm:$0xff] 0.0
    %49 = vst [vmem:[#allocation2 + $0x48] sm:$0xff] 0.0
    %50 = vst [vmem:[#allocation2 + $0x50] sm:$0xff] 0.0
    %51 = vst [vmem:[#allocation2 + $0x58] sm:$0xff] 0.0
    %52 = vst [vmem:[#allocation2 + $0x60] sm:$0xff] 0.0
    %53 = vst [vmem:[#allocation2 + $0x68] sm:$0xff] 0.0
    %54 = vst [vmem:[#allocation2 + $0x70] sm:$0xff] 0.0
    %55 = vst [vmem:[#allocation2 + $0x78] sm:$0xff] 0.0
  $region45: #{net10_forward.4} parent=0 // pred_fallthru
    _
  %v56 = vld [vmem:[%s1] sm:$0xff]
  %v57 = vld [vmem:[%s1 + $0x8] sm:$0xff]
  %v58 = vld [vmem:[%s1 + $0x10] sm:$0xff]
  %v59 = vld [vmem:[%s1 + $0x18] sm:$0xff]
  %v60 = vld [vmem:[%s1 + $0x20] sm:$0xff]
  %v61 = vld [vmem:[%s1 + $0x28] sm:$0xff]
  %v62 = vld [vmem:[%s1 + $0x30] sm:$0xff]
  %v63 = vld [vmem:[%s1 + $0x38] sm:$0xff]
  %v64 = vld [vmem:[%s1 + $0x40] sm:$0xff]
  %v65 = vld [vmem:[%s1 + $0x48] sm:$0xff]
  %v66 = vld [vmem:[%s1 + $0x50] sm:$0xff]
  %v67 = vld [vmem:[%s1 + $0x58] sm:$0xff]
  %v68 = vld [vmem:[%s1 + $0x60] sm:$0xff]
  %v69 = vld [vmem:[%s1 + $0x68] sm:$0xff]
  %v70 = vld [vmem:[%s1 + $0x70] sm:$0xff]
  %v71 = vld [vmem:[%s1 + $0x78] sm:$0xff]
  %v72 = vld [vmem:[%s2] sm:$0xf]
  %v73 = vld [vmem:[%s2 + $0x4] sm:$0xf]
  %v74 = vld [vmem:[%s2 + $0x8] sm:$0xf]
  %v75 = vld [vmem:[%s2 + $0xc] sm:$0xf]
  %v76 = vld [vmem:[%s2 + $0x10] sm:$0xf]
  %v77 = vld [vmem:[%s2 + $0x14] sm:$0xf]
  %v78 = vld [vmem:[%s2 + $0x18] sm:$0xf]
  %v79 = vld [vmem:[%s2 + $0x1c] sm:$0xf]
  %v80 = vld [vmem:[%s2 + $0x20] sm:$0xf]
  %v81 = vld [vmem:[%s2 + $0x24] sm:$0xf]
  %v82 = vld [vmem:[%s2 + $0x28] sm:$0xf]
  %v83 = vld [vmem:[%s2 + $0x2c] sm:$0xf]
  %v84 = vld [vmem:[%s2 + $0x30] sm:$0xf]
  %v85 = vld [vmem:[%s2 + $0x34] sm:$0xf]
  %v86 = vld [vmem:[%s2 + $0x38] sm:$0xf]
  %v87 = vld [vmem:[%s2 + $0x3c] sm:$0xf]
  %v88 = vld [vmem:[%s2 + $0x40] sm:$0xf]
  %v89 = vld [vmem:[%s2 + $0x44] sm:$0xf]
  %v90 = vld [vmem:[%s2 + $0x48] sm:$0xf]
  %v91 = vld [vmem:[%s2 + $0x4c] sm:$0xf]
  %v92 = vld [vmem:[%s2 + $0x50] sm:$0xf]
  %v93 = vld [vmem:[%s2 + $0x54] sm:$0xf]
  %v94 = vld [vmem:[%s2 + $0x58] sm:$0xf]
  %v95 = vld [vmem:[%s2 + $0x5c] sm:$0xf]
  %v96 = vld [vmem:[%s2 + $0x60] sm:$0xf]
  %v97 = vld [vmem:[%s2 + $0x64] sm:$0xf]
  %v98 = vld [vmem:[%s2 + $0x68] sm:$0xf]
  %v99 = vld [vmem:[%s2 + $0x6c] sm:$0xf]
  %v100 = vld [vmem:[%s2 + $0x70] sm:$0xf]
  %v101 = vld [vmem:[%s2 + $0x74] sm:$0xf]
  %v102 = vld [vmem:[%s2 + $0x78] sm:$0xf]
  %v103 = vld [vmem:[%s2 + $0x7c] sm:$0xf]
  %v120 = vunpack.c.l.b16 %v56
  %v121 = vunpack.c.h.b16 %v56
  %v122 = vunpack.c.l.b16 %v57
  %v123 = vunpack.c.h.b16 %v57
  %v124 = vunpack.c.l.b16 %v58
  %v125 = vunpack.c.h.b16 %v58
  %v126 = vunpack.c.l.b16 %v59
  %v127 = vunpack.c.h.b16 %v59
  %v128 = vunpack.c.l.b16 %v60
  %v129 = vunpack.c.h.b16 %v60
  %v130 = vunpack.c.l.b16 %v61
  %v131 = vunpack.c.h.b16 %v61
  %v132 = vunpack.c.l.b16 %v62
  %v133 = vunpack.c.h.b16 %v62
  %v134 = vunpack.c.l.b16 %v63
  %v135 = vunpack.c.h.b16 %v63
  %v136 = vunpack.c.l.b16 %v64
  %v137 = vunpack.c.h.b16 %v64
  %v138 = vunpack.c.l.b16 %v65
  %v139 = vunpack.c.h.b16 %v65
  %v140 = vunpack.c.l.b16 %v66
  %v141 = vunpack.c.h.b16 %v66
  %v142 = vunpack.c.l.b16 %v67
  %v143 = vunpack.c.h.b16 %v67
  %v144 = vunpack.c.l.b16 %v68
  %v145 = vunpack.c.h.b16 %v68
  %v146 = vunpack.c.l.b16 %v69
  %v147 = vunpack.c.h.b16 %v69
  %v148 = vunpack.c.l.b16 %v70
  %v149 = vunpack.c.h.b16 %v70
  %v150 = vunpack.c.l.b16 %v71
  %v151 = vunpack.c.h.b16 %v71
  %v152 = vpack.c.b16 %v122, %v120
  %v153 = vpack.c.b16 %v123, %v121
  %v154 = vpack.c.b16 %v126, %v124
  %v155 = vpack.c.b16 %v127, %v125
  %v156 = vpack.c.b16 %v130, %v128
  %v157 = vpack.c.b16 %v131, %v129
  %v158 = vpack.c.b16 %v134, %v132
  %v159 = vpack.c.b16 %v135, %v133
  %v160 = vpack.c.b16 %v138, %v136
  %v161 = vpack.c.b16 %v139, %v137
  %v162 = vpack.c.b16 %v142, %v140
  %v163 = vpack.c.b16 %v143, %v141
  %v164 = vpack.c.b16 %v146, %v144
  %v165 = vpack.c.b16 %v147, %v145
  %v166 = vpack.c.b16 %v150, %v148
  %v167 = vpack.c.b16 %v151, %v149
  %v216 = vunpack.c.l.b16 %v72
  %v217 = vunpack.c.l.b16 %v73
  %v218 = vunpack.c.l.b16 %v74
  %v219 = vunpack.c.l.b16 %v75
  %v220 = vunpack.c.l.b16 %v76
  %v221 = vunpack.c.l.b16 %v77
  %v222 = vunpack.c.l.b16 %v78
  %v223 = vunpack.c.l.b16 %v79
  %v224 = vunpack.c.l.b16 %v80
  %v225 = vunpack.c.l.b16 %v81
  %v226 = vunpack.c.l.b16 %v82
  %v227 = vunpack.c.l.b16 %v83
  %v228 = vunpack.c.l.b16 %v84
  %v229 = vunpack.c.l.b16 %v85
  %v230 = vunpack.c.l.b16 %v86
  %v231 = vunpack.c.l.b16 %v87
  %v232 = vunpack.c.l.b16 %v88
  %v233 = vunpack.c.l.b16 %v89
  %v234 = vunpack.c.l.b16 %v90
  %v235 = vunpack.c.l.b16 %v91
  %v236 = vunpack.c.l.b16 %v92
  %v237 = vunpack.c.l.b16 %v93
  %v238 = vunpack.c.l.b16 %v94
  %v239 = vunpack.c.l.b16 %v95
  %v240 = vunpack.c.l.b16 %v96
  %v241 = vunpack.c.l.b16 %v97
  %v242 = vunpack.c.l.b16 %v98
  %v243 = vunpack.c.l.b16 %v99
  %v244 = vunpack.c.l.b16 %v100
  %v245 = vunpack.c.l.b16 %v101
  %v246 = vunpack.c.l.b16 %v102
  %v247 = vunpack.c.l.b16 %v103
  %v248 = vpack.c.b16 %v217, %v216
  %v249 = vpack.c.b16 %v219, %v218
  %v250 = vpack.c.b16 %v221, %v220
  %v251 = vpack.c.b16 %v223, %v222
  %v252 = vpack.c.b16 %v225, %v224
  %v253 = vpack.c.b16 %v227, %v226
  %v254 = vpack.c.b16 %v229, %v228
  %v255 = vpack.c.b16 %v231, %v230
  %v256 = vpack.c.b16 %v233, %v232
  %v257 = vpack.c.b16 %v235, %v234
  %v258 = vpack.c.b16 %v237, %v236
  %v259 = vpack.c.b16 %v239, %v238
  %v260 = vpack.c.b16 %v241, %v240
  %v261 = vpack.c.b16 %v243, %v242
  %v262 = vpack.c.b16 %v245, %v244
  %v263 = vpack.c.b16 %v247, %v246
  %280 = vmatprep.subr.bf16.mxu0 0
  %281 = vmatpush1.bf16.msra.mxu0 %v248
  %282 = vmatprep.subr.bf16.mxu0 0
  %283 = vmatpush1.bf16.msra.mxu0 %v249
  %284 = vmatprep.subr.bf16.mxu0 0
  %285 = vmatpush1.bf16.msra.mxu0 %v250
  %286 = vmatprep.subr.bf16.mxu0 0
  %287 = vmatpush1.bf16.msra.mxu0 %v251
  %288 = vmatprep.subr.bf16.mxu0 0
  %289 = vmatpush1.bf16.msra.mxu0 %v252
  %290 = vmatprep.subr.bf16.mxu0 0
  %291 = vmatpush1.bf16.msra.mxu0 %v253
  %292 = vmatprep.subr.bf16.mxu0 0
  %293 = vmatpush1.bf16.msra.mxu0 %v254
  %294 = vmatprep.subr.bf16.mxu0 0
  %295 = vmatpush1.bf16.msra.mxu0 %v255
  %296 = vmatprep.subr.bf16.mxu0 0
  %297 = vmatpush1.bf16.msra.mxu0 %v256
  %298 = vmatprep.subr.bf16.mxu0 0
  %299 = vmatpush1.bf16.msra.mxu0 %v257
  %300 = vmatprep.subr.bf16.mxu0 0
  %301 = vmatpush1.bf16.msra.mxu0 %v258
  %302 = vmatprep.subr.bf16.mxu0 0
  %303 = vmatpush1.bf16.msra.mxu0 %v259
  %304 = vmatprep.subr.bf16.mxu0 0
  %305 = vmatpush1.bf16.msra.mxu0 %v260
  %306 = vmatprep.subr.bf16.mxu0 0
  %307 = vmatpush1.bf16.msra.mxu0 %v261
  %308 = vmatprep.subr.bf16.mxu0 0
  %309 = vmatpush1.bf16.msra.mxu0 %v262
  %310 = vmatprep.subr.bf16.mxu0 0
  %311 = vmatpush1.bf16.msra.mxu0 %v263
  %312 = vmatprep.mubr.bf16.mxu0 %v153
  %313 = vmatmul.mubr.bf16.gmra.mrb[0].mxu0 %v152
  %v314 = vpop.f32.mrb[0].mxu0
  %v315 = vadd.f32 0.0, %v314
  %v316 = vpop.f32.mrb[0].mxu0
  %v317 = vpop.f32.mrb[0].mxu0
  %v318 = vadd.f32 0.0, %v317
  %v319 = vpop.f32.mrb[0].mxu0
  %320 = vmatprep.mubr.bf16.mxu0 %v155
  %321 = vmatmul.mubr.bf16.gmra.mrb[0].mxu0 %v154
  %v322 = vpop.f32.mrb[0].mxu0
  %v323 = vadd.f32 0.0, %v322
  %v324 = vpop.f32.mrb[0].mxu0
  %v325 = vpop.f32.mrb[0].mxu0
  %v326 = vadd.f32 0.0, %v325
  %v327 = vpop.f32.mrb[0].mxu0
  %328 = vmatprep.mubr.bf16.mxu0 %v157
  %329 = vmatmul.mubr.bf16.gmra.mrb[0].mxu0 %v156
  %v330 = vpop.f32.mrb[0].mxu0
  %v331 = vadd.f32 0.0, %v330
  %v332 = vpop.f32.mrb[0].mxu0
  %v333 = vpop.f32.mrb[0].mxu0
  %v334 = vadd.f32 0.0, %v333
  %v335 = vpop.f32.mrb[0].mxu0
  %336 = vmatprep.mubr.bf16.mxu0 %v159
  %337 = vmatmul.mubr.bf16.gmra.mrb[0].mxu0 %v158
  %v338 = vpop.f32.mrb[0].mxu0
  %v339 = vadd.f32 0.0, %v338
  %v340 = vpop.f32.mrb[0].mxu0
  %v341 = vpop.f32.mrb[0].mxu0
  %v342 = vadd.f32 0.0, %v341
  %v343 = vpop.f32.mrb[0].mxu0
  %344 = vmatprep.mubr.bf16.mxu0 %v161
  %345 = vmatmul.mubr.bf16.gmra.mrb[0].mxu0 %v160
  %v346 = vpop.f32.mrb[0].mxu0
  %v347 = vadd.f32 0.0, %v346
  %v348 = vpop.f32.mrb[0].mxu0
  %v349 = vpop.f32.mrb[0].mxu0
  %v350 = vadd.f32 0.0, %v349
  %v351 = vpop.f32.mrb[0].mxu0
  %352 = vmatprep.mubr.bf16.mxu0 %v163
  %353 = vmatmul.mubr.bf16.gmra.mrb[0].mxu0 %v162
  %v354 = vpop.f32.mrb[0].mxu0
  %v355 = vadd.f32 0.0, %v354
  %v356 = vpop.f32.mrb[0].mxu0
  %v357 = vpop.f32.mrb[0].mxu0
  %v358 = vadd.f32 0.0, %v357
  %v359 = vpop.f32.mrb[0].mxu0
  %360 = vmatprep.mubr.bf16.mxu0 %v165
  %361 = vmatmul.mubr.bf16.gmra.mrb[0].mxu0 %v164
  %v362 = vpop.f32.mrb[0].mxu0
  %v363 = vadd.f32 0.0, %v362
  %v364 = vpop.f32.mrb[0].mxu0
  %v365 = vpop.f32.mrb[0].mxu0
  %v366 = vadd.f32 0.0, %v365
  %v367 = vpop.f32.mrb[0].mxu0
  %368 = vmatprep.mubr.bf16.mxu0 %v167
  %369 = vmatmul.mubr.bf16.gmra.mrb[0].mxu0 %v166
  %v370 = vpop.f32.mrb[0].mxu0
  %v371 = vadd.f32 0.0, %v370
  %v372 = vpop.f32.mrb[0].mxu0
  %v373 = vpop.f32.mrb[0].mxu0
  %v374 = vadd.f32 0.0, %v373
  %v375 = vpop.f32.mrb[0].mxu0
  %376 = vdwg.mxu0
  %v377 = vld [vmem:[#allocation2] sm:$0xff]
  %v378 = vld [vmem:[#allocation2 + $0x8] sm:$0xff]
  %v379 = vld [vmem:[#allocation2 + $0x10] sm:$0xff]
  %v380 = vld [vmem:[#allocation2 + $0x18] sm:$0xff]
  %v381 = vld [vmem:[#allocation2 + $0x20] sm:$0xff]
  %v382 = vld [vmem:[#allocation2 + $0x28] sm:$0xff]
  %v383 = vld [vmem:[#allocation2 + $0x30] sm:$0xff]
  %v384 = vld [vmem:[#allocation2 + $0x38] sm:$0xff]
  %v385 = vld [vmem:[#allocation2 + $0x40] sm:$0xff]
  %v386 = vld [vmem:[#allocation2 + $0x48] sm:$0xff]
  %v387 = vld [vmem:[#allocation2 + $0x50] sm:$0xff]
  %v388 = vld [vmem:[#allocation2 + $0x58] sm:$0xff]
  %v389 = vld [vmem:[#allocation2 + $0x60] sm:$0xff]
  %v390 = vld [vmem:[#allocation2 + $0x68] sm:$0xff]
  %v391 = vld [vmem:[#allocation2 + $0x70] sm:$0xff]
  %v392 = vld [vmem:[#allocation2 + $0x78] sm:$0xff]
  %v393 = vld [vmem:[%s0] sm:$0xf]
  %v394 = vld [vmem:[%s0 + $0x4] sm:$0xf]
  %v395 = vld [vmem:[%s0 + $0x8] sm:$0xf]
  %v396 = vld [vmem:[%s0 + $0xc] sm:$0xf]
  %v397 = vld [vmem:[%s0 + $0x10] sm:$0xf]
  %v398 = vld [vmem:[%s0 + $0x14] sm:$0xf]
  %v399 = vld [vmem:[%s0 + $0x18] sm:$0xf]
  %v400 = vld [vmem:[%s0 + $0x1c] sm:$0xf]
  %v401 = vld [vmem:[%s0 + $0x20] sm:$0xf]
  %v402 = vld [vmem:[%s0 + $0x24] sm:$0xf]
  %v403 = vld [vmem:[%s0 + $0x28] sm:$0xf]
  %v404 = vld [vmem:[%s0 + $0x2c] sm:$0xf]
  %v405 = vld [vmem:[%s0 + $0x30] sm:$0xf]
  %v406 = vld [vmem:[%s0 + $0x34] sm:$0xf]
  %v407 = vld [vmem:[%s0 + $0x38] sm:$0xf]
  %v408 = vld [vmem:[%s0 + $0x3c] sm:$0xf]
  %v409 = vpack.c.bf16 %v318, %v315
  %v410 = vpack.c.bf16 %v326, %v323
  %v411 = vpack.c.bf16 %v334, %v331
  %v412 = vpack.c.bf16 %v342, %v339
  %v413 = vpack.c.bf16 %v350, %v347
  %v414 = vpack.c.bf16 %v358, %v355
  %v415 = vpack.c.bf16 %v366, %v363
  %v416 = vpack.c.bf16 %v374, %v371
  %v433 = vunpack.c.l.b16 %v393
  %v434 = vunpack.c.l.b16 %v394
  %v435 = vunpack.c.l.b16 %v395
  %v436 = vunpack.c.l.b16 %v396
  %v437 = vunpack.c.l.b16 %v397
  %v438 = vunpack.c.l.b16 %v398
  %v439 = vunpack.c.l.b16 %v399
  %v440 = vunpack.c.l.b16 %v400
  %v441 = vunpack.c.l.b16 %v401
  %v442 = vunpack.c.l.b16 %v402
  %v443 = vunpack.c.l.b16 %v403
  %v444 = vunpack.c.l.b16 %v404
  %v445 = vunpack.c.l.b16 %v405
  %v446 = vunpack.c.l.b16 %v406
  %v447 = vunpack.c.l.b16 %v407
  %v448 = vunpack.c.l.b16 %v408
  %v449 = vpack.c.b16 %v434, %v433
  %v450 = vpack.c.b16 %v436, %v435
  %v451 = vpack.c.b16 %v438, %v437
  %v452 = vpack.c.b16 %v440, %v439
  %v453 = vpack.c.b16 %v442, %v441
  %v454 = vpack.c.b16 %v444, %v443
  %v455 = vpack.c.b16 %v446, %v445
  %v456 = vpack.c.b16 %v448, %v447
  %465 = vmatprep.subr.bf16.mxu0 0
  %466 = vmatpush1.bf16.msra.mxu0 %v409
  %467 = vmatprep.subr.bf16.mxu0 0
  %468 = vmatpush1.bf16.msra.mxu0 %v410
  %469 = vmatprep.subr.bf16.mxu0 0
  %470 = vmatpush1.bf16.msra.mxu0 %v411
  %471 = vmatprep.subr.bf16.mxu0 0
  %472 = vmatpush1.bf16.msra.mxu0 %v412
  %473 = vmatprep.subr.bf16.mxu0 0
  %474 = vmatpush1.bf16.msra.mxu0 %v413
  %475 = vmatprep.subr.bf16.mxu0 0
  %476 = vmatpush1.bf16.msra.mxu0 %v414
  %477 = vmatprep.subr.bf16.mxu0 0
  %478 = vmatpush1.bf16.msra.mxu0 %v415
  %479 = vmatprep.subr.bf16.mxu0 0
  %480 = vmatpush1.bf16.msra.mxu0 %v416
  %481 = vmatprep.subr.bf16.mxu0 0
  %482 = vmatpush1.bf16.msra.mxu0 0
  %483 = vmatprep.subr.bf16.mxu0 0
  %484 = vmatpush1.bf16.msra.mxu0 0
  %485 = vmatprep.subr.bf16.mxu0 0
  %486 = vmatpush1.bf16.msra.mxu0 0
  %487 = vmatprep.subr.bf16.mxu0 0
  %488 = vmatpush1.bf16.msra.mxu0 0
  %489 = vmatprep.subr.bf16.mxu0 0
  %490 = vmatpush1.bf16.msra.mxu0 0
  %491 = vmatprep.subr.bf16.mxu0 0
  %492 = vmatpush1.bf16.msra.mxu0 0
  %493 = vmatprep.subr.bf16.mxu0 0
  %494 = vmatpush1.bf16.msra.mxu0 0
  %495 = vmatprep.subr.bf16.mxu0 0
  %496 = vmatpush1.bf16.msra.mxu0 0
  %497 = vmatprep.mubr.bf16.mxu0 0
  %498 = vmatmul.mubr.bf16.gmra.mrb[0].mxu0 %v449
  %v499 = vpop.f32.mrb[0].mxu0
  %v500 = vadd.f32 0.0, %v499
  %v501 = vpop.f32.mrb[0].mxu0
  %v502 = vpop.f32.mrb[0].mxu0
  %v503 = vadd.f32 0.0, %v502
  %v504 = vpop.f32.mrb[0].mxu0
  %505 = vmatprep.mubr.bf16.mxu0 0
  %506 = vmatmul.mubr.bf16.gmra.mrb[0].mxu0 %v450
  %v507 = vpop.f32.mrb[0].mxu0
  %v508 = vadd.f32 0.0, %v507
  %v509 = vpop.f32.mrb[0].mxu0
  %v510 = vpop.f32.mrb[0].mxu0
  %v511 = vadd.f32 0.0, %v510
  %v512 = vpop.f32.mrb[0].mxu0
  %513 = vmatprep.mubr.bf16.mxu0 0
  %514 = vmatmul.mubr.bf16.gmra.mrb[0].mxu0 %v451
  %v515 = vpop.f32.mrb[0].mxu0
  %v516 = vadd.f32 0.0, %v515
  %v517 = vpop.f32.mrb[0].mxu0
  %v518 = vpop.f32.mrb[0].mxu0
  %v519 = vadd.f32 0.0, %v518
  %v520 = vpop.f32.mrb[0].mxu0
  %521 = vmatprep.mubr.bf16.mxu0 0
  %522 = vmatmul.mubr.bf16.gmra.mrb[0].mxu0 %v452
  %v523 = vpop.f32.mrb[0].mxu0
  %v524 = vadd.f32 0.0, %v523
  %v525 = vpop.f32.mrb[0].mxu0
  %v526 = vpop.f32.mrb[0].mxu0
  %v527 = vadd.f32 0.0, %v526
  %v528 = vpop.f32.mrb[0].mxu0
  %529 = vmatprep.mubr.bf16.mxu0 0
  %530 = vmatmul.mubr.bf16.gmra.mrb[0].mxu0 %v453
  %v531 = vpop.f32.mrb[0].mxu0
  %v532 = vadd.f32 0.0, %v531
  %v533 = vpop.f32.mrb[0].mxu0
  %v534 = vpop.f32.mrb[0].mxu0
  %v535 = vadd.f32 0.0, %v534
  %v536 = vpop.f32.mrb[0].mxu0
  %537 = vmatprep.mubr.bf16.mxu0 0
  %538 = vmatmul.mubr.bf16.gmra.mrb[0].mxu0 %v454
  %v539 = vpop.f32.mrb[0].mxu0
  %v540 = vadd.f32 0.0, %v539
  %v541 = vpop.f32.mrb[0].mxu0
  %v542 = vpop.f32.mrb[0].mxu0
  %v543 = vadd.f32 0.0, %v542
  %v544 = vpop.f32.mrb[0].mxu0
  %545 = vmatprep.mubr.bf16.mxu0 0
  %546 = vmatmul.mubr.bf16.gmra.mrb[0].mxu0 %v455
  %v547 = vpop.f32.mrb[0].mxu0
  %v548 = vadd.f32 0.0, %v547
  %v549 = vpop.f32.mrb[0].mxu0
  %v550 = vpop.f32.mrb[0].mxu0
  %v551 = vadd.f32 0.0, %v550
  %v552 = vpop.f32.mrb[0].mxu0
  %553 = vmatprep.mubr.bf16.mxu0 0
  %554 = vmatmul.mubr.bf16.gmra.mrb[0].mxu0 %v456
  %v555 = vpop.f32.mrb[0].mxu0
  %v556 = vadd.f32 0.0, %v555
  %v557 = vpop.f32.mrb[0].mxu0
  %v558 = vpop.f32.mrb[0].mxu0
  %v559 = vadd.f32 0.0, %v558
  %v560 = vpop.f32.mrb[0].mxu0
  %561 = vdwg.mxu0
  %v562 = vadd.f32 %v377, %v500
  %v563 = vadd.f32 %v378, %v503
  %v564 = vadd.f32 %v379, %v508
  %v565 = vadd.f32 %v380, %v511
  %v566 = vadd.f32 %v381, %v516
  %v567 = vadd.f32 %v382, %v519
  %v568 = vadd.f32 %v383, %v524
  %v569 = vadd.f32 %v384, %v527
  %v570 = vadd.f32 %v385, %v532
  %v571 = vadd.f32 %v386, %v535
  %v572 = vadd.f32 %v387, %v540
  %v573 = vadd.f32 %v388, %v543
  %v574 = vadd.f32 %v389, %v548
  %v575 = vadd.f32 %v390, %v551
  %v576 = vadd.f32 %v391, %v556
  %v577 = vadd.f32 %v392, %v559
  %578 = vst [vmem:[#allocation2] sm:$0xff] %v562
  %579 = vst [vmem:[#allocation2 + $0x8] sm:$0xff] %v563
  %580 = vst [vmem:[#allocation2 + $0x10] sm:$0xff] %v564
  %581 = vst [vmem:[#allocation2 + $0x18] sm:$0xff] %v565
  %582 = vst [vmem:[#allocation2 + $0x20] sm:$0xff] %v566
  %583 = vst [vmem:[#allocation2 + $0x28] sm:$0xff] %v567
  %584 = vst [vmem:[#allocation2 + $0x30] sm:$0xff] %v568
  %585 = vst [vmem:[#allocation2 + $0x38] sm:$0xff] %v569
  %586 = vst [vmem:[#allocation2 + $0x40] sm:$0xff] %v570
  %587 = vst [vmem:[#allocation2 + $0x48] sm:$0xff] %v571
  %588 = vst [vmem:[#allocation2 + $0x50] sm:$0xff] %v572
  %589 = vst [vmem:[#allocation2 + $0x58] sm:$0xff] %v573
  %590 = vst [vmem:[#allocation2 + $0x60] sm:$0xff] %v574
  %591 = vst [vmem:[#allocation2 + $0x68] sm:$0xff] %v575
  %592 = vst [vmem:[#allocation2 + $0x70] sm:$0xff] %v576
  %593 = vst [vmem:[#allocation2 + $0x78] sm:$0xff] %v577
  // Predicated region
  $region46: #{net10_forward.4} parent=0 // pred_check
    %p594 = pneg %p36
  $region47: #{net10_forward.4} parent=0 // pred_check_branch
    %596 = sbr.rel (%p594) target = $region49
  $region48: #{net10_forward.4} parent=0 // pred_region
    %v597 = vld [vmem:[#allocation2] sm:$0xff]
    %v598 = vld [vmem:[#allocation2 + $0x8] sm:$0xff]
    %v599 = vld [vmem:[#allocation2 + $0x10] sm:$0xff]
    %v600 = vld [vmem:[#allocation2 + $0x18] sm:$0xff]
    %v601 = vld [vmem:[#allocation2 + $0x20] sm:$0xff]
    %v602 = vld [vmem:[#allocation2 + $0x28] sm:$0xff]
    %v603 = vld [vmem:[#allocation2 + $0x30] sm:$0xff]
    %v604 = vld [vmem:[#allocation2 + $0x38] sm:$0xff]
    %v605 = vld [vmem:[#allocation2 + $0x40] sm:$0xff]
    %v606 = vld [vmem:[#allocation2 + $0x48] sm:$0xff]
    %v607 = vld [vmem:[#allocation2 + $0x50] sm:$0xff]
    %v608 = vld [vmem:[#allocation2 + $0x58] sm:$0xff]
    %v609 = vld [vmem:[#allocation2 + $0x60] sm:$0xff]
    %v610 = vld [vmem:[#allocation2 + $0x68] sm:$0xff]
    %v611 = vld [vmem:[#allocation2 + $0x70] sm:$0xff]
    %v612 = vld [vmem:[#allocation2 + $0x78] sm:$0xff]
    %v613 = vld [vmem:[%s3] sm:$0x1]
    %v615 = vlaneseq
    %v616 = vshrl.u32 %v615, 7
    %v617 = vsub.s32 0, %v616
    %v618 = vrot.slane %v613, %v617
    %v620 = vadd.f32 %v597, %v618
    %v621 = vadd.f32 %v598, %v618
    %v622 = vadd.f32 %v599, %v618
    %v623 = vadd.f32 %v600, %v618
    %v624 = vadd.f32 %v601, %v618
    %v625 = vadd.f32 %v602, %v618
    %v626 = vadd.f32 %v603, %v618
    %v627 = vadd.f32 %v604, %v618
    %v628 = vadd.f32 %v605, %v618
    %v629 = vadd.f32 %v606, %v618
    %v630 = vadd.f32 %v607, %v618
    %v631 = vadd.f32 %v608, %v618
    %v632 = vadd.f32 %v609, %v618
    %v633 = vadd.f32 %v610, %v618
    %v634 = vadd.f32 %v611, %v618
    %v635 = vadd.f32 %v612, %v618
    %v636 = vld [vmem:[%s4] sm:$0x3]
    %637 = vmatprep.subr.mxu0 0.0
    %638 = vmatpush1.msra.mxu0 %v620
    %639 = vmatprep.subr.mxu0 0.0
    %640 = vmatpush1.msra.mxu0 %v621
    %641 = vmatprep.subr.mxu0 0.0
    %642 = vmatpush1.msra.mxu0 %v622
    %643 = vmatprep.subr.mxu0 0.0
    %644 = vmatpush1.msra.mxu0 %v623
    %645 = vmatprep.subr.mxu0 0.0
    %646 = vmatpush1.msra.mxu0 %v624
    %647 = vmatprep.subr.mxu0 0.0
    %648 = vmatpush1.msra.mxu0 %v625
    %649 = vmatprep.subr.mxu0 0.0
    %650 = vmatpush1.msra.mxu0 %v626
    %651 = vmatprep.subr.mxu0 0.0
    %652 = vmatpush1.msra.mxu0 %v627
    %653 = vmatprep.subr.mxu0 0.0
    %654 = vmatpush1.msra.mxu0 %v628
    %655 = vmatprep.subr.mxu0 0.0
    %656 = vmatpush1.msra.mxu0 %v629
    %657 = vmatprep.subr.mxu0 0.0
    %658 = vmatpush1.msra.mxu0 %v630
    %659 = vmatprep.subr.mxu0 0.0
    %660 = vmatpush1.msra.mxu0 %v631
    %661 = vmatprep.subr.mxu0 0.0
    %662 = vmatpush1.msra.mxu0 %v632
    %663 = vmatprep.subr.mxu0 0.0
    %664 = vmatpush1.msra.mxu0 %v633
    %665 = vmatprep.subr.mxu0 0.0
    %666 = vmatpush1.msra.mxu0 %v634
    %667 = vmatprep.subr.mxu0 0.0
    %668 = vmatpush1.msra.mxu0 %v635
    %669 = vmatprep.subr.mxu0 0.0
    %670 = vmatpush1.msra.mxu0 0.0
    %671 = vmatprep.subr.mxu0 0.0
    %672 = vmatpush1.msra.mxu0 0.0
    %673 = vmatprep.subr.mxu0 0.0
    %674 = vmatpush1.msra.mxu0 0.0
    %675 = vmatprep.subr.mxu0 0.0
    %676 = vmatpush1.msra.mxu0 0.0
    %677 = vmatprep.subr.mxu0 0.0
    %678 = vmatpush1.msra.mxu0 0.0
    %679 = vmatprep.subr.mxu0 0.0
    %680 = vmatpush1.msra.mxu0 0.0
    %681 = vmatprep.subr.mxu0 0.0
    %682 = vmatpush1.msra.mxu0 0.0
    %683 = vmatprep.subr.mxu0 0.0
    %684 = vmatpush1.msra.mxu0 0.0
    %685 = vmatprep.subr.mxu0 0.0
    %686 = vmatpush1.msra.mxu0 0.0
    %687 = vmatprep.subr.mxu0 0.0
    %688 = vmatpush1.msra.mxu0 0.0
    %689 = vmatprep.subr.mxu0 0.0
    %690 = vmatpush1.msra.mxu0 0.0
    %691 = vmatprep.subr.mxu0 0.0
    %692 = vmatpush1.msra.mxu0 0.0
    %693 = vmatprep.subr.mxu0 0.0
    %694 = vmatpush1.msra.mxu0 0.0
    %695 = vmatprep.subr.mxu0 0.0
    %696 = vmatpush1.msra.mxu0 0.0
    %697 = vmatprep.subr.mxu0 0.0
    %698 = vmatpush1.msra.mxu0 0.0
    %699 = vmatprep.subr.mxu0 0.0
    %700 = vmatpush1.msra.mxu0 0.0
    %701 = vmatprep.mubr.f32.mxu0 0.0
    %702 = vmatmul.mubr.f32.gmra.mrb[0].mxu0 %v636
    %v703 = vpop.f32.mrb[0].mxu0
    %v704 = vadd.f32 0.0, %v703
    %v705 = vpop.f32.mrb[0].mxu0
    %706 = vdwg.mxu0
    %v707 = vld [vmem:[%s5] sm:$0xff]
    %v708 = vld [vmem:[%s5 + $0x8] sm:$0xff]
    %v709 = vld [vmem:[%s5 + $0x10] sm:$0xff]
    %v710 = vld [vmem:[%s5 + $0x18] sm:$0xff]
    %v711 = vld [vmem:[%s5 + $0x20] sm:$0xff]
    %v712 = vld [vmem:[%s5 + $0x28] sm:$0xff]
    %v713 = vld [vmem:[%s5 + $0x30] sm:$0xff]
    %v714 = vld [vmem:[%s5 + $0x38] sm:$0xff]
    %v715 = vld [vmem:[%s5 + $0x40] sm:$0xff]
    %v716 = vld [vmem:[%s5 + $0x48] sm:$0xff]
    %v717 = vld [vmem:[%s5 + $0x50] sm:$0xff]
    %v718 = vld [vmem:[%s5 + $0x58] sm:$0xff]
    %v719 = vld [vmem:[%s5 + $0x60] sm:$0xff]
    %v720 = vld [vmem:[%s5 + $0x68] sm:$0xff]
    %v721 = vld [vmem:[%s5 + $0x70] sm:$0xff]
    %v722 = vld [vmem:[%s5 + $0x78] sm:$0xff]
    %vm723 = vcmask 15360
    %v725 = vsel %vm723, %v707, 0
    %v728 = vsel %vm723, %v708, 0
    %v731 = vsel %vm723, %v709, 0
    %v734 = vsel %vm723, %v710, 0
    %v737 = vsel %vm723, %v711, 0
    %v740 = vsel %vm723, %v712, 0
    %v743 = vsel %vm723, %v713, 0
    %v746 = vsel %vm723, %v714, 0
    %v749 = vsel %vm723, %v715, 0
    %v752 = vsel %vm723, %v716, 0
    %v755 = vsel %vm723, %v717, 0
    %v758 = vsel %vm723, %v718, 0
    %v761 = vsel %vm723, %v719, 0
    %v764 = vsel %vm723, %v720, 0
    %v767 = vsel %vm723, %v721, 0
    %v770 = vsel %vm723, %v722, 0
    %vm772 = vcmask 1041408
    %v774 = vsel %vm772, %v704, 0
    %776 = vmatprep.subr.mxu0 0.0
    %777 = vmatpush1.msra.mxu0 %v774
    %778 = vmatprep.subr.mxu0 0.0
    %779 = vmatpush1.msra.mxu0 0.0
    %780 = vmatprep.subr.mxu0 0.0
    %781 = vmatpush1.msra.mxu0 0.0
    %782 = vmatprep.subr.mxu0 0.0
    %783 = vmatpush1.msra.mxu0 0.0
    %784 = vmatprep.subr.mxu0 0.0
    %785 = vmatpush1.msra.mxu0 0.0
    %786 = vmatprep.subr.mxu0 0.0
    %787 = vmatpush1.msra.mxu0 0.0
    %788 = vmatprep.subr.mxu0 0.0
    %789 = vmatpush1.msra.mxu0 0.0
    %790 = vmatprep.subr.mxu0 0.0
    %791 = vmatpush1.msra.mxu0 0.0
    %792 = vmatprep.subr.mxu0 0.0
    %793 = vmatpush1.msra.mxu0 0.0
    %794 = vmatprep.subr.mxu0 0.0
    %795 = vmatpush1.msra.mxu0 0.0
    %796 = vmatprep.subr.mxu0 0.0
    %797 = vmatpush1.msra.mxu0 0.0
    %798 = vmatprep.subr.mxu0 0.0
    %799 = vmatpush1.msra.mxu0 0.0
    %800 = vmatprep.subr.mxu0 0.0
    %801 = vmatpush1.msra.mxu0 0.0
    %802 = vmatprep.subr.mxu0 0.0
    %803 = vmatpush1.msra.mxu0 0.0
    %804 = vmatprep.subr.mxu0 0.0
    %805 = vmatpush1.msra.mxu0 0.0
    %806 = vmatprep.subr.mxu0 0.0
    %807 = vmatpush1.msra.mxu0 0.0
    %808 = vmatprep.subr.mxu0 0.0
    %809 = vmatpush1.msra.mxu0 0.0
    %810 = vmatprep.subr.mxu0 0.0
    %811 = vmatpush1.msra.mxu0 0.0
    %812 = vmatprep.subr.mxu0 0.0
    %813 = vmatpush1.msra.mxu0 0.0
    %814 = vmatprep.subr.mxu0 0.0
    %815 = vmatpush1.msra.mxu0 0.0
    %816 = vmatprep.subr.mxu0 0.0
    %817 = vmatpush1.msra.mxu0 0.0
    %818 = vmatprep.subr.mxu0 0.0
    %819 = vmatpush1.msra.mxu0 0.0
    %820 = vmatprep.subr.mxu0 0.0
    %821 = vmatpush1.msra.mxu0 0.0
    %822 = vmatprep.subr.mxu0 0.0
    %823 = vmatpush1.msra.mxu0 0.0
    %824 = vmatprep.subr.mxu0 0.0
    %825 = vmatpush1.msra.mxu0 0.0
    %826 = vmatprep.subr.mxu0 0.0
    %827 = vmatpush1.msra.mxu0 0.0
    %828 = vmatprep.subr.mxu0 0.0
    %829 = vmatpush1.msra.mxu0 0.0
    %830 = vmatprep.subr.mxu0 0.0
    %831 = vmatpush1.msra.mxu0 0.0
    %832 = vmatprep.subr.mxu0 0.0
    %833 = vmatpush1.msra.mxu0 0.0
    %834 = vmatprep.subr.mxu0 0.0
    %835 = vmatpush1.msra.mxu0 0.0
    %836 = vmatprep.subr.mxu0 0.0
    %837 = vmatpush1.msra.mxu0 0.0
    %838 = vmatprep.subr.mxu0 0.0
    %839 = vmatpush1.msra.mxu0 0.0
    %840 = vmatprep.mubr.f32.mxu0 0.0
    %841 = vmatmul.mubr.f32.gmra.mrb[0].mxu0 %v725
    %v842 = vpop.f32.mrb[0].mxu0
    %v843 = vadd.f32 0.0, %v842
    %v844 = vpop.f32.mrb[0].mxu0
    %845 = vmatprep.mubr.f32.mxu0 0.0
    %846 = vmatmul.mubr.f32.gmra.mrb[0].mxu0 %v728
    %v847 = vpop.f32.mrb[0].mxu0
    %v848 = vadd.f32 0.0, %v847
    %v849 = vpop.f32.mrb[0].mxu0
    %850 = vmatprep.mubr.f32.mxu0 0.0
    %851 = vmatmul.mubr.f32.gmra.mrb[0].mxu0 %v731
    %v852 = vpop.f32.mrb[0].mxu0
    %v853 = vadd.f32 0.0, %v852
    %v854 = vpop.f32.mrb[0].mxu0
    %855 = vmatprep.mubr.f32.mxu0 0.0
    %856 = vmatmul.mubr.f32.gmra.mrb[0].mxu0 %v734
    %v857 = vpop.f32.mrb[0].mxu0
    %v858 = vadd.f32 0.0, %v857
    %v859 = vpop.f32.mrb[0].mxu0
    %860 = vmatprep.mubr.f32.mxu0 0.0
    %861 = vmatmul.mubr.f32.gmra.mrb[0].mxu0 %v737
    %v862 = vpop.f32.mrb[0].mxu0
    %v863 = vadd.f32 0.0, %v862
    %v864 = vpop.f32.mrb[0].mxu0
    %865 = vmatprep.mubr.f32.mxu0 0.0
    %866 = vmatmul.mubr.f32.gmra.mrb[0].mxu0 %v740
    %v867 = vpop.f32.mrb[0].mxu0
    %v868 = vadd.f32 0.0, %v867
    %v869 = vpop.f32.mrb[0].mxu0
    %870 = vmatprep.mubr.f32.mxu0 0.0
    %871 = vmatmul.mubr.f32.gmra.mrb[0].mxu0 %v743
    %v872 = vpop.f32.mrb[0].mxu0
    %v873 = vadd.f32 0.0, %v872
    %v874 = vpop.f32.mrb[0].mxu0
    %875 = vmatprep.mubr.f32.mxu0 0.0
    %876 = vmatmul.mubr.f32.gmra.mrb[0].mxu0 %v746
    %v877 = vpop.f32.mrb[0].mxu0
    %v878 = vadd.f32 0.0, %v877
    %v879 = vpop.f32.mrb[0].mxu0
    %880 = vmatprep.mubr.f32.mxu0 0.0
    %881 = vmatmul.mubr.f32.gmra.mrb[0].mxu0 %v749
    %v882 = vpop.f32.mrb[0].mxu0
    %v883 = vadd.f32 0.0, %v882
    %v884 = vpop.f32.mrb[0].mxu0
    %885 = vmatprep.mubr.f32.mxu0 0.0
    %886 = vmatmul.mubr.f32.gmra.mrb[0].mxu0 %v752
    %v887 = vpop.f32.mrb[0].mxu0
    %v888 = vadd.f32 0.0, %v887
    %v889 = vpop.f32.mrb[0].mxu0
    %890 = vmatprep.mubr.f32.mxu0 0.0
    %891 = vmatmul.mubr.f32.gmra.mrb[0].mxu0 %v755
    %v892 = vpop.f32.mrb[0].mxu0
    %v893 = vadd.f32 0.0, %v892
    %v894 = vpop.f32.mrb[0].mxu0
    %895 = vmatprep.mubr.f32.mxu0 0.0
    %896 = vmatmul.mubr.f32.gmra.mrb[0].mxu0 %v758
    %v897 = vpop.f32.mrb[0].mxu0
    %v898 = vadd.f32 0.0, %v897
    %v899 = vpop.f32.mrb[0].mxu0
    %900 = vmatprep.mubr.f32.mxu0 0.0
    %901 = vmatmul.mubr.f32.gmra.mrb[0].mxu0 %v761
    %v902 = vpop.f32.mrb[0].mxu0
    %v903 = vadd.f32 0.0, %v902
    %v904 = vpop.f32.mrb[0].mxu0
    %905 = vmatprep.mubr.f32.mxu0 0.0
    %906 = vmatmul.mubr.f32.gmra.mrb[0].mxu0 %v764
    %v907 = vpop.f32.mrb[0].mxu0
    %v908 = vadd.f32 0.0, %v907
    %v909 = vpop.f32.mrb[0].mxu0
    %910 = vmatprep.mubr.f32.mxu0 0.0
    %911 = vmatmul.mubr.f32.gmra.mrb[0].mxu0 %v767
    %v912 = vpop.f32.mrb[0].mxu0
    %v913 = vadd.f32 0.0, %v912
    %v914 = vpop.f32.mrb[0].mxu0
    %915 = vmatprep.mubr.f32.mxu0 0.0
    %916 = vmatmul.mubr.f32.gmra.mrb[0].mxu0 %v770
    %v917 = vpop.f32.mrb[0].mxu0
    %v918 = vadd.f32 0.0, %v917
    %v919 = vpop.f32.mrb[0].mxu0
    %920 = vdwg.mxu0
    %v921 = vld [vmem:[%s8] sm:$0x1]
    %v923 = vlaneseq
    %v924 = vshrl.u32 %v923, 7
    %v925 = vsub.s32 0, %v924
    %v926 = vrot.slane %v921, %v925
    %v928 = vmul.f32 %v926, %v843
    %v929 = vmul.f32 %v926, %v848
    %v930 = vmul.f32 %v926, %v853
    %v931 = vmul.f32 %v926, %v858
    %v932 = vmul.f32 %v926, %v863
    %v933 = vmul.f32 %v926, %v868
    %v934 = vmul.f32 %v926, %v873
    %v935 = vmul.f32 %v926, %v878
    %v936 = vmul.f32 %v926, %v883
    %v937 = vmul.f32 %v926, %v888
    %v938 = vmul.f32 %v926, %v893
    %v939 = vmul.f32 %v926, %v898
    %v940 = vmul.f32 %v926, %v903
    %v941 = vmul.f32 %v926, %v908
    %v942 = vmul.f32 %v926, %v913
    %v943 = vmul.f32 %v926, %v918
    %v944 = vsub.f32 %v620, %v928
    %v945 = vsub.f32 %v621, %v929
    %v946 = vsub.f32 %v622, %v930
    %v947 = vsub.f32 %v623, %v931
    %v948 = vsub.f32 %v624, %v932
    %v949 = vsub.f32 %v625, %v933
    %v950 = vsub.f32 %v626, %v934
    %v951 = vsub.f32 %v627, %v935
    %v952 = vsub.f32 %v628, %v936
    %v953 = vsub.f32 %v629, %v937
    %v954 = vsub.f32 %v630, %v938
    %v955 = vsub.f32 %v631, %v939
    %v956 = vsub.f32 %v632, %v940
    %v957 = vsub.f32 %v633, %v941
    %v958 = vsub.f32 %v634, %v942
    %v959 = vsub.f32 %v635, %v943
    %v960 = vmul.f32 %v944, %v944
    %v961 = vmul.f32 %v945, %v945
    %v962 = vmul.f32 %v946, %v946
    %v963 = vmul.f32 %v947, %v947
    %v964 = vmul.f32 %v948, %v948
    %v965 = vmul.f32 %v949, %v949
    %v966 = vmul.f32 %v950, %v950
    %v967 = vmul.f32 %v951, %v951
    %v968 = vmul.f32 %v952, %v952
    %v969 = vmul.f32 %v953, %v953
    %v970 = vmul.f32 %v954, %v954
    %v971 = vmul.f32 %v955, %v955
    %v972 = vmul.f32 %v956, %v956
    %v973 = vmul.f32 %v957, %v957
    %v974 = vmul.f32 %v958, %v958
    %v975 = vmul.f32 %v959, %v959
    %976 = vmatprep.subr.mxu0 0.0
    %977 = vmatpush1.msra.mxu0 %v960
    %978 = vmatprep.subr.mxu0 0.0
    %979 = vmatpush1.msra.mxu0 %v961
    %980 = vmatprep.subr.mxu0 0.0
    %981 = vmatpush1.msra.mxu0 %v962
    %982 = vmatprep.subr.mxu0 0.0
    %983 = vmatpush1.msra.mxu0 %v963
    %984 = vmatprep.subr.mxu0 0.0
    %985 = vmatpush1.msra.mxu0 %v964
    %986 = vmatprep.subr.mxu0 0.0
    %987 = vmatpush1.msra.mxu0 %v965
    %988 = vmatprep.subr.mxu0 0.0
    %989 = vmatpush1.msra.mxu0 %v966
    %990 = vmatprep.subr.mxu0 0.0
    %991 = vmatpush1.msra.mxu0 %v967
    %992 = vmatprep.subr.mxu0 0.0
    %993 = vmatpush1.msra.mxu0 %v968
    %994 = vmatprep.subr.mxu0 0.0
    %995 = vmatpush1.msra.mxu0 %v969
    %996 = vmatprep.subr.mxu0 0.0
    %997 = vmatpush1.msra.mxu0 %v970
    %998 = vmatprep.subr.mxu0 0.0
    %999 = vmatpush1.msra.mxu0 %v971
    %1000 = vmatprep.subr.mxu0 0.0
    %1001 = vmatpush1.msra.mxu0 %v972
    %1002 = vmatprep.subr.mxu0 0.0
    %1003 = vmatpush1.msra.mxu0 %v973
    %1004 = vmatprep.subr.mxu0 0.0
    %1005 = vmatpush1.msra.mxu0 %v974
    %1006 = vmatprep.subr.mxu0 0.0
    %1007 = vmatpush1.msra.mxu0 %v975
    %1008 = vmatprep.subr.mxu0 0.0
    %1009 = vmatpush1.msra.mxu0 0.0
    %1010 = vmatprep.subr.mxu0 0.0
    %1011 = vmatpush1.msra.mxu0 0.0
    %1012 = vmatprep.subr.mxu0 0.0
    %1013 = vmatpush1.msra.mxu0 0.0
    %1014 = vmatprep.subr.mxu0 0.0
    %1015 = vmatpush1.msra.mxu0 0.0
    %1016 = vmatprep.subr.mxu0 0.0
    %1017 = vmatpush1.msra.mxu0 0.0
    %1018 = vmatprep.subr.mxu0 0.0
    %1019 = vmatpush1.msra.mxu0 0.0
    %1020 = vmatprep.subr.mxu0 0.0
    %1021 = vmatpush1.msra.mxu0 0.0
    %1022 = vmatprep.subr.mxu0 0.0
    %1023 = vmatpush1.msra.mxu0 0.0
    %1024 = vmatprep.subr.mxu0 0.0
    %1025 = vmatpush1.msra.mxu0 0.0
    %1026 = vmatprep.subr.mxu0 0.0
    %1027 = vmatpush1.msra.mxu0 0.0
    %1028 = vmatprep.subr.mxu0 0.0
    %1029 = vmatpush1.msra.mxu0 0.0
    %1030 = vmatprep.subr.mxu0 0.0
    %1031 = vmatpush1.msra.mxu0 0.0
    %1032 = vmatprep.subr.mxu0 0.0
    %1033 = vmatpush1.msra.mxu0 0.0
    %1034 = vmatprep.subr.mxu0 0.0
    %1035 = vmatpush1.msra.mxu0 0.0
    %1036 = vmatprep.subr.mxu0 0.0
    %1037 = vmatpush1.msra.mxu0 0.0
    %1038 = vmatprep.subr.mxu0 0.0
    %1039 = vmatpush1.msra.mxu0 0.0
    %1040 = vmatprep.mubr.f32.mxu0 0.0
    %1041 = vmatmul.mubr.f32.gmra.mrb[0].mxu0 %v636
    %v1042 = vpop.f32.mrb[0].mxu0
    %v1043 = vadd.f32 0.0, %v1042
    %v1044 = vpop.f32.mrb[0].mxu0
    %1045 = vdwg.mxu0
    %v1046 = vld [vmem:[%s6] sm:$0x1]
    %v1048 = vlaneseq
    %v1049 = vshrl.u32 %v1048, 7
    %v1050 = vsub.s32 0, %v1049
    %v1051 = vrot.slane %v1046, %v1050
    %v1053 = vmul.f32 %v1051, %v944
    %v1054 = vmul.f32 %v1051, %v945
    %v1055 = vmul.f32 %v1051, %v946
    %v1056 = vmul.f32 %v1051, %v947
    %v1057 = vmul.f32 %v1051, %v948
    %v1058 = vmul.f32 %v1051, %v949
    %v1059 = vmul.f32 %v1051, %v950
    %v1060 = vmul.f32 %v1051, %v951
    %v1061 = vmul.f32 %v1051, %v952
    %v1062 = vmul.f32 %v1051, %v953
    %v1063 = vmul.f32 %v1051, %v954
    %v1064 = vmul.f32 %v1051, %v955
    %v1065 = vmul.f32 %v1051, %v956
    %v1066 = vmul.f32 %v1051, %v957
    %v1067 = vmul.f32 %v1051, %v958
    %v1068 = vmul.f32 %v1051, %v959
    %v1070 = vsel %vm772, %v1043, 0
    %1072 = vmatprep.subr.mxu0 0.0
    %1073 = vmatpush1.msra.mxu0 %v1070
    %1074 = vmatprep.subr.mxu0 0.0
    %1075 = vmatpush1.msra.mxu0 0.0
    %1076 = vmatprep.subr.mxu0 0.0
    %1077 = vmatpush1.msra.mxu0 0.0
    %1078 = vmatprep.subr.mxu0 0.0
    %1079 = vmatpush1.msra.mxu0 0.0
    %1080 = vmatprep.subr.mxu0 0.0
    %1081 = vmatpush1.msra.mxu0 0.0
    %1082 = vmatprep.subr.mxu0 0.0
    %1083 = vmatpush1.msra.mxu0 0.0
    %1084 = vmatprep.subr.mxu0 0.0
    %1085 = vmatpush1.msra.mxu0 0.0
    %1086 = vmatprep.subr.mxu0 0.0
    %1087 = vmatpush1.msra.mxu0 0.0
    %1088 = vmatprep.subr.mxu0 0.0
    %1089 = vmatpush1.msra.mxu0 0.0
    %1090 = vmatprep.subr.mxu0 0.0
    %1091 = vmatpush1.msra.mxu0 0.0
    %1092 = vmatprep.subr.mxu0 0.0
    %1093 = vmatpush1.msra.mxu0 0.0
    %1094 = vmatprep.subr.mxu0 0.0
    %1095 = vmatpush1.msra.mxu0 0.0
    %1096 = vmatprep.subr.mxu0 0.0
    %1097 = vmatpush1.msra.mxu0 0.0
    %1098 = vmatprep.subr.mxu0 0.0
    %1099 = vmatpush1.msra.mxu0 0.0
    %1100 = vmatprep.subr.mxu0 0.0
    %1101 = vmatpush1.msra.mxu0 0.0
    %1102 = vmatprep.subr.mxu0 0.0
    %1103 = vmatpush1.msra.mxu0 0.0
    %1104 = vmatprep.subr.mxu0 0.0
    %1105 = vmatpush1.msra.mxu0 0.0
    %1106 = vmatprep.subr.mxu0 0.0
    %1107 = vmatpush1.msra.mxu0 0.0
    %1108 = vmatprep.subr.mxu0 0.0
    %1109 = vmatpush1.msra.mxu0 0.0
    %1110 = vmatprep.subr.mxu0 0.0
    %1111 = vmatpush1.msra.mxu0 0.0
    %1112 = vmatprep.subr.mxu0 0.0
    %1113 = vmatpush1.msra.mxu0 0.0
    %1114 = vmatprep.subr.mxu0 0.0
    %1115 = vmatpush1.msra.mxu0 0.0
    %1116 = vmatprep.subr.mxu0 0.0
    %1117 = vmatpush1.msra.mxu0 0.0
    %1118 = vmatprep.subr.mxu0 0.0
    %1119 = vmatpush1.msra.mxu0 0.0
    %1120 = vmatprep.subr.mxu0 0.0
    %1121 = vmatpush1.msra.mxu0 0.0
    %1122 = vmatprep.subr.mxu0 0.0
    %1123 = vmatpush1.msra.mxu0 0.0
    %1124 = vmatprep.subr.mxu0 0.0
    %1125 = vmatpush1.msra.mxu0 0.0
    %1126 = vmatprep.subr.mxu0 0.0
    %1127 = vmatpush1.msra.mxu0 0.0
    %1128 = vmatprep.subr.mxu0 0.0
    %1129 = vmatpush1.msra.mxu0 0.0
    %1130 = vmatprep.subr.mxu0 0.0
    %1131 = vmatpush1.msra.mxu0 0.0
    %1132 = vmatprep.subr.mxu0 0.0
    %1133 = vmatpush1.msra.mxu0 0.0
    %1134 = vmatprep.subr.mxu0 0.0
    %1135 = vmatpush1.msra.mxu0 0.0
    %1136 = vmatprep.mubr.f32.mxu0 0.0
    %1137 = vmatmul.mubr.f32.gmra.mrb[0].mxu0 %v725
    %v1138 = vpop.f32.mrb[0].mxu0
    %v1139 = vadd.f32 1e-05, %v1138
    %v1140 = vpop.f32.mrb[0].mxu0
    %1141 = vmatprep.mubr.f32.mxu0 0.0
    %1142 = vmatmul.mubr.f32.gmra.mrb[0].mxu0 %v728
    %v1143 = vpop.f32.mrb[0].mxu0
    %v1144 = vadd.f32 1e-05, %v1143
    %v1145 = vpop.f32.mrb[0].mxu0
    %1146 = vmatprep.mubr.f32.mxu0 0.0
    %1147 = vmatmul.mubr.f32.gmra.mrb[0].mxu0 %v731
    %v1148 = vpop.f32.mrb[0].mxu0
    %v1149 = vadd.f32 1e-05, %v1148
    %v1150 = vpop.f32.mrb[0].mxu0
    %1151 = vmatprep.mubr.f32.mxu0 0.0
    %1152 = vmatmul.mubr.f32.gmra.mrb[0].mxu0 %v734
    %v1153 = vpop.f32.mrb[0].mxu0
    %v1154 = vadd.f32 1e-05, %v1153
    %v1155 = vpop.f32.mrb[0].mxu0
    %1156 = vmatprep.mubr.f32.mxu0 0.0
    %1157 = vmatmul.mubr.f32.gmra.mrb[0].mxu0 %v737
    %v1158 = vpop.f32.mrb[0].mxu0
    %v1159 = vadd.f32 1e-05, %v1158
    %v1160 = vpop.f32.mrb[0].mxu0
    %1161 = vmatprep.mubr.f32.mxu0 0.0
    %1162 = vmatmul.mubr.f32.gmra.mrb[0].mxu0 %v740
    %v1163 = vpop.f32.mrb[0].mxu0
    %v1164 = vadd.f32 1e-05, %v1163
    %v1165 = vpop.f32.mrb[0].mxu0
    %1166 = vmatprep.mubr.f32.mxu0 0.0
    %1167 = vmatmul.mubr.f32.gmra.mrb[0].mxu0 %v743
    %v1168 = vpop.f32.mrb[0].mxu0
    %v1169 = vadd.f32 1e-05, %v1168
    %v1170 = vpop.f32.mrb[0].mxu0
    %1171 = vmatprep.mubr.f32.mxu0 0.0
    %1172 = vmatmul.mubr.f32.gmra.mrb[0].mxu0 %v746
    %v1173 = vpop.f32.mrb[0].mxu0
    %v1174 = vadd.f32 1e-05, %v1173
    %v1175 = vpop.f32.mrb[0].mxu0
    %1176 = vmatprep.mubr.f32.mxu0 0.0
    %1177 = vmatmul.mubr.f32.gmra.mrb[0].mxu0 %v749
    %v1178 = vpop.f32.mrb[0].mxu0
    %v1179 = vadd.f32 1e-05, %v1178
    %v1180 = vpop.f32.mrb[0].mxu0
    %1181 = vmatprep.mubr.f32.mxu0 0.0
    %1182 = vmatmul.mubr.f32.gmra.mrb[0].mxu0 %v752
    %v1183 = vpop.f32.mrb[0].mxu0
    %v1184 = vadd.f32 1e-05, %v1183
    %v1185 = vpop.f32.mrb[0].mxu0
    %1186 = vmatprep.mubr.f32.mxu0 0.0
    %1187 = vmatmul.mubr.f32.gmra.mrb[0].mxu0 %v755
    %v1188 = vpop.f32.mrb[0].mxu0
    %v1189 = vadd.f32 1e-05, %v1188
    %v1190 = vpop.f32.mrb[0].mxu0
    %1191 = vmatprep.mubr.f32.mxu0 0.0
    %1192 = vmatmul.mubr.f32.gmra.mrb[0].mxu0 %v758
    %v1193 = vpop.f32.mrb[0].mxu0
    %v1194 = vadd.f32 1e-05, %v1193
    %v1195 = vpop.f32.mrb[0].mxu0
    %1196 = vmatprep.mubr.f32.mxu0 0.0
    %1197 = vmatmul.mubr.f32.gmra.mrb[0].mxu0 %v761
    %v1198 = vpop.f32.mrb[0].mxu0
    %v1199 = vadd.f32 1e-05, %v1198
    %v1200 = vpop.f32.mrb[0].mxu0
    %1201 = vmatprep.mubr.f32.mxu0 0.0
    %1202 = vmatmul.mubr.f32.gmra.mrb[0].mxu0 %v764
    %v1203 = vpop.f32.mrb[0].mxu0
    %v1204 = vadd.f32 1e-05, %v1203
    %v1205 = vpop.f32.mrb[0].mxu0
    %1206 = vmatprep.mubr.f32.mxu0 0.0
    %1207 = vmatmul.mubr.f32.gmra.mrb[0].mxu0 %v767
    %v1208 = vpop.f32.mrb[0].mxu0
    %v1209 = vadd.f32 1e-05, %v1208
    %v1210 = vpop.f32.mrb[0].mxu0
    %1211 = vmatprep.mubr.f32.mxu0 0.0
    %1212 = vmatmul.mubr.f32.gmra.mrb[0].mxu0 %v770
    %v1213 = vpop.f32.mrb[0].mxu0
    %v1214 = vadd.f32 1e-05, %v1213
    %v1215 = vpop.f32.mrb[0].mxu0
    %1216 = vdwg.mxu0
    %v1217 = vrsqrt.pop %v1139
    %v1218 = vrsqrt.pop %v1144
    %v1219 = vrsqrt.pop %v1149
    %v1220 = vrsqrt.pop %v1154
    %v1221 = vrsqrt.pop %v1159
    %v1222 = vrsqrt.pop %v1164
    %v1223 = vrsqrt.pop %v1169
    %v1224 = vrsqrt.pop %v1174
    %v1225 = vrsqrt.pop %v1179
    %v1226 = vrsqrt.pop %v1184
    %v1227 = vrsqrt.pop %v1189
    %v1228 = vrsqrt.pop %v1194
    %v1229 = vrsqrt.pop %v1199
    %v1230 = vrsqrt.pop %v1204
    %v1231 = vrsqrt.pop %v1209
    %v1232 = vrsqrt.pop %v1214
    %v1233 = vmul.f32 %v1053, %v1217
    %v1234 = vmul.f32 %v1054, %v1218
    %v1235 = vmul.f32 %v1055, %v1219
    %v1236 = vmul.f32 %v1056, %v1220
    %v1237 = vmul.f32 %v1057, %v1221
    %v1238 = vmul.f32 %v1058, %v1222
    %v1239 = vmul.f32 %v1059, %v1223
    %v1240 = vmul.f32 %v1060, %v1224
    %v1241 = vmul.f32 %v1061, %v1225
    %v1242 = vmul.f32 %v1062, %v1226
    %v1243 = vmul.f32 %v1063, %v1227
    %v1244 = vmul.f32 %v1064, %v1228
    %v1245 = vmul.f32 %v1065, %v1229
    %v1246 = vmul.f32 %v1066, %v1230
    %v1247 = vmul.f32 %v1067, %v1231
    %v1248 = vmul.f32 %v1068, %v1232
    %v1249 = vld [vmem:[%s7] sm:$0x1]
    %v1251 = vlaneseq
    %v1252 = vshrl.u32 %v1251, 7
    %v1253 = vsub.s32 0, %v1252
    %v1254 = vrot.slane %v1249, %v1253
    %v1256 = vadd.f32 %v1233, %v1254
    %v1257 = vadd.f32 %v1234, %v1254
    %v1258 = vadd.f32 %v1235, %v1254
    %v1259 = vadd.f32 %v1236, %v1254
    %v1260 = vadd.f32 %v1237, %v1254
    %v1261 = vadd.f32 %v1238, %v1254
    %v1262 = vadd.f32 %v1239, %v1254
    %v1263 = vadd.f32 %v1240, %v1254
    %v1264 = vadd.f32 %v1241, %v1254
    %v1265 = vadd.f32 %v1242, %v1254
    %v1266 = vadd.f32 %v1243, %v1254
    %v1267 = vadd.f32 %v1244, %v1254
    %v1268 = vadd.f32 %v1245, %v1254
    %v1269 = vadd.f32 %v1246, %v1254
    %v1270 = vadd.f32 %v1247, %v1254
    %v1271 = vadd.f32 %v1248, %v1254
    %vm1272 = vcmp.ge.f32.partialorder %v1256, 0.0
    %vm1273 = vcmp.ge.f32.partialorder %v1257, 0.0
    %vm1274 = vcmp.ge.f32.partialorder %v1258, 0.0
    %vm1275 = vcmp.ge.f32.partialorder %v1259, 0.0
    %vm1276 = vcmp.ge.f32.partialorder %v1260, 0.0
    %vm1277 = vcmp.ge.f32.partialorder %v1261, 0.0
    %vm1278 = vcmp.ge.f32.partialorder %v1262, 0.0
    %vm1279 = vcmp.ge.f32.partialorder %v1263, 0.0
    %vm1280 = vcmp.ge.f32.partialorder %v1264, 0.0
    %vm1281 = vcmp.ge.f32.partialorder %v1265, 0.0
    %vm1282 = vcmp.ge.f32.partialorder %v1266, 0.0
    %vm1283 = vcmp.ge.f32.partialorder %v1267, 0.0
    %vm1284 = vcmp.ge.f32.partialorder %v1268, 0.0
    %vm1285 = vcmp.ge.f32.partialorder %v1269, 0.0
    %vm1286 = vcmp.ge.f32.partialorder %v1270, 0.0
    %vm1287 = vcmp.ge.f32.partialorder %v1271, 0.0
    %v1288 = vld [vmem:[%s9] sm:$0x1]
    %v1290 = vlaneseq
    %v1291 = vshrl.u32 %v1290, 7
    %v1292 = vsub.s32 0, %v1291
    %v1293 = vrot.slane %v1288, %v1292
    %v1295 = vmul.f32 %v1293, %v1256
    %v1296 = vmul.f32 %v1293, %v1257
    %v1297 = vmul.f32 %v1293, %v1258
    %v1298 = vmul.f32 %v1293, %v1259
    %v1299 = vmul.f32 %v1293, %v1260
    %v1300 = vmul.f32 %v1293, %v1261
    %v1301 = vmul.f32 %v1293, %v1262
    %v1302 = vmul.f32 %v1293, %v1263
    %v1303 = vmul.f32 %v1293, %v1264
    %v1304 = vmul.f32 %v1293, %v1265
    %v1305 = vmul.f32 %v1293, %v1266
    %v1306 = vmul.f32 %v1293, %v1267
    %v1307 = vmul.f32 %v1293, %v1268
    %v1308 = vmul.f32 %v1293, %v1269
    %v1309 = vmul.f32 %v1293, %v1270
    %v1310 = vmul.f32 %v1293, %v1271
    %v1311 = vsel %vm1272, %v1256, %v1295
    %v1312 = vsel %vm1273, %v1257, %v1296
    %v1313 = vsel %vm1274, %v1258, %v1297
    %v1314 = vsel %vm1275, %v1259, %v1298
    %v1315 = vsel %vm1276, %v1260, %v1299
    %v1316 = vsel %vm1277, %v1261, %v1300
    %v1317 = vsel %vm1278, %v1262, %v1301
    %v1318 = vsel %vm1279, %v1263, %v1302
    %v1319 = vsel %vm1280, %v1264, %v1303
    %v1320 = vsel %vm1281, %v1265, %v1304
    %v1321 = vsel %vm1282, %v1266, %v1305
    %v1322 = vsel %vm1283, %v1267, %v1306
    %v1323 = vsel %vm1284, %v1268, %v1307
    %v1324 = vsel %vm1285, %v1269, %v1308
    %v1325 = vsel %vm1286, %v1270, %v1309
    %v1326 = vsel %vm1287, %v1271, %v1310
    %v1327 = vpack.c.bf16 %v1312, %v1311
    %v1328 = vpack.c.bf16 %v1314, %v1313
    %v1329 = vpack.c.bf16 %v1316, %v1315
    %v1330 = vpack.c.bf16 %v1318, %v1317
    %v1331 = vpack.c.bf16 %v1320, %v1319
    %v1332 = vpack.c.bf16 %v1322, %v1321
    %v1333 = vpack.c.bf16 %v1324, %v1323
    %v1334 = vpack.c.bf16 %v1326, %v1325
    %v1343 = vunpack.c.l.b16 %v1327
    %v1344 = vunpack.c.h.b16 %v1327
    %v1345 = vunpack.c.l.b16 %v1328
    %v1346 = vunpack.c.h.b16 %v1328
    %v1347 = vunpack.c.l.b16 %v1329
    %v1348 = vunpack.c.h.b16 %v1329
    %v1349 = vunpack.c.l.b16 %v1330
    %v1350 = vunpack.c.h.b16 %v1330
    %v1351 = vunpack.c.l.b16 %v1331
    %v1352 = vunpack.c.h.b16 %v1331
    %v1353 = vunpack.c.l.b16 %v1332
    %v1354 = vunpack.c.h.b16 %v1332
    %v1355 = vunpack.c.l.b16 %v1333
    %v1356 = vunpack.c.h.b16 %v1333
    %v1357 = vunpack.c.l.b16 %v1334
    %v1358 = vunpack.c.h.b16 %v1334
    %v1359 = vpack.c.b16 %v1343, %v1343
    %v1360 = vpack.c.b16 %v1344, %v1344
    %v1361 = vpack.c.b16 %v1345, %v1345
    %v1362 = vpack.c.b16 %v1346, %v1346
    %v1363 = vpack.c.b16 %v1347, %v1347
    %v1364 = vpack.c.b16 %v1348, %v1348
    %v1365 = vpack.c.b16 %v1349, %v1349
    %v1366 = vpack.c.b16 %v1350, %v1350
    %v1367 = vpack.c.b16 %v1351, %v1351
    %v1368 = vpack.c.b16 %v1352, %v1352
    %v1369 = vpack.c.b16 %v1353, %v1353
    %v1370 = vpack.c.b16 %v1354, %v1354
    %v1371 = vpack.c.b16 %v1355, %v1355
    %v1372 = vpack.c.b16 %v1356, %v1356
    %v1373 = vpack.c.b16 %v1357, %v1357
    %v1374 = vpack.c.b16 %v1358, %v1358
    %1391 = vst [vmem:[%s10] sm:$0xf] %v1359
    %1392 = vst [vmem:[%s10 + $0x4] sm:$0xf] %v1360
    %1393 = vst [vmem:[%s10 + $0x8] sm:$0xf] %v1361
    %1394 = vst [vmem:[%s10 + $0xc] sm:$0xf] %v1362
    %1395 = vst [vmem:[%s10 + $0x10] sm:$0xf] %v1363
    %1396 = vst [vmem:[%s10 + $0x14] sm:$0xf] %v1364
    %1397 = vst [vmem:[%s10 + $0x18] sm:$0xf] %v1365
    %1398 = vst [vmem:[%s10 + $0x1c] sm:$0xf] %v1366
    %1399 = vst [vmem:[%s10 + $0x20] sm:$0xf] %v1367
    %1400 = vst [vmem:[%s10 + $0x24] sm:$0xf] %v1368
    %1401 = vst [vmem:[%s10 + $0x28] sm:$0xf] %v1369
    %1402 = vst [vmem:[%s10 + $0x2c] sm:$0xf] %v1370
    %1403 = vst [vmem:[%s10 + $0x30] sm:$0xf] %v1371
    %1404 = vst [vmem:[%s10 + $0x34] sm:$0xf] %v1372
    %1405 = vst [vmem:[%s10 + $0x38] sm:$0xf] %v1373
    %1406 = vst [vmem:[%s10 + $0x3c] sm:$0xf] %v1374
  $region49: #{net10_forward.4} parent=0 // pred_fallthru
    _
  // Predicated region
  $region50: #{net10_forward.4} parent=0 // pred_check
    _
  $region51: #{net10_forward.4} parent=0 // pred_check_branch
    %1408 = sbr.rel (0) target = $region53
  $region52: #{net10_forward.4} parent=0 // pred_region
    _
  $region53: #{net10_forward.4} parent=0 // pred_fallthru
    _
  // Predicated region
  $region54: #{net10_forward.4} parent=0 // pred_check
    _
  $region55: #{net10_forward.4} parent=0 // pred_check_branch
    %1410 = sbr.rel (0) target = $region57
  $region56: #{net10_forward.4} parent=0 // pred_region
    _
  $region57: #{net10_forward.4} parent=0 // pred_fallthru
    _

// kernel: net10_forward.5
$region0: #{net10_forward.5}
  #allocation0 [shape = 'u32[]', space=smem, size = 0x4, offset = 0x4, fixed_abs, tag = 'smem constant byte address 0x4 - core index']
  #allocation1 [shape = 'u32[144,128]{1,0:T(1,128)}', space=vmem, size = 0x12000, scoped, tag = 'internal scratch']
  #allocation2 [shape = 'f32[2,128]{1,0:T(2,128)}', space=vmem, size = 0x400, scoped, tag = 'scratch operand']
  #allocation3 [shape = 'f32[2,128]{1,0:T(2,128)}', space=vmem, size = 0x400, scoped, tag = 'scratch operand']
  #allocation4 [shape = 'f32[1,1]{1,0:T(1,128)S(1)}', space=vmem, size = 0x200, scoped, tag = 'scoped memory for net10_forward.5']
  %s0 = inlined_call_operand.vmem [shape: bf16[128,128], index: 0, kind: input, shape index: {}]
  %s1 = inlined_call_operand.vmem [shape: f32[2,128], index: 1, kind: input, shape index: {}]
  %s2 = inlined_call_operand.vmem [shape: f32[128,2], index: 2, kind: input, shape index: {}]
  %s3 = inlined_call_operand.vmem [shape: f32[256,128], index: 3, kind: input, shape index: {}]
  %s4 = inlined_call_operand.vmem [shape: f32[1,128], index: 4, kind: input, shape index: {}]
  %s5 = inlined_call_operand.vmem [shape: f32[1,128], index: 5, kind: input, shape index: {}]
  %s6 = inlined_call_operand.vmem [shape: f32[128,64], index: 6, kind: input, shape index: {}]
  %s7 = inlined_call_operand.vmem [shape: f32[1,64], index: 7, kind: input, shape index: {}]
  %s8 = inlined_call_operand.vmem [shape: f32[1,64], index: 8, kind: input, shape index: {}]
  %s9 = inlined_call_operand.vmem [shape: f32[1,64], index: 9, kind: input, shape index: {}]
  %s10 = inlined_call_operand.<no memory space> [shape: f32[1,1], index: 10, kind: input, shape index: {}]
  %s11 = inlined_call_operand.vmem [shape: f32[2,128], index: 11, kind: output, shape index: {}]
  %s12 = sld [smem:[#allocation0]]
  $region62: #{net10_forward.5} parent=0
    _
  %s14 = ssub.s32 1, %s12
  %s15 = scalar_select 0, %s14, %s12
  %v16 = vstv %s10
  %17 = vst [vmem:[#allocation4] sm:$0x1] %v16
  // Predicated region
  $region2: #{net10_forward.5} parent=0 // pred_check
    _
  $region3: #{net10_forward.5} parent=0 // pred_check_branch
    %19 = sbr.rel (0) target = $region5
  $region4: #{net10_forward.5} parent=0 // pred_region
    _
  $region5: #{net10_forward.5} parent=0 // pred_fallthru
    _
  // Predicated region
  $region6: #{net10_forward.5} parent=0 // pred_check
    _
  $region7: #{net10_forward.5} parent=0 // pred_check_branch
    %21 = sbr.rel (0) target = $region9
  $region8: #{net10_forward.5} parent=0 // pred_region
    _
  $region9: #{net10_forward.5} parent=0 // pred_fallthru
    _
  // Predicated region
  $region10: #{net10_forward.5} parent=0 // pred_check
    _
  $region11: #{net10_forward.5} parent=0 // pred_check_branch
    %23 = sbr.rel (0) target = $region13
  $region12: #{net10_forward.5} parent=0 // pred_region
    _
  $region13: #{net10_forward.5} parent=0 // pred_fallthru
    _
  // Predicated region
  $region14: #{net10_forward.5} parent=0 // pred_check
    _
  $region15: #{net10_forward.5} parent=0 // pred_check_branch
    %25 = sbr.rel (0) target = $region17
  $region16: #{net10_forward.5} parent=0 // pred_region
    _
  $region17: #{net10_forward.5} parent=0 // pred_fallthru
    _
  // Predicated region
  $region18: #{net10_forward.5} parent=0 // pred_check
    _
  $region19: #{net10_forward.5} parent=0 // pred_check_branch
    %27 = sbr.rel (0) target = $region21
  $region20: #{net10_forward.5} parent=0 // pred_region
    _
  $region21: #{net10_forward.5} parent=0 // pred_fallthru
    _
  // Predicated region
  $region22: #{net10_forward.5} parent=0 // pred_check
    _
  $region23: #{net10_forward.5} parent=0 // pred_check_branch
    %29 = sbr.rel (0) target = $region25
  $region24: #{net10_forward.5} parent=0 // pred_region
    _
  $region25: #{net10_forward.5} parent=0 // pred_fallthru
    _
  // Predicated region
  $region26: #{net10_forward.5} parent=0 // pred_check
    _
  $region27: #{net10_forward.5} parent=0 // pred_check_branch
    %31 = sbr.rel (0) target = $region29
  $region28: #{net10_forward.5} parent=0 // pred_region
    _
  $region29: #{net10_forward.5} parent=0 // pred_fallthru
    _
  // Predicated region
  $region30: #{net10_forward.5} parent=0 // pred_check
    _
  $region31: #{net10_forward.5} parent=0 // pred_check_branch
    %33 = sbr.rel (0) target = $region33
  $region32: #{net10_forward.5} parent=0 // pred_region
    _
  $region33: #{net10_forward.5} parent=0 // pred_fallthru
    _
  // Predicated region
  $region34: #{net10_forward.5} parent=0 // pred_check
    _
  $region35: #{net10_forward.5} parent=0 // pred_check_branch
    %35 = sbr.rel (0) target = $region37
  $region36: #{net10_forward.5} parent=0 // pred_region
    _
  $region37: #{net10_forward.5} parent=0 // pred_fallthru
    _
  // Predicated region
  $region38: #{net10_forward.5} parent=0 // pred_check
    _
  $region39: #{net10_forward.5} parent=0 // pred_check_branch
    %37 = sbr.rel (0) target = $region41
  $region40: #{net10_forward.5} parent=0 // pred_region
    _
  $region41: #{net10_forward.5} parent=0 // pred_fallthru
    _
  // Predicated region
  $region42: #{net10_forward.5} parent=0 // pred_check
    _
  $region43: #{net10_forward.5} parent=0 // pred_check_branch
    %39 = sbr.rel (0) target = $region45
  $region44: #{net10_forward.5} parent=0 // pred_region
    _
  $region45: #{net10_forward.5} parent=0 // pred_fallthru
    _
  %p40 = scmp.eq.s32.totalorder 0, 0
  // Predicated region
  $region46: #{net10_forward.5} parent=0 // pred_check
    %p41 = pneg %p40
  $region47: #{net10_forward.5} parent=0 // pred_check_branch
    %43 = sbr.rel (%p41) target = $region49
  $region48: #{net10_forward.5} parent=0 // pred_region
    %44 = vst [vmem:[#allocation2] sm:$0x3] 0.0
    %45 = vst [vmem:[#allocation3] sm:$0x3] -3.4028235e+38
  $region49: #{net10_forward.5} parent=0 // pred_fallthru
    _
  %v46 = vld [vmem:[%s0] sm:$0xf]
  %v47 = vld [vmem:[%s0 + $0x4] sm:$0xf]
  %v48 = vld [vmem:[%s0 + $0x8] sm:$0xf]
  %v49 = vld [vmem:[%s0 + $0xc] sm:$0xf]
  %v50 = vld [vmem:[%s0 + $0x10] sm:$0xf]
  %v51 = vld [vmem:[%s0 + $0x14] sm:$0xf]
  %v52 = vld [vmem:[%s0 + $0x18] sm:$0xf]
  %v53 = vld [vmem:[%s0 + $0x1c] sm:$0xf]
  %v54 = vld [vmem:[%s0 + $0x20] sm:$0xf]
  %v55 = vld [vmem:[%s0 + $0x24] sm:$0xf]
  %v56 = vld [vmem:[%s0 + $0x28] sm:$0xf]
  %v57 = vld [vmem:[%s0 + $0x2c] sm:$0xf]
  %v58 = vld [vmem:[%s0 + $0x30] sm:$0xf]
  %v59 = vld [vmem:[%s0 + $0x34] sm:$0xf]
  %v60 = vld [vmem:[%s0 + $0x38] sm:$0xf]
  %v61 = vld [vmem:[%s0 + $0x3c] sm:$0xf]
  %v62 = vunpack.c.l.bf16 %v46
  %v63 = vunpack.c.l.bf16 %v47
  %v64 = vunpack.c.l.bf16 %v48
  %v65 = vunpack.c.l.bf16 %v49
  %v66 = vunpack.c.l.bf16 %v50
  %v67 = vunpack.c.l.bf16 %v51
  %v68 = vunpack.c.l.bf16 %v52
  %v69 = vunpack.c.l.bf16 %v53
  %v70 = vunpack.c.l.bf16 %v54
  %v71 = vunpack.c.l.bf16 %v55
  %v72 = vunpack.c.l.bf16 %v56
  %v73 = vunpack.c.l.bf16 %v57
  %v74 = vunpack.c.l.bf16 %v58
  %v75 = vunpack.c.l.bf16 %v59
  %v76 = vunpack.c.l.bf16 %v60
  %v77 = vunpack.c.l.bf16 %v61
  %v78 = vld [vmem:[#allocation2] sm:$0x3]
  %v79 = vld [vmem:[%s1] sm:$0x3]
  %80 = vmatprep.subr.mxu0 0.0
  %81 = vmatpush1.msra.mxu0 %v62
  %82 = vmatprep.subr.mxu0 0.0
  %83 = vmatpush1.msra.mxu0 %v63
  %84 = vmatprep.subr.mxu0 0.0
  %85 = vmatpush1.msra.mxu0 %v64
  %86 = vmatprep.subr.mxu0 0.0
  %87 = vmatpush1.msra.mxu0 %v65
  %88 = vmatprep.subr.mxu0 0.0
  %89 = vmatpush1.msra.mxu0 %v66
  %90 = vmatprep.subr.mxu0 0.0
  %91 = vmatpush1.msra.mxu0 %v67
  %92 = vmatprep.subr.mxu0 0.0
  %93 = vmatpush1.msra.mxu0 %v68
  %94 = vmatprep.subr.mxu0 0.0
  %95 = vmatpush1.msra.mxu0 %v69
  %96 = vmatprep.subr.mxu0 0.0
  %97 = vmatpush1.msra.mxu0 %v70
  %98 = vmatprep.subr.mxu0 0.0
  %99 = vmatpush1.msra.mxu0 %v71
  %100 = vmatprep.subr.mxu0 0.0
  %101 = vmatpush1.msra.mxu0 %v72
  %102 = vmatprep.subr.mxu0 0.0
  %103 = vmatpush1.msra.mxu0 %v73
  %104 = vmatprep.subr.mxu0 0.0
  %105 = vmatpush1.msra.mxu0 %v74
  %106 = vmatprep.subr.mxu0 0.0
  %107 = vmatpush1.msra.mxu0 %v75
  %108 = vmatprep.subr.mxu0 0.0
  %109 = vmatpush1.msra.mxu0 %v76
  %110 = vmatprep.subr.mxu0 0.0
  %111 = vmatpush1.msra.mxu0 %v77
  %112 = vmatprep.subr.mxu0 0.0
  %113 = vmatpush1.msra.mxu0 0.0
  %114 = vmatprep.subr.mxu0 0.0
  %115 = vmatpush1.msra.mxu0 0.0
  %116 = vmatprep.subr.mxu0 0.0
  %117 = vmatpush1.msra.mxu0 0.0
  %118 = vmatprep.subr.mxu0 0.0
  %119 = vmatpush1.msra.mxu0 0.0
  %120 = vmatprep.subr.mxu0 0.0
  %121 = vmatpush1.msra.mxu0 0.0
  %122 = vmatprep.subr.mxu0 0.0
  %123 = vmatpush1.msra.mxu0 0.0
  %124 = vmatprep.subr.mxu0 0.0
  %125 = vmatpush1.msra.mxu0 0.0
  %126 = vmatprep.subr.mxu0 0.0
  %127 = vmatpush1.msra.mxu0 0.0
  %128 = vmatprep.subr.mxu0 0.0
  %129 = vmatpush1.msra.mxu0 0.0
  %130 = vmatprep.subr.mxu0 0.0
  %131 = vmatpush1.msra.mxu0 0.0
  %132 = vmatprep.subr.mxu0 0.0
  %133 = vmatpush1.msra.mxu0 0.0
  %134 = vmatprep.subr.mxu0 0.0
  %135 = vmatpush1.msra.mxu0 0.0
  %136 = vmatprep.subr.mxu0 0.0
  %137 = vmatpush1.msra.mxu0 0.0
  %138 = vmatprep.subr.mxu0 0.0
  %139 = vmatpush1.msra.mxu0 0.0
  %140 = vmatprep.subr.mxu0 0.0
  %141 = vmatpush1.msra.mxu0 0.0
  %142 = vmatprep.subr.mxu0 0.0
  %143 = vmatpush1.msra.mxu0 0.0
  %144 = vmatprep.mubr.f32.mxu0 0.0
  %145 = vmatmul.mubr.f32.gmra.mrb[0].mxu0 %v79
  %v146 = vpop.f32.mrb[0].mxu0
  %v147 = vadd.f32 0.0, %v146
  %v148 = vpop.f32.mrb[0].mxu0
  %149 = vdwg.mxu0
  %v150 = vadd.f32 %v78, %v147
  %151 = vst [vmem:[#allocation2] sm:$0x3] %v150
  %v152 = vld [vmem:[%s2] sm:$0xff]
  %v153 = vld [vmem:[%s2 + $0x8] sm:$0xff]
  %v154 = vld [vmem:[%s2 + $0x10] sm:$0xff]
  %v155 = vld [vmem:[%s2 + $0x18] sm:$0xff]
  %v156 = vld [vmem:[%s2 + $0x20] sm:$0xff]
  %v157 = vld [vmem:[%s2 + $0x28] sm:$0xff]
  %v158 = vld [vmem:[%s2 + $0x30] sm:$0xff]
  %v159 = vld [vmem:[%s2 + $0x38] sm:$0xff]
  %v160 = vld [vmem:[%s2 + $0x40] sm:$0xff]
  %v161 = vld [vmem:[%s2 + $0x48] sm:$0xff]
  %v162 = vld [vmem:[%s2 + $0x50] sm:$0xff]
  %v163 = vld [vmem:[%s2 + $0x58] sm:$0xff]
  %v164 = vld [vmem:[%s2 + $0x60] sm:$0xff]
  %v165 = vld [vmem:[%s2 + $0x68] sm:$0xff]
  %v166 = vld [vmem:[%s2 + $0x70] sm:$0xff]
  %v167 = vld [vmem:[%s2 + $0x78] sm:$0xff]
  %vm168 = vcmp.gt.f32.partialorder %v152, 0.5
  %vm169 = vcmp.gt.f32.partialorder %v153, 0.5
  %vm170 = vcmp.gt.f32.partialorder %v154, 0.5
  %vm171 = vcmp.gt.f32.partialorder %v155, 0.5
  %vm172 = vcmp.gt.f32.partialorder %v156, 0.5
  %vm173 = vcmp.gt.f32.partialorder %v157, 0.5
  %vm174 = vcmp.gt.f32.partialorder %v158, 0.5
  %vm175 = vcmp.gt.f32.partialorder %v159, 0.5
  %vm176 = vcmp.gt.f32.partialorder %v160, 0.5
  %vm177 = vcmp.gt.f32.partialorder %v161, 0.5
  %vm178 = vcmp.gt.f32.partialorder %v162, 0.5
  %vm179 = vcmp.gt.f32.partialorder %v163, 0.5
  %vm180 = vcmp.gt.f32.partialorder %v164, 0.5
  %vm181 = vcmp.gt.f32.partialorder %v165, 0.5
  %vm182 = vcmp.gt.f32.partialorder %v166, 0.5
  %vm183 = vcmp.gt.f32.partialorder %v167, 0.5
  %v184 = vsel %vm168, 1, 0
  %v185 = vsel %vm169, 1, 0
  %v186 = vsel %vm170, 1, 0
  %v187 = vsel %vm171, 1, 0
  %v188 = vsel %vm172, 1, 0
  %v189 = vsel %vm173, 1, 0
  %v190 = vsel %vm174, 1, 0
  %v191 = vsel %vm175, 1, 0
  %v192 = vsel %vm176, 1, 0
  %v193 = vsel %vm177, 1, 0
  %v194 = vsel %vm178, 1, 0
  %v195 = vsel %vm179, 1, 0
  %v196 = vsel %vm180, 1, 0
  %v197 = vsel %vm181, 1, 0
  %v198 = vsel %vm182, 1, 0
  %v199 = vsel %vm183, 1, 0
  %200 = vset.pattern.permute.xlu0 0
  %201 = vperm.xlu0 %200, %v184
  %v202 = vpop.permute.xlu0 %201
  %203 = vset.pattern.permute.xlu0 0
  %204 = vperm.xlu0 %203, %v185
  %v205 = vpop.permute.xlu0 %204
  %206 = vset.pattern.permute.xlu0 0
  %207 = vperm.xlu0 %206, %v186
  %v208 = vpop.permute.xlu0 %207
  %209 = vset.pattern.permute.xlu0 0
  %210 = vperm.xlu0 %209, %v187
  %v211 = vpop.permute.xlu0 %210
  %212 = vset.pattern.permute.xlu0 0
  %213 = vperm.xlu0 %212, %v188
  %v214 = vpop.permute.xlu0 %213
  %215 = vset.pattern.permute.xlu0 0
  %216 = vperm.xlu0 %215, %v189
  %v217 = vpop.permute.xlu0 %216
  %218 = vset.pattern.permute.xlu0 0
  %219 = vperm.xlu0 %218, %v190
  %v220 = vpop.permute.xlu0 %219
  %221 = vset.pattern.permute.xlu0 0
  %222 = vperm.xlu0 %221, %v191
  %v223 = vpop.permute.xlu0 %222
  %224 = vset.pattern.permute.xlu0 0
  %225 = vperm.xlu0 %224, %v192
  %v226 = vpop.permute.xlu0 %225
  %227 = vset.pattern.permute.xlu0 0
  %228 = vperm.xlu0 %227, %v193
  %v229 = vpop.permute.xlu0 %228
  %230 = vset.pattern.permute.xlu0 0
  %231 = vperm.xlu0 %230, %v194
  %v232 = vpop.permute.xlu0 %231
  %233 = vset.pattern.permute.xlu0 0
  %234 = vperm.xlu0 %233, %v195
  %v235 = vpop.permute.xlu0 %234
  %236 = vset.pattern.permute.xlu0 0
  %237 = vperm.xlu0 %236, %v196
  %v238 = vpop.permute.xlu0 %237
  %239 = vset.pattern.permute.xlu0 0
  %240 = vperm.xlu0 %239, %v197
  %v241 = vpop.permute.xlu0 %240
  %242 = vset.pattern.permute.xlu0 0
  %243 = vperm.xlu0 %242, %v198
  %v244 = vpop.permute.xlu0 %243
  %245 = vset.pattern.permute.xlu0 0
  %246 = vperm.xlu0 %245, %v199
  %v247 = vpop.permute.xlu0 %246
  %vm248 = vcmp.eq.s32.totalorder %v202, 1
  %vm249 = vcmp.eq.s32.totalorder %v205, 1
  %vm250 = vcmp.eq.s32.totalorder %v208, 1
  %vm251 = vcmp.eq.s32.totalorder %v211, 1
  %vm252 = vcmp.eq.s32.totalorder %v214, 1
  %vm253 = vcmp.eq.s32.totalorder %v217, 1
  %vm254 = vcmp.eq.s32.totalorder %v220, 1
  %vm255 = vcmp.eq.s32.totalorder %v223, 1
  %vm256 = vcmp.eq.s32.totalorder %v226, 1
  %vm257 = vcmp.eq.s32.totalorder %v229, 1
  %vm258 = vcmp.eq.s32.totalorder %v232, 1
  %vm259 = vcmp.eq.s32.totalorder %v235, 1
  %vm260 = vcmp.eq.s32.totalorder %v238, 1
  %vm261 = vcmp.eq.s32.totalorder %v241, 1
  %vm262 = vcmp.eq.s32.totalorder %v244, 1
  %vm263 = vcmp.eq.s32.totalorder %v247, 1
  %v264 = vsel %vm248, %v62, -3.4028235e+38
  %v265 = vsel %vm249, %v63, -3.4028235e+38
  %v266 = vsel %vm250, %v64, -3.4028235e+38
  %v267 = vsel %vm251, %v65, -3.4028235e+38
  %v268 = vsel %vm252, %v66, -3.4028235e+38
  %v269 = vsel %vm253, %v67, -3.4028235e+38
  %v270 = vsel %vm254, %v68, -3.4028235e+38
  %v271 = vsel %vm255, %v69, -3.4028235e+38
  %v272 = vsel %vm256, %v70, -3.4028235e+38
  %v273 = vsel %vm257, %v71, -3.4028235e+38
  %v274 = vsel %vm258, %v72, -3.4028235e+38
  %v275 = vsel %vm259, %v73, -3.4028235e+38
  %v276 = vsel %vm260, %v74, -3.4028235e+38
  %v277 = vsel %vm261, %v75, -3.4028235e+38
  %v278 = vsel %vm262, %v76, -3.4028235e+38
  %v279 = vsel %vm263, %v77, -3.4028235e+38
  %v280 = vmax.f32 %v264, %v268
  %v281 = vmax.f32 %v265, %v269
  %v282 = vmax.f32 %v266, %v270
  %v283 = vmax.f32 %v267, %v271
  %v284 = vmax.f32 %v280, %v272
  %v285 = vmax.f32 %v281, %v273
  %v286 = vmax.f32 %v282, %v274
  %v287 = vmax.f32 %v283, %v275
  %v288 = vmax.f32 %v284, %v276
  %v289 = vmax.f32 %v285, %v277
  %v290 = vmax.f32 %v286, %v278
  %v291 = vmax.f32 %v287, %v279
  %v292 = vmax.f32 %v288, %v289
  %v293 = vmax.f32 %v290, %v291
  %v294 = vmax.f32 %v292, %v293
  %v295 = vrot.slane %v294, 4
  %v296 = vmax.f32 %v294, %v295
  %v297 = vrot.slane %v296, 2
  %v298 = vmax.f32 %v296, %v297
  %v299 = vrot.slane %v298, 1
  %v300 = vmax.f32 %v298, %v299
  %301 = vset.pattern.permute.xlu0 1
  %302 = vperm.xlu0 %301, %v184
  %v303 = vpop.permute.xlu0 %302
  %304 = vset.pattern.permute.xlu0 1
  %305 = vperm.xlu0 %304, %v185
  %v306 = vpop.permute.xlu0 %305
  %307 = vset.pattern.permute.xlu0 1
  %308 = vperm.xlu0 %307, %v186
  %v309 = vpop.permute.xlu0 %308
  %310 = vset.pattern.permute.xlu0 1
  %311 = vperm.xlu0 %310, %v187
  %v312 = vpop.permute.xlu0 %311
  %313 = vset.pattern.permute.xlu0 1
  %314 = vperm.xlu0 %313, %v188
  %v315 = vpop.permute.xlu0 %314
  %316 = vset.pattern.permute.xlu0 1
  %317 = vperm.xlu0 %316, %v189
  %v318 = vpop.permute.xlu0 %317
  %319 = vset.pattern.permute.xlu0 1
  %320 = vperm.xlu0 %319, %v190
  %v321 = vpop.permute.xlu0 %320
  %322 = vset.pattern.permute.xlu0 1
  %323 = vperm.xlu0 %322, %v191
  %v324 = vpop.permute.xlu0 %323
  %325 = vset.pattern.permute.xlu0 1
  %326 = vperm.xlu0 %325, %v192
  %v327 = vpop.permute.xlu0 %326
  %328 = vset.pattern.permute.xlu0 1
  %329 = vperm.xlu0 %328, %v193
  %v330 = vpop.permute.xlu0 %329
  %331 = vset.pattern.permute.xlu0 1
  %332 = vperm.xlu0 %331, %v194
  %v333 = vpop.permute.xlu0 %332
  %334 = vset.pattern.permute.xlu0 1
  %335 = vperm.xlu0 %334, %v195
  %v336 = vpop.permute.xlu0 %335
  %337 = vset.pattern.permute.xlu0 1
  %338 = vperm.xlu0 %337, %v196
  %v339 = vpop.permute.xlu0 %338
  %340 = vset.pattern.permute.xlu0 1
  %341 = vperm.xlu0 %340, %v197
  %v342 = vpop.permute.xlu0 %341
  %343 = vset.pattern.permute.xlu0 1
  %344 = vperm.xlu0 %343, %v198
  %v345 = vpop.permute.xlu0 %344
  %346 = vset.pattern.permute.xlu0 1
  %347 = vperm.xlu0 %346, %v199
  %v348 = vpop.permute.xlu0 %347
  %vm349 = vcmp.eq.s32.totalorder %v303, 1
  %vm350 = vcmp.eq.s32.totalorder %v306, 1
  %vm351 = vcmp.eq.s32.totalorder %v309, 1
  %vm352 = vcmp.eq.s32.totalorder %v312, 1
  %vm353 = vcmp.eq.s32.totalorder %v315, 1
  %vm354 = vcmp.eq.s32.totalorder %v318, 1
  %vm355 = vcmp.eq.s32.totalorder %v321, 1
  %vm356 = vcmp.eq.s32.totalorder %v324, 1
  %vm357 = vcmp.eq.s32.totalorder %v327, 1
  %vm358 = vcmp.eq.s32.totalorder %v330, 1
  %vm359 = vcmp.eq.s32.totalorder %v333, 1
  %vm360 = vcmp.eq.s32.totalorder %v336, 1
  %vm361 = vcmp.eq.s32.totalorder %v339, 1
  %vm362 = vcmp.eq.s32.totalorder %v342, 1
  %vm363 = vcmp.eq.s32.totalorder %v345, 1
  %vm364 = vcmp.eq.s32.totalorder %v348, 1
  %v365 = vsel %vm349, %v62, -3.4028235e+38
  %v366 = vsel %vm350, %v63, -3.4028235e+38
  %v367 = vsel %vm351, %v64, -3.4028235e+38
  %v368 = vsel %vm352, %v65, -3.4028235e+38
  %v369 = vsel %vm353, %v66, -3.4028235e+38
  %v370 = vsel %vm354, %v67, -3.4028235e+38
  %v371 = vsel %vm355, %v68, -3.4028235e+38
  %v372 = vsel %vm356, %v69, -3.4028235e+38
  %v373 = vsel %vm357, %v70, -3.4028235e+38
  %v374 = vsel %vm358, %v71, -3.4028235e+38
  %v375 = vsel %vm359, %v72, -3.4028235e+38
  %v376 = vsel %vm360, %v73, -3.4028235e+38
  %v377 = vsel %vm361, %v74, -3.4028235e+38
  %v378 = vsel %vm362, %v75, -3.4028235e+38
  %v379 = vsel %vm363, %v76, -3.4028235e+38
  %v380 = vsel %vm364, %v77, -3.4028235e+38
  %v381 = vmax.f32 %v365, %v369
  %v382 = vmax.f32 %v366, %v370
  %v383 = vmax.f32 %v367, %v371
  %v384 = vmax.f32 %v368, %v372
  %v385 = vmax.f32 %v381, %v373
  %v386 = vmax.f32 %v382, %v374
  %v387 = vmax.f32 %v383, %v375
  %v388 = vmax.f32 %v384, %v376
  %v389 = vmax.f32 %v385, %v377
  %v390 = vmax.f32 %v386, %v378
  %v391 = vmax.f32 %v387, %v379
  %v392 = vmax.f32 %v388, %v380
  %v393 = vmax.f32 %v389, %v390
  %v394 = vmax.f32 %v391, %v392
  %v395 = vmax.f32 %v393, %v394
  %v396 = vrot.slane %v395, 4
  %v397 = vmax.f32 %v395, %v396
  %v398 = vrot.slane %v397, 2
  %v399 = vmax.f32 %v397, %v398
  %v400 = vrot.slane %v399, 1
  %v401 = vmax.f32 %v399, %v400
  %v402 = vld [vmem:[#allocation3] sm:$0x3]
  %vm403 = vcmask 1040384
  %v404 = vsel %vm403, %v300, %v401
  %v405 = vmax.f32 %v402, %v404
  %406 = vst [vmem:[#allocation3] sm:$0x3] %v405
  // Predicated region
  $region50: #{net10_forward.5} parent=0 // pred_check
    %p407 = pneg %p40
  $region51: #{net10_forward.5} parent=0 // pred_check_branch
    %409 = sbr.rel (%p407) target = $region53
  $region52: #{net10_forward.5} parent=0 // pred_region
    %v410 = vld [vmem:[#allocation2] sm:$0x3]
    %v411 = vld [vmem:[%s3] sm:$0xff]
    %v412 = vld [vmem:[%s3 + $0x8] sm:$0xff]
    %v413 = vld [vmem:[%s3 + $0x10] sm:$0xff]
    %v414 = vld [vmem:[%s3 + $0x18] sm:$0xff]
    %v415 = vld [vmem:[%s3 + $0x20] sm:$0xff]
    %v416 = vld [vmem:[%s3 + $0x28] sm:$0xff]
    %v417 = vld [vmem:[%s3 + $0x30] sm:$0xff]
    %v418 = vld [vmem:[%s3 + $0x38] sm:$0xff]
    %v419 = vld [vmem:[%s3 + $0x40] sm:$0xff]
    %v420 = vld [vmem:[%s3 + $0x48] sm:$0xff]
    %v421 = vld [vmem:[%s3 + $0x50] sm:$0xff]
    %v422 = vld [vmem:[%s3 + $0x58] sm:$0xff]
    %v423 = vld [vmem:[%s3 + $0x60] sm:$0xff]
    %v424 = vld [vmem:[%s3 + $0x68] sm:$0xff]
    %v425 = vld [vmem:[%s3 + $0x70] sm:$0xff]
    %v426 = vld [vmem:[%s3 + $0x78] sm:$0xff]
    %v427 = vld [vmem:[#allocation3] sm:$0x3]
    %v428 = vld [vmem:[%s3 + $0x80] sm:$0xff]
    %v429 = vld [vmem:[%s3 + $0x88] sm:$0xff]
    %v430 = vld [vmem:[%s3 + $0x90] sm:$0xff]
    %v431 = vld [vmem:[%s3 + $0x98] sm:$0xff]
    %v432 = vld [vmem:[%s3 + $0xa0] sm:$0xff]
    %v433 = vld [vmem:[%s3 + $0xa8] sm:$0xff]
    %v434 = vld [vmem:[%s3 + $0xb0] sm:$0xff]
    %v435 = vld [vmem:[%s3 + $0xb8] sm:$0xff]
    %v436 = vld [vmem:[%s3 + $0xc0] sm:$0xff]
    %v437 = vld [vmem:[%s3 + $0xc8] sm:$0xff]
    %v438 = vld [vmem:[%s3 + $0xd0] sm:$0xff]
    %v439 = vld [vmem:[%s3 + $0xd8] sm:$0xff]
    %v440 = vld [vmem:[%s3 + $0xe0] sm:$0xff]
    %v441 = vld [vmem:[%s3 + $0xe8] sm:$0xff]
    %v442 = vld [vmem:[%s3 + $0xf0] sm:$0xff]
    %v443 = vld [vmem:[%s3 + $0xf8] sm:$0xff]
    %444 = vmatprep.subr.mxu0 0.0
    %445 = vmatpush1.msra.mxu0 %v428
    %446 = vmatprep.subr.mxu0 0.0
    %447 = vmatpush1.msra.mxu0 %v429
    %448 = vmatprep.subr.mxu0 0.0
    %449 = vmatpush1.msra.mxu0 %v430
    %450 = vmatprep.subr.mxu0 0.0
    %451 = vmatpush1.msra.mxu0 %v431
    %452 = vmatprep.subr.mxu0 0.0
    %453 = vmatpush1.msra.mxu0 %v432
    %454 = vmatprep.subr.mxu0 0.0
    %455 = vmatpush1.msra.mxu0 %v433
    %456 = vmatprep.subr.mxu0 0.0
    %457 = vmatpush1.msra.mxu0 %v434
    %458 = vmatprep.subr.mxu0 0.0
    %459 = vmatpush1.msra.mxu0 %v435
    %460 = vmatprep.subr.mxu0 0.0
    %461 = vmatpush1.msra.mxu0 %v436
    %462 = vmatprep.subr.mxu0 0.0
    %463 = vmatpush1.msra.mxu0 %v437
    %464 = vmatprep.subr.mxu0 0.0
    %465 = vmatpush1.msra.mxu0 %v438
    %466 = vmatprep.subr.mxu0 0.0
    %467 = vmatpush1.msra.mxu0 %v439
    %468 = vmatprep.subr.mxu0 0.0
    %469 = vmatpush1.msra.mxu0 %v440
    %470 = vmatprep.subr.mxu0 0.0
    %471 = vmatpush1.msra.mxu0 %v441
    %472 = vmatprep.subr.mxu0 0.0
    %473 = vmatpush1.msra.mxu0 %v442
    %474 = vmatprep.subr.mxu0 0.0
    %475 = vmatpush1.msra.mxu0 %v443
    %476 = vmatprep.subr.mxu0 0.0
    %477 = vmatpush1.msra.mxu0 0.0
    %478 = vmatprep.subr.mxu0 0.0
    %479 = vmatpush1.msra.mxu0 0.0
    %480 = vmatprep.subr.mxu0 0.0
    %481 = vmatpush1.msra.mxu0 0.0
    %482 = vmatprep.subr.mxu0 0.0
    %483 = vmatpush1.msra.mxu0 0.0
    %484 = vmatprep.subr.mxu0 0.0
    %485 = vmatpush1.msra.mxu0 0.0
    %486 = vmatprep.subr.mxu0 0.0
    %487 = vmatpush1.msra.mxu0 0.0
    %488 = vmatprep.subr.mxu0 0.0
    %489 = vmatpush1.msra.mxu0 0.0
    %490 = vmatprep.subr.mxu0 0.0
    %491 = vmatpush1.msra.mxu0 0.0
    %492 = vmatprep.subr.mxu0 0.0
    %493 = vmatpush1.msra.mxu0 0.0
    %494 = vmatprep.subr.mxu0 0.0
    %495 = vmatpush1.msra.mxu0 0.0
    %496 = vmatprep.subr.mxu0 0.0
    %497 = vmatpush1.msra.mxu0 0.0
    %498 = vmatprep.subr.mxu0 0.0
    %499 = vmatpush1.msra.mxu0 0.0
    %500 = vmatprep.subr.mxu0 0.0
    %501 = vmatpush1.msra.mxu0 0.0
    %502 = vmatprep.subr.mxu0 0.0
    %503 = vmatpush1.msra.mxu0 0.0
    %504 = vmatprep.subr.mxu0 0.0
    %505 = vmatpush1.msra.mxu0 0.0
    %506 = vmatprep.subr.mxu0 0.0
    %507 = vmatpush1.msra.mxu0 0.0
    %508 = vmatprep.mubr.f32.mxu0 0.0
    %509 = vmatmul.mubr.f32.gmra.mrb[0].mxu0 %v427
    %v510 = vpop.f32.mrb[0].mxu0
    %v511 = vadd.f32 0.0, %v510
    %v512 = vpop.f32.mrb[0].mxu0
    %513 = vdwg.mxu0
    %514 = vmatprep.subr.mxu0 0.0
    %515 = vmatpush1.msra.mxu0 %v411
    %516 = vmatprep.subr.mxu0 0.0
    %517 = vmatpush1.msra.mxu0 %v412
    %518 = vmatprep.subr.mxu0 0.0
    %519 = vmatpush1.msra.mxu0 %v413
    %520 = vmatprep.subr.mxu0 0.0
    %521 = vmatpush1.msra.mxu0 %v414
    %522 = vmatprep.subr.mxu0 0.0
    %523 = vmatpush1.msra.mxu0 %v415
    %524 = vmatprep.subr.mxu0 0.0
    %525 = vmatpush1.msra.mxu0 %v416
    %526 = vmatprep.subr.mxu0 0.0
    %527 = vmatpush1.msra.mxu0 %v417
    %528 = vmatprep.subr.mxu0 0.0
    %529 = vmatpush1.msra.mxu0 %v418
    %530 = vmatprep.subr.mxu0 0.0
    %531 = vmatpush1.msra.mxu0 %v419
    %532 = vmatprep.subr.mxu0 0.0
    %533 = vmatpush1.msra.mxu0 %v420
    %534 = vmatprep.subr.mxu0 0.0
    %535 = vmatpush1.msra.mxu0 %v421
    %536 = vmatprep.subr.mxu0 0.0
    %537 = vmatpush1.msra.mxu0 %v422
    %538 = vmatprep.subr.mxu0 0.0
    %539 = vmatpush1.msra.mxu0 %v423
    %540 = vmatprep.subr.mxu0 0.0
    %541 = vmatpush1.msra.mxu0 %v424
    %542 = vmatprep.subr.mxu0 0.0
    %543 = vmatpush1.msra.mxu0 %v425
    %544 = vmatprep.subr.mxu0 0.0
    %545 = vmatpush1.msra.mxu0 %v426
    %546 = vmatprep.subr.mxu0 0.0
    %547 = vmatpush1.msra.mxu0 0.0
    %548 = vmatprep.subr.mxu0 0.0
    %549 = vmatpush1.msra.mxu0 0.0
    %550 = vmatprep.subr.mxu0 0.0
    %551 = vmatpush1.msra.mxu0 0.0
    %552 = vmatprep.subr.mxu0 0.0
    %553 = vmatpush1.msra.mxu0 0.0
    %554 = vmatprep.subr.mxu0 0.0
    %555 = vmatpush1.msra.mxu0 0.0
    %556 = vmatprep.subr.mxu0 0.0
    %557 = vmatpush1.msra.mxu0 0.0
    %558 = vmatprep.subr.mxu0 0.0
    %559 = vmatpush1.msra.mxu0 0.0
    %560 = vmatprep.subr.mxu0 0.0
    %561 = vmatpush1.msra.mxu0 0.0
    %562 = vmatprep.subr.mxu0 0.0
    %563 = vmatpush1.msra.mxu0 0.0
    %564 = vmatprep.subr.mxu0 0.0
    %565 = vmatpush1.msra.mxu0 0.0
    %566 = vmatprep.subr.mxu0 0.0
    %567 = vmatpush1.msra.mxu0 0.0
    %568 = vmatprep.subr.mxu0 0.0
    %569 = vmatpush1.msra.mxu0 0.0
    %570 = vmatprep.subr.mxu0 0.0
    %571 = vmatpush1.msra.mxu0 0.0
    %572 = vmatprep.subr.mxu0 0.0
    %573 = vmatpush1.msra.mxu0 0.0
    %574 = vmatprep.subr.mxu0 0.0
    %575 = vmatpush1.msra.mxu0 0.0
    %576 = vmatprep.subr.mxu0 0.0
    %577 = vmatpush1.msra.mxu0 0.0
    %578 = vmatprep.mubr.f32.mxu0 0.0
    %579 = vmatmul.mubr.f32.gmra.mrb[0].mxu0 %v410
    %v580 = vpop.f32.mrb[0].mxu0
    %v581 = vadd.f32 %v511, %v580
    %v582 = vpop.f32.mrb[0].mxu0
    %583 = vdwg.mxu0
    %v584 = vld [vmem:[%s4] sm:$0x1]
    %v586 = vlaneseq
    %v587 = vshrl.u32 %v586, 7
    %v588 = vsub.s32 0, %v587
    %v589 = vrot.slane %v584, %v588
    %v591 = vadd.f32 %v581, %v589
    %vm592 = vcmp.ge.f32.partialorder %v591, 0.0
    %v593 = vld [vmem:[%s5] sm:$0x1]
    %v595 = vlaneseq
    %v596 = vshrl.u32 %v595, 7
    %v597 = vsub.s32 0, %v596
    %v598 = vrot.slane %v593, %v597
    %v600 = vmul.f32 %v598, %v591
    %v601 = vsel %vm592, %v591, %v600
    %v602 = vld [vmem:[%s6] sm:$0xff]
    %v603 = vld [vmem:[%s6 + $0x8] sm:$0xff]
    %v604 = vld [vmem:[%s6 + $0x10] sm:$0xff]
    %v605 = vld [vmem:[%s6 + $0x18] sm:$0xff]
    %v606 = vld [vmem:[%s6 + $0x20] sm:$0xff]
    %v607 = vld [vmem:[%s6 + $0x28] sm:$0xff]
    %v608 = vld [vmem:[%s6 + $0x30] sm:$0xff]
    %v609 = vld [vmem:[%s6 + $0x38] sm:$0xff]
    %v610 = vld [vmem:[%s6 + $0x40] sm:$0xff]
    %v611 = vld [vmem:[%s6 + $0x48] sm:$0xff]
    %v612 = vld [vmem:[%s6 + $0x50] sm:$0xff]
    %v613 = vld [vmem:[%s6 + $0x58] sm:$0xff]
    %v614 = vld [vmem:[%s6 + $0x60] sm:$0xff]
    %v615 = vld [vmem:[%s6 + $0x68] sm:$0xff]
    %v616 = vld [vmem:[%s6 + $0x70] sm:$0xff]
    %v617 = vld [vmem:[%s6 + $0x78] sm:$0xff]
    %v618 = vld [vmem:[%s7] sm:$0x1]
    %v620 = vlaneseq
    %v621 = vshrl.u32 %v620, 7
    %v622 = vsub.s32 0, %v621
    %v623 = vrot.slane %v618, %v622
    %625 = vmatprep.subr.mxu0 0.0
    %626 = vmatpush1.msra.mxu0 %v602
    %627 = vmatprep.subr.mxu0 0.0
    %628 = vmatpush1.msra.mxu0 %v603
    %629 = vmatprep.subr.mxu0 0.0
    %630 = vmatpush1.msra.mxu0 %v604
    %631 = vmatprep.subr.mxu0 0.0
    %632 = vmatpush1.msra.mxu0 %v605
    %633 = vmatprep.subr.mxu0 0.0
    %634 = vmatpush1.msra.mxu0 %v606
    %635 = vmatprep.subr.mxu0 0.0
    %636 = vmatpush1.msra.mxu0 %v607
    %637 = vmatprep.subr.mxu0 0.0
    %638 = vmatpush1.msra.mxu0 %v608
    %639 = vmatprep.subr.mxu0 0.0
    %640 = vmatpush1.msra.mxu0 %v609
    %641 = vmatprep.subr.mxu0 0.0
    %642 = vmatpush1.msra.mxu0 %v610
    %643 = vmatprep.subr.mxu0 0.0
    %644 = vmatpush1.msra.mxu0 %v611
    %645 = vmatprep.subr.mxu0 0.0
    %646 = vmatpush1.msra.mxu0 %v612
    %647 = vmatprep.subr.mxu0 0.0
    %648 = vmatpush1.msra.mxu0 %v613
    %649 = vmatprep.subr.mxu0 0.0
    %650 = vmatpush1.msra.mxu0 %v614
    %651 = vmatprep.subr.mxu0 0.0
    %652 = vmatpush1.msra.mxu0 %v615
    %653 = vmatprep.subr.mxu0 0.0
    %654 = vmatpush1.msra.mxu0 %v616
    %655 = vmatprep.subr.mxu0 0.0
    %656 = vmatpush1.msra.mxu0 %v617
    %657 = vmatprep.subr.mxu0 0.0
    %658 = vmatpush1.msra.mxu0 0.0
    %659 = vmatprep.subr.mxu0 0.0
    %660 = vmatpush1.msra.mxu0 0.0
    %661 = vmatprep.subr.mxu0 0.0
    %662 = vmatpush1.msra.mxu0 0.0
    %663 = vmatprep.subr.mxu0 0.0
    %664 = vmatpush1.msra.mxu0 0.0
    %665 = vmatprep.subr.mxu0 0.0
    %666 = vmatpush1.msra.mxu0 0.0
    %667 = vmatprep.subr.mxu0 0.0
    %668 = vmatpush1.msra.mxu0 0.0
    %669 = vmatprep.subr.mxu0 0.0
    %670 = vmatpush1.msra.mxu0 0.0
    %671 = vmatprep.subr.mxu0 0.0
    %672 = vmatpush1.msra.mxu0 0.0
    %673 = vmatprep.subr.mxu0 0.0
    %674 = vmatpush1.msra.mxu0 0.0
    %675 = vmatprep.subr.mxu0 0.0
    %676 = vmatpush1.msra.mxu0 0.0
    %677 = vmatprep.subr.mxu0 0.0
    %678 = vmatpush1.msra.mxu0 0.0
    %679 = vmatprep.subr.mxu0 0.0
    %680 = vmatpush1.msra.mxu0 0.0
    %681 = vmatprep.subr.mxu0 0.0
    %682 = vmatpush1.msra.mxu0 0.0
    %683 = vmatprep.subr.mxu0 0.0
    %684 = vmatpush1.msra.mxu0 0.0
    %685 = vmatprep.subr.mxu0 0.0
    %686 = vmatpush1.msra.mxu0 0.0
    %687 = vmatprep.subr.mxu0 0.0
    %688 = vmatpush1.msra.mxu0 0.0
    %689 = vmatprep.mubr.f32.mxu0 0.0
    %690 = vmatmul.mubr.f32.gmra.mrb[0].mxu0 %v601
    %v691 = vpop.f32.mrb[0].mxu0
    %v692 = vadd.f32 %v623, %v691
    %v693 = vpop.f32.mrb[0].mxu0
    %694 = vdwg.mxu0
    %vm695 = vcmp.ge.f32.partialorder %v692, 0.0
    %v696 = vld [vmem:[%s8] sm:$0x1]
    %v698 = vlaneseq
    %v699 = vshrl.u32 %v698, 7
    %v700 = vsub.s32 0, %v699
    %v701 = vrot.slane %v696, %v700
    %v703 = vmul.f32 %v701, %v692
    %v704 = vsel %vm695, %v692, %v703
    %v705 = vld [vmem:[%s9] sm:$0x1]
    %v707 = vlaneseq
    %v708 = vshrl.u32 %v707, 7
    %v709 = vsub.s32 0, %v708
    %v710 = vrot.slane %v705, %v709
    %v712 = vmul.f32 %v704, %v710
    %vm713 = vcmask 517120
    %v714 = vsel %vm713, %v712, 0.0
    %715 = vadd.xlane.f32.xlu0 %v714
    %v716 = vpop.xlane.xlu0 %715
    %v717 = vld [vmem:[#allocation4] sm:$0x1]
    %v719 = vlaneseq
    %v720 = vshrl.u32 %v719, 7
    %v721 = vsub.s32 0, %v720
    %v722 = vrot.slane %v717, %v721
    %v724 = vadd.f32 %v716, %v722
    %726 = vset.pattern.permute.xlu0 0
    %727 = vperm.xlu0 %726, %v724
    %v728 = vpop.permute.xlu0 %727
    %730 = vst [vmem:[%s11] sm:$0x3] %v728
  $region53: #{net10_forward.5} parent=0 // pred_fallthru
    _
  // Predicated region
  $region54: #{net10_forward.5} parent=0 // pred_check
    _
  $region55: #{net10_forward.5} parent=0 // pred_check_branch
    %732 = sbr.rel (0) target = $region57
  $region56: #{net10_forward.5} parent=0 // pred_region
    _
  $region57: #{net10_forward.5} parent=0 // pred_fallthru
    _
  // Predicated region
  $region58: #{net10_forward.5} parent=0 // pred_check
    _
  $region59: #{net10_forward.5} parent=0 // pred_check_branch
    %734 = sbr.rel (0) target = $region61
  $region60: #{net10_forward.5} parent=0 // pred_region
    _
  $region61: #{net10_forward.5} parent=0 // pred_fallthru
    _

// kernel: net10_forward.3
$region0: #{net10_forward.3}
  #allocation0 [shape = 'u32[]', space=smem, size = 0x4, offset = 0x4, fixed_abs, tag = 'smem constant byte address 0x4 - core index']
  #allocation1 [shape = 'u32[144,128]{1,0:T(1,128)}', space=vmem, size = 0x12000, scoped, tag = 'internal scratch']
  #allocation2 [shape = 'f32[128,256]{1,0:T(8,128)}', space=vmem, size = 0x20000, scoped, tag = 'scratch operand']
  %s0 = inlined_call_operand.vmem [shape: bf16[128,128], index: 0, kind: input, shape index: {}]
  %s1 = inlined_call_operand.vmem [shape: bf16[128,128], index: 1, kind: input, shape index: {}]
  %s2 = inlined_call_operand.vmem [shape: bf16[128,256], index: 2, kind: input, shape index: {}]
  %s3 = inlined_call_operand.vmem [shape: f32[1,256], index: 3, kind: input, shape index: {}]
  %s4 = inlined_call_operand.vmem [shape: f32[2,128], index: 4, kind: input, shape index: {}]
  %s5 = inlined_call_operand.vmem [shape: f32[128,2], index: 5, kind: input, shape index: {}]
  %s6 = inlined_call_operand.vmem [shape: f32[1,256], index: 6, kind: input, shape index: {}]
  %s7 = inlined_call_operand.vmem [shape: f32[1,256], index: 7, kind: input, shape index: {}]
  %s8 = inlined_call_operand.vmem [shape: f32[1,256], index: 8, kind: input, shape index: {}]
  %s9 = inlined_call_operand.vmem [shape: f32[1,256], index: 9, kind: input, shape index: {}]
  %s10 = inlined_call_operand.vmem [shape: bf16[128,256], index: 10, kind: output, shape index: {}]
  %s11 = sld [smem:[#allocation0]]
  $region58: #{net10_forward.3} parent=0
    _
  %s13 = ssub.s32 1, %s11
  %s14 = scalar_select 0, %s13, %s11
  // Predicated region
  $region2: #{net10_forward.3} parent=0 // pred_check
    _
  $region3: #{net10_forward.3} parent=0 // pred_check_branch
    %16 = sbr.rel (0) target = $region5
  $region4: #{net10_forward.3} parent=0 // pred_region
    _
  $region5: #{net10_forward.3} parent=0 // pred_fallthru
    _
  // Predicated region
  $region6: #{net10_forward.3} parent=0 // pred_check
    _
  $region7: #{net10_forward.3} parent=0 // pred_check_branch
    %18 = sbr.rel (0) target = $region9
  $region8: #{net10_forward.3} parent=0 // pred_region
    _
  $region9: #{net10_forward.3} parent=0 // pred_fallthru
    _
  // Predicated region
  $region10: #{net10_forward.3} parent=0 // pred_check
    _
  $region11: #{net10_forward.3} parent=0 // pred_check_branch
    %20 = sbr.rel (0) target = $region13
  $region12: #{net10_forward.3} parent=0 // pred_region
    _
  $region13: #{net10_forward.3} parent=0 // pred_fallthru
    _
  // Predicated region
  $region14: #{net10_forward.3} parent=0 // pred_check
    _
  $region15: #{net10_forward.3} parent=0 // pred_check_branch
    %22 = sbr.rel (0) target = $region17
  $region16: #{net10_forward.3} parent=0 // pred_region
    _
  $region17: #{net10_forward.3} parent=0 // pred_fallthru
    _
  // Predicated region
  $region18: #{net10_forward.3} parent=0 // pred_check
    _
  $region19: #{net10_forward.3} parent=0 // pred_check_branch
    %24 = sbr.rel (0) target = $region21
  $region20: #{net10_forward.3} parent=0 // pred_region
    _
  $region21: #{net10_forward.3} parent=0 // pred_fallthru
    _
  // Predicated region
  $region22: #{net10_forward.3} parent=0 // pred_check
    _
  $region23: #{net10_forward.3} parent=0 // pred_check_branch
    %26 = sbr.rel (0) target = $region25
  $region24: #{net10_forward.3} parent=0 // pred_region
    _
  $region25: #{net10_forward.3} parent=0 // pred_fallthru
    _
  // Predicated region
  $region26: #{net10_forward.3} parent=0 // pred_check
    _
  $region27: #{net10_forward.3} parent=0 // pred_check_branch
    %28 = sbr.rel (0) target = $region29
  $region28: #{net10_forward.3} parent=0 // pred_region
    _
  $region29: #{net10_forward.3} parent=0 // pred_fallthru
    _
  // Predicated region
  $region30: #{net10_forward.3} parent=0 // pred_check
    _
  $region31: #{net10_forward.3} parent=0 // pred_check_branch
    %30 = sbr.rel (0) target = $region33
  $region32: #{net10_forward.3} parent=0 // pred_region
    _
  $region33: #{net10_forward.3} parent=0 // pred_fallthru
    _
  // Predicated region
  $region34: #{net10_forward.3} parent=0 // pred_check
    _
  $region35: #{net10_forward.3} parent=0 // pred_check_branch
    %32 = sbr.rel (0) target = $region37
  $region36: #{net10_forward.3} parent=0 // pred_region
    _
  $region37: #{net10_forward.3} parent=0 // pred_fallthru
    _
  // Predicated region
  $region38: #{net10_forward.3} parent=0 // pred_check
    _
  $region39: #{net10_forward.3} parent=0 // pred_check_branch
    %34 = sbr.rel (0) target = $region41
  $region40: #{net10_forward.3} parent=0 // pred_region
    _
  $region41: #{net10_forward.3} parent=0 // pred_fallthru
    _
  %p36 = scmp.eq.s32.totalorder 0, 0
  // Predicated region
  $region42: #{net10_forward.3} parent=0 // pred_check
    %p37 = pneg %p36
  $region43: #{net10_forward.3} parent=0 // pred_check_branch
    %39 = sbr.rel (%p37) target = $region45
  $region44: #{net10_forward.3} parent=0 // pred_region
    %40 = vst [vmem:[#allocation2] sm:$0xff] 0.0
    %41 = vst [vmem:[#allocation2 + $0x8] sm:$0xff] 0.0
    %42 = vst [vmem:[#allocation2 + $0x10] sm:$0xff] 0.0
    %43 = vst [vmem:[#allocation2 + $0x18] sm:$0xff] 0.0
    %44 = vst [vmem:[#allocation2 + $0x20] sm:$0xff] 0.0
    %45 = vst [vmem:[#allocation2 + $0x28] sm:$0xff] 0.0
    %46 = vst [vmem:[#allocation2 + $0x30] sm:$0xff] 0.0
    %47 = vst [vmem:[#allocation2 + $0x38] sm:$0xff] 0.0
    %48 = vst [vmem:[#allocation2 + $0x40] sm:$0xff] 0.0
    %49 = vst [vmem:[#allocation2 + $0x48] sm:$0xff] 0.0
    %50 = vst [vmem:[#allocation2 + $0x50] sm:$0xff] 0.0
    %51 = vst [vmem:[#allocation2 + $0x58] sm:$0xff] 0.0
    %52 = vst [vmem:[#allocation2 + $0x60] sm:$0xff] 0.0
    %53 = vst [vmem:[#allocation2 + $0x68] sm:$0xff] 0.0
    %54 = vst [vmem:[#allocation2 + $0x70] sm:$0xff] 0.0
    %55 = vst [vmem:[#allocation2 + $0x78] sm:$0xff] 0.0
    %56 = vst [vmem:[#allocation2 + $0x80] sm:$0xff] 0.0
    %57 = vst [vmem:[#allocation2 + $0x88] sm:$0xff] 0.0
    %58 = vst [vmem:[#allocation2 + $0x90] sm:$0xff] 0.0
    %59 = vst [vmem:[#allocation2 + $0x98] sm:$0xff] 0.0
    %60 = vst [vmem:[#allocation2 + $0xa0] sm:$0xff] 0.0
    %61 = vst [vmem:[#allocation2 + $0xa8] sm:$0xff] 0.0
    %62 = vst [vmem:[#allocation2 + $0xb0] sm:$0xff] 0.0
    %63 = vst [vmem:[#allocation2 + $0xb8] sm:$0xff] 0.0
    %64 = vst [vmem:[#allocation2 + $0xc0] sm:$0xff] 0.0
    %65 = vst [vmem:[#allocation2 + $0xc8] sm:$0xff] 0.0
    %66 = vst [vmem:[#allocation2 + $0xd0] sm:$0xff] 0.0
    %67 = vst [vmem:[#allocation2 + $0xd8] sm:$0xff] 0.0
    %68 = vst [vmem:[#allocation2 + $0xe0] sm:$0xff] 0.0
    %69 = vst [vmem:[#allocation2 + $0xe8] sm:$0xff] 0.0
    %70 = vst [vmem:[#allocation2 + $0xf0] sm:$0xff] 0.0
    %71 = vst [vmem:[#allocation2 + $0xf8] sm:$0xff] 0.0
  $region45: #{net10_forward.3} parent=0 // pred_fallthru
    _
  %v72 = vld [vmem:[%s1] sm:$0xf]
  %v73 = vld [vmem:[%s1 + $0x4] sm:$0xf]
  %v74 = vld [vmem:[%s1 + $0x8] sm:$0xf]
  %v75 = vld [vmem:[%s1 + $0xc] sm:$0xf]
  %v76 = vld [vmem:[%s1 + $0x10] sm:$0xf]
  %v77 = vld [vmem:[%s1 + $0x14] sm:$0xf]
  %v78 = vld [vmem:[%s1 + $0x18] sm:$0xf]
  %v79 = vld [vmem:[%s1 + $0x1c] sm:$0xf]
  %v80 = vld [vmem:[%s1 + $0x20] sm:$0xf]
  %v81 = vld [vmem:[%s1 + $0x24] sm:$0xf]
  %v82 = vld [vmem:[%s1 + $0x28] sm:$0xf]
  %v83 = vld [vmem:[%s1 + $0x2c] sm:$0xf]
  %v84 = vld [vmem:[%s1 + $0x30] sm:$0xf]
  %v85 = vld [vmem:[%s1 + $0x34] sm:$0xf]
  %v86 = vld [vmem:[%s1 + $0x38] sm:$0xf]
  %v87 = vld [vmem:[%s1 + $0x3c] sm:$0xf]
  %v88 = vld [vmem:[%s2] sm:$0xff]
  %v89 = vld [vmem:[%s2 + $0x8] sm:$0xff]
  %v90 = vld [vmem:[%s2 + $0x10] sm:$0xff]
  %v91 = vld [vmem:[%s2 + $0x18] sm:$0xff]
  %v92 = vld [vmem:[%s2 + $0x20] sm:$0xff]
  %v93 = vld [vmem:[%s2 + $0x28] sm:$0xff]
  %v94 = vld [vmem:[%s2 + $0x30] sm:$0xff]
  %v95 = vld [vmem:[%s2 + $0x38] sm:$0xff]
  %v96 = vld [vmem:[%s2 + $0x40] sm:$0xff]
  %v97 = vld [vmem:[%s2 + $0x48] sm:$0xff]
  %v98 = vld [vmem:[%s2 + $0x50] sm:$0xff]
  %v99 = vld [vmem:[%s2 + $0x58] sm:$0xff]
  %v100 = vld [vmem:[%s2 + $0x60] sm:$0xff]
  %v101 = vld [vmem:[%s2 + $0x68] sm:$0xff]
  %v102 = vld [vmem:[%s2 + $0x70] sm:$0xff]
  %v103 = vld [vmem:[%s2 + $0x78] sm:$0xff]
  %v120 = vunpack.c.l.b16 %v72
  %v121 = vunpack.c.l.b16 %v73
  %v122 = vunpack.c.l.b16 %v74
  %v123 = vunpack.c.l.b16 %v75
  %v124 = vunpack.c.l.b16 %v76
  %v125 = vunpack.c.l.b16 %v77
  %v126 = vunpack.c.l.b16 %v78
  %v127 = vunpack.c.l.b16 %v79
  %v128 = vunpack.c.l.b16 %v80
  %v129 = vunpack.c.l.b16 %v81
  %v130 = vunpack.c.l.b16 %v82
  %v131 = vunpack.c.l.b16 %v83
  %v132 = vunpack.c.l.b16 %v84
  %v133 = vunpack.c.l.b16 %v85
  %v134 = vunpack.c.l.b16 %v86
  %v135 = vunpack.c.l.b16 %v87
  %v136 = vpack.c.b16 %v121, %v120
  %v137 = vpack.c.b16 %v123, %v122
  %v138 = vpack.c.b16 %v125, %v124
  %v139 = vpack.c.b16 %v127, %v126
  %v140 = vpack.c.b16 %v129, %v128
  %v141 = vpack.c.b16 %v131, %v130
  %v142 = vpack.c.b16 %v133, %v132
  %v143 = vpack.c.b16 %v135, %v134
  %v168 = vunpack.c.l.b16 %v88
  %v169 = vunpack.c.h.b16 %v88
  %v170 = vunpack.c.l.b16 %v89
  %v171 = vunpack.c.h.b16 %v89
  %v172 = vunpack.c.l.b16 %v90
  %v173 = vunpack.c.h.b16 %v90
  %v174 = vunpack.c.l.b16 %v91
  %v175 = vunpack.c.h.b16 %v91
  %v176 = vunpack.c.l.b16 %v92
  %v177 = vunpack.c.h.b16 %v92
  %v178 = vunpack.c.l.b16 %v93
  %v179 = vunpack.c.h.b16 %v93
  %v180 = vunpack.c.l.b16 %v94
  %v181 = vunpack.c.h.b16 %v94
  %v182 = vunpack.c.l.b16 %v95
  %v183 = vunpack.c.h.b16 %v95
  %v184 = vunpack.c.l.b16 %v96
  %v185 = vunpack.c.h.b16 %v96
  %v186 = vunpack.c.l.b16 %v97
  %v187 = vunpack.c.h.b16 %v97
  %v188 = vunpack.c.l.b16 %v98
  %v189 = vunpack.c.h.b16 %v98
  %v190 = vunpack.c.l.b16 %v99
  %v191 = vunpack.c.h.b16 %v99
  %v192 = vunpack.c.l.b16 %v100
  %v193 = vunpack.c.h.b16 %v100
  %v194 = vunpack.c.l.b16 %v101
  %v195 = vunpack.c.h.b16 %v101
  %v196 = vunpack.c.l.b16 %v102
  %v197 = vunpack.c.h.b16 %v102
  %v198 = vunpack.c.l.b16 %v103
  %v199 = vunpack.c.h.b16 %v103
  %v200 = vpack.c.b16 %v170, %v168
  %v201 = vpack.c.b16 %v171, %v169
  %v202 = vpack.c.b16 %v174, %v172
  %v203 = vpack.c.b16 %v175, %v173
  %v204 = vpack.c.b16 %v178, %v176
  %v205 = vpack.c.b16 %v179, %v177
  %v206 = vpack.c.b16 %v182, %v180
  %v207 = vpack.c.b16 %v183, %v181
  %v208 = vpack.c.b16 %v186, %v184
  %v209 = vpack.c.b16 %v187, %v185
  %v210 = vpack.c.b16 %v190, %v188
  %v211 = vpack.c.b16 %v191, %v189
  %v212 = vpack.c.b16 %v194, %v192
  %v213 = vpack.c.b16 %v195, %v193
  %v214 = vpack.c.b16 %v198, %v196
  %v215 = vpack.c.b16 %v199, %v197
  %232 = vmatprep.subr.bf16.mxu0 %v201
  %233 = vmatpush1.bf16.msra.mxu0 %v200
  %234 = vmatprep.subr.bf16.mxu0 %v203
  %235 = vmatpush1.bf16.msra.mxu0 %v202
  %236 = vmatprep.subr.bf16.mxu0 %v205
  %237 = vmatpush1.bf16.msra.mxu0 %v204
  %238 = vmatprep.subr.bf16.mxu0 %v207
  %239 = vmatpush1.bf16.msra.mxu0 %v206
  %240 = vmatprep.subr.bf16.mxu0 %v209
  %241 = vmatpush1.bf16.msra.mxu0 %v208
  %242 = vmatprep.subr.bf16.mxu0 %v211
  %243 = vmatpush1.bf16.msra.mxu0 %v210
  %244 = vmatprep.subr.bf16.mxu0 %v213
  %245 = vmatpush1.bf16.msra.mxu0 %v212
  %246 = vmatprep.subr.bf16.mxu0 %v215
  %247 = vmatpush1.bf16.msra.mxu0 %v214
  %248 = vmatprep.subr.bf16.mxu0 0
  %249 = vmatpush1.bf16.msra.mxu0 0
  %250 = vmatprep.subr.bf16.mxu0 0
  %251 = vmatpush1.bf16.msra.mxu0 0
  %252 = vmatprep.subr.bf16.mxu0 0
  %253 = vmatpush1.bf16.msra.mxu0 0
  %254 = vmatprep.subr.bf16.mxu0 0
  %255 = vmatpush1.bf16.msra.mxu0 0
  %256 = vmatprep.subr.bf16.mxu0 0
  %257 = vmatpush1.bf16.msra.mxu0 0
  %258 = vmatprep.subr.bf16.mxu0 0
  %259 = vmatpush1.bf16.msra.mxu0 0
  %260 = vmatprep.subr.bf16.mxu0 0
  %261 = vmatpush1.bf16.msra.mxu0 0
  %262 = vmatprep.subr.bf16.mxu0 0
  %263 = vmatpush1.bf16.msra.mxu0 0
  %264 = vmatprep.mubr.bf16.mxu0 0
  %265 = vmatmul.mubr.bf16.gmra.mrb[0].mxu0 %v136
  %v266 = vpop.f32.mrb[0].mxu0
  %v267 = vadd.f32 0.0, %v266
  %v268 = vpop.f32.mrb[0].mxu0
  %v269 = vadd.f32 0.0, %v268
  %v270 = vpop.f32.mrb[0].mxu0
  %v271 = vadd.f32 0.0, %v270
  %v272 = vpop.f32.mrb[0].mxu0
  %v273 = vadd.f32 0.0, %v272
  %274 = vmatprep.mubr.bf16.mxu0 0
  %275 = vmatmul.mubr.bf16.gmra.mrb[0].mxu0 %v137
  %v276 = vpop.f32.mrb[0].mxu0
  %v277 = vadd.f32 0.0, %v276
  %v278 = vpop.f32.mrb[0].mxu0
  %v279 = vadd.f32 0.0, %v278
  %v280 = vpop.f32.mrb[0].mxu0
  %v281 = vadd.f32 0.0, %v280
  %v282 = vpop.f32.mrb[0].mxu0
  %v283 = vadd.f32 0.0, %v282
  %284 = vmatprep.mubr.bf16.mxu0 0
  %285 = vmatmul.mubr.bf16.gmra.mrb[0].mxu0 %v138
  %v286 = vpop.f32.mrb[0].mxu0
  %v287 = vadd.f32 0.0, %v286
  %v288 = vpop.f32.mrb[0].mxu0
  %v289 = vadd.f32 0.0, %v288
  %v290 = vpop.f32.mrb[0].mxu0
  %v291 = vadd.f32 0.0, %v290
  %v292 = vpop.f32.mrb[0].mxu0
  %v293 = vadd.f32 0.0, %v292
  %294 = vmatprep.mubr.bf16.mxu0 0
  %295 = vmatmul.mubr.bf16.gmra.mrb[0].mxu0 %v139
  %v296 = vpop.f32.mrb[0].mxu0
  %v297 = vadd.f32 0.0, %v296
  %v298 = vpop.f32.mrb[0].mxu0
  %v299 = vadd.f32 0.0, %v298
  %v300 = vpop.f32.mrb[0].mxu0
  %v301 = vadd.f32 0.0, %v300
  %v302 = vpop.f32.mrb[0].mxu0
  %v303 = vadd.f32 0.0, %v302
  %304 = vmatprep.mubr.bf16.mxu0 0
  %305 = vmatmul.mubr.bf16.gmra.mrb[0].mxu0 %v140
  %v306 = vpop.f32.mrb[0].mxu0
  %v307 = vadd.f32 0.0, %v306
  %v308 = vpop.f32.mrb[0].mxu0
  %v309 = vadd.f32 0.0, %v308
  %v310 = vpop.f32.mrb[0].mxu0
  %v311 = vadd.f32 0.0, %v310
  %v312 = vpop.f32.mrb[0].mxu0
  %v313 = vadd.f32 0.0, %v312
  %314 = vmatprep.mubr.bf16.mxu0 0
  %315 = vmatmul.mubr.bf16.gmra.mrb[0].mxu0 %v141
  %v316 = vpop.f32.mrb[0].mxu0
  %v317 = vadd.f32 0.0, %v316
  %v318 = vpop.f32.mrb[0].mxu0
  %v319 = vadd.f32 0.0, %v318
  %v320 = vpop.f32.mrb[0].mxu0
  %v321 = vadd.f32 0.0, %v320
  %v322 = vpop.f32.mrb[0].mxu0
  %v323 = vadd.f32 0.0, %v322
  %324 = vmatprep.mubr.bf16.mxu0 0
  %325 = vmatmul.mubr.bf16.gmra.mrb[0].mxu0 %v142
  %v326 = vpop.f32.mrb[0].mxu0
  %v327 = vadd.f32 0.0, %v326
  %v328 = vpop.f32.mrb[0].mxu0
  %v329 = vadd.f32 0.0, %v328
  %v330 = vpop.f32.mrb[0].mxu0
  %v331 = vadd.f32 0.0, %v330
  %v332 = vpop.f32.mrb[0].mxu0
  %v333 = vadd.f32 0.0, %v332
  %334 = vmatprep.mubr.bf16.mxu0 0
  %335 = vmatmul.mubr.bf16.gmra.mrb[0].mxu0 %v143
  %v336 = vpop.f32.mrb[0].mxu0
  %v337 = vadd.f32 0.0, %v336
  %v338 = vpop.f32.mrb[0].mxu0
  %v339 = vadd.f32 0.0, %v338
  %v340 = vpop.f32.mrb[0].mxu0
  %v341 = vadd.f32 0.0, %v340
  %v342 = vpop.f32.mrb[0].mxu0
  %v343 = vadd.f32 0.0, %v342
  %344 = vdwg.mxu0
  %v345 = vld [vmem:[#allocation2] sm:$0xff]
  %v346 = vld [vmem:[#allocation2 + $0x8] sm:$0xff]
  %v347 = vld [vmem:[#allocation2 + $0x10] sm:$0xff]
  %v348 = vld [vmem:[#allocation2 + $0x18] sm:$0xff]
  %v349 = vld [vmem:[#allocation2 + $0x20] sm:$0xff]
  %v350 = vld [vmem:[#allocation2 + $0x28] sm:$0xff]
  %v351 = vld [vmem:[#allocation2 + $0x30] sm:$0xff]
  %v352 = vld [vmem:[#allocation2 + $0x38] sm:$0xff]
  %v353 = vld [vmem:[#allocation2 + $0x40] sm:$0xff]
  %v354 = vld [vmem:[#allocation2 + $0x48] sm:$0xff]
  %v355 = vld [vmem:[#allocation2 + $0x50] sm:$0xff]
  %v356 = vld [vmem:[#allocation2 + $0x58] sm:$0xff]
  %v357 = vld [vmem:[#allocation2 + $0x60] sm:$0xff]
  %v358 = vld [vmem:[#allocation2 + $0x68] sm:$0xff]
  %v359 = vld [vmem:[#allocation2 + $0x70] sm:$0xff]
  %v360 = vld [vmem:[#allocation2 + $0x78] sm:$0xff]
  %v361 = vld [vmem:[#allocation2 + $0x80] sm:$0xff]
  %v362 = vld [vmem:[#allocation2 + $0x88] sm:$0xff]
  %v363 = vld [vmem:[#allocation2 + $0x90] sm:$0xff]
  %v364 = vld [vmem:[#allocation2 + $0x98] sm:$0xff]
  %v365 = vld [vmem:[#allocation2 + $0xa0] sm:$0xff]
  %v366 = vld [vmem:[#allocation2 + $0xa8] sm:$0xff]
  %v367 = vld [vmem:[#allocation2 + $0xb0] sm:$0xff]
  %v368 = vld [vmem:[#allocation2 + $0xb8] sm:$0xff]
  %v369 = vld [vmem:[#allocation2 + $0xc0] sm:$0xff]
  %v370 = vld [vmem:[#allocation2 + $0xc8] sm:$0xff]
  %v371 = vld [vmem:[#allocation2 + $0xd0] sm:$0xff]
  %v372 = vld [vmem:[#allocation2 + $0xd8] sm:$0xff]
  %v373 = vld [vmem:[#allocation2 + $0xe0] sm:$0xff]
  %v374 = vld [vmem:[#allocation2 + $0xe8] sm:$0xff]
  %v375 = vld [vmem:[#allocation2 + $0xf0] sm:$0xff]
  %v376 = vld [vmem:[#allocation2 + $0xf8] sm:$0xff]
  %v377 = vld [vmem:[%s0] sm:$0xf]
  %v378 = vld [vmem:[%s0 + $0x4] sm:$0xf]
  %v379 = vld [vmem:[%s0 + $0x8] sm:$0xf]
  %v380 = vld [vmem:[%s0 + $0xc] sm:$0xf]
  %v381 = vld [vmem:[%s0 + $0x10] sm:$0xf]
  %v382 = vld [vmem:[%s0 + $0x14] sm:$0xf]
  %v383 = vld [vmem:[%s0 + $0x18] sm:$0xf]
  %v384 = vld [vmem:[%s0 + $0x1c] sm:$0xf]
  %v385 = vld [vmem:[%s0 + $0x20] sm:$0xf]
  %v386 = vld [vmem:[%s0 + $0x24] sm:$0xf]
  %v387 = vld [vmem:[%s0 + $0x28] sm:$0xf]
  %v388 = vld [vmem:[%s0 + $0x2c] sm:$0xf]
  %v389 = vld [vmem:[%s0 + $0x30] sm:$0xf]
  %v390 = vld [vmem:[%s0 + $0x34] sm:$0xf]
  %v391 = vld [vmem:[%s0 + $0x38] sm:$0xf]
  %v392 = vld [vmem:[%s0 + $0x3c] sm:$0xf]
  %v393 = vpack.c.bf16 %v271, %v267
  %v394 = vpack.c.bf16 %v273, %v269
  %v395 = vpack.c.bf16 %v281, %v277
  %v396 = vpack.c.bf16 %v283, %v279
  %v397 = vpack.c.bf16 %v291, %v287
  %v398 = vpack.c.bf16 %v293, %v289
  %v399 = vpack.c.bf16 %v301, %v297
  %v400 = vpack.c.bf16 %v303, %v299
  %v401 = vpack.c.bf16 %v311, %v307
  %v402 = vpack.c.bf16 %v313, %v309
  %v403 = vpack.c.bf16 %v321, %v317
  %v404 = vpack.c.bf16 %v323, %v319
  %v405 = vpack.c.bf16 %v331, %v327
  %v406 = vpack.c.bf16 %v333, %v329
  %v407 = vpack.c.bf16 %v341, %v337
  %v408 = vpack.c.bf16 %v343, %v339
  %v425 = vunpack.c.l.b16 %v377
  %v426 = vunpack.c.l.b16 %v378
  %v427 = vunpack.c.l.b16 %v379
  %v428 = vunpack.c.l.b16 %v380
  %v429 = vunpack.c.l.b16 %v381
  %v430 = vunpack.c.l.b16 %v382
  %v431 = vunpack.c.l.b16 %v383
  %v432 = vunpack.c.l.b16 %v384
  %v433 = vunpack.c.l.b16 %v385
  %v434 = vunpack.c.l.b16 %v386
  %v435 = vunpack.c.l.b16 %v387
  %v436 = vunpack.c.l.b16 %v388
  %v437 = vunpack.c.l.b16 %v389
  %v438 = vunpack.c.l.b16 %v390
  %v439 = vunpack.c.l.b16 %v391
  %v440 = vunpack.c.l.b16 %v392
  %v441 = vpack.c.b16 %v426, %v425
  %v442 = vpack.c.b16 %v428, %v427
  %v443 = vpack.c.b16 %v430, %v429
  %v444 = vpack.c.b16 %v432, %v431
  %v445 = vpack.c.b16 %v434, %v433
  %v446 = vpack.c.b16 %v436, %v435
  %v447 = vpack.c.b16 %v438, %v437
  %v448 = vpack.c.b16 %v440, %v439
  %457 = vmatprep.subr.bf16.mxu0 %v394
  %458 = vmatpush1.bf16.msra.mxu0 %v393
  %459 = vmatprep.subr.bf16.mxu0 %v396
  %460 = vmatpush1.bf16.msra.mxu0 %v395
  %461 = vmatprep.subr.bf16.mxu0 %v398
  %462 = vmatpush1.bf16.msra.mxu0 %v397
  %463 = vmatprep.subr.bf16.mxu0 %v400
  %464 = vmatpush1.bf16.msra.mxu0 %v399
  %465 = vmatprep.subr.bf16.mxu0 %v402
  %466 = vmatpush1.bf16.msra.mxu0 %v401
  %467 = vmatprep.subr.bf16.mxu0 %v404
  %468 = vmatpush1.bf16.msra.mxu0 %v403
  %469 = vmatprep.subr.bf16.mxu0 %v406
  %470 = vmatpush1.bf16.msra.mxu0 %v405
  %471 = vmatprep.subr.bf16.mxu0 %v408
  %472 = vmatpush1.bf16.msra.mxu0 %v407
  %473 = vmatprep.subr.bf16.mxu0 0
  %474 = vmatpush1.bf16.msra.mxu0 0
  %475 = vmatprep.subr.bf16.mxu0 0
  %476 = vmatpush1.bf16.msra.mxu0 0
  %477 = vmatprep.subr.bf16.mxu0 0
  %478 = vmatpush1.bf16.msra.mxu0 0
  %479 = vmatprep.subr.bf16.mxu0 0
  %480 = vmatpush1.bf16.msra.mxu0 0
  %481 = vmatprep.subr.bf16.mxu0 0
  %482 = vmatpush1.bf16.msra.mxu0 0
  %483 = vmatprep.subr.bf16.mxu0 0
  %484 = vmatpush1.bf16.msra.mxu0 0
  %485 = vmatprep.subr.bf16.mxu0 0
  %486 = vmatpush1.bf16.msra.mxu0 0
  %487 = vmatprep.subr.bf16.mxu0 0
  %488 = vmatpush1.bf16.msra.mxu0 0
  %489 = vmatprep.mubr.bf16.mxu0 0
  %490 = vmatmul.mubr.bf16.gmra.mrb[0].mxu0 %v441
  %v491 = vpop.f32.mrb[0].mxu0
  %v492 = vadd.f32 0.0, %v491
  %v493 = vpop.f32.mrb[0].mxu0
  %v494 = vadd.f32 0.0, %v493
  %v495 = vpop.f32.mrb[0].mxu0
  %v496 = vadd.f32 0.0, %v495
  %v497 = vpop.f32.mrb[0].mxu0
  %v498 = vadd.f32 0.0, %v497
  %499 = vmatprep.mubr.bf16.mxu0 0
  %500 = vmatmul.mubr.bf16.gmra.mrb[0].mxu0 %v442
  %v501 = vpop.f32.mrb[0].mxu0
  %v502 = vadd.f32 0.0, %v501
  %v503 = vpop.f32.mrb[0].mxu0
  %v504 = vadd.f32 0.0, %v503
  %v505 = vpop.f32.mrb[0].mxu0
  %v506 = vadd.f32 0.0, %v505
  %v507 = vpop.f32.mrb[0].mxu0
  %v508 = vadd.f32 0.0, %v507
  %509 = vmatprep.mubr.bf16.mxu0 0
  %510 = vmatmul.mubr.bf16.gmra.mrb[0].mxu0 %v443
  %v511 = vpop.f32.mrb[0].mxu0
  %v512 = vadd.f32 0.0, %v511
  %v513 = vpop.f32.mrb[0].mxu0
  %v514 = vadd.f32 0.0, %v513
  %v515 = vpop.f32.mrb[0].mxu0
  %v516 = vadd.f32 0.0, %v515
  %v517 = vpop.f32.mrb[0].mxu0
  %v518 = vadd.f32 0.0, %v517
  %519 = vmatprep.mubr.bf16.mxu0 0
  %520 = vmatmul.mubr.bf16.gmra.mrb[0].mxu0 %v444
  %v521 = vpop.f32.mrb[0].mxu0
  %v522 = vadd.f32 0.0, %v521
  %v523 = vpop.f32.mrb[0].mxu0
  %v524 = vadd.f32 0.0, %v523
  %v525 = vpop.f32.mrb[0].mxu0
  %v526 = vadd.f32 0.0, %v525
  %v527 = vpop.f32.mrb[0].mxu0
  %v528 = vadd.f32 0.0, %v527
  %529 = vmatprep.mubr.bf16.mxu0 0
  %530 = vmatmul.mubr.bf16.gmra.mrb[0].mxu0 %v445
  %v531 = vpop.f32.mrb[0].mxu0
  %v532 = vadd.f32 0.0, %v531
  %v533 = vpop.f32.mrb[0].mxu0
  %v534 = vadd.f32 0.0, %v533
  %v535 = vpop.f32.mrb[0].mxu0
  %v536 = vadd.f32 0.0, %v535
  %v537 = vpop.f32.mrb[0].mxu0
  %v538 = vadd.f32 0.0, %v537
  %539 = vmatprep.mubr.bf16.mxu0 0
  %540 = vmatmul.mubr.bf16.gmra.mrb[0].mxu0 %v446
  %v541 = vpop.f32.mrb[0].mxu0
  %v542 = vadd.f32 0.0, %v541
  %v543 = vpop.f32.mrb[0].mxu0
  %v544 = vadd.f32 0.0, %v543
  %v545 = vpop.f32.mrb[0].mxu0
  %v546 = vadd.f32 0.0, %v545
  %v547 = vpop.f32.mrb[0].mxu0
  %v548 = vadd.f32 0.0, %v547
  %549 = vmatprep.mubr.bf16.mxu0 0
  %550 = vmatmul.mubr.bf16.gmra.mrb[0].mxu0 %v447
  %v551 = vpop.f32.mrb[0].mxu0
  %v552 = vadd.f32 0.0, %v551
  %v553 = vpop.f32.mrb[0].mxu0
  %v554 = vadd.f32 0.0, %v553
  %v555 = vpop.f32.mrb[0].mxu0
  %v556 = vadd.f32 0.0, %v555
  %v557 = vpop.f32.mrb[0].mxu0
  %v558 = vadd.f32 0.0, %v557
  %559 = vmatprep.mubr.bf16.mxu0 0
  %560 = vmatmul.mubr.bf16.gmra.mrb[0].mxu0 %v448
  %v561 = vpop.f32.mrb[0].mxu0
  %v562 = vadd.f32 0.0, %v561
  %v563 = vpop.f32.mrb[0].mxu0
  %v564 = vadd.f32 0.0, %v563
  %v565 = vpop.f32.mrb[0].mxu0
  %v566 = vadd.f32 0.0, %v565
  %v567 = vpop.f32.mrb[0].mxu0
  %v568 = vadd.f32 0.0, %v567
  %569 = vdwg.mxu0
  %v570 = vadd.f32 %v345, %v492
  %v571 = vadd.f32 %v346, %v494
  %v572 = vadd.f32 %v347, %v496
  %v573 = vadd.f32 %v348, %v498
  %v574 = vadd.f32 %v349, %v502
  %v575 = vadd.f32 %v350, %v504
  %v576 = vadd.f32 %v351, %v506
  %v577 = vadd.f32 %v352, %v508
  %v578 = vadd.f32 %v353, %v512
  %v579 = vadd.f32 %v354, %v514
  %v580 = vadd.f32 %v355, %v516
  %v581 = vadd.f32 %v356, %v518
  %v582 = vadd.f32 %v357, %v522
  %v583 = vadd.f32 %v358, %v524
  %v584 = vadd.f32 %v359, %v526
  %v585 = vadd.f32 %v360, %v528
  %v586 = vadd.f32 %v361, %v532
  %v587 = vadd.f32 %v362, %v534
  %v588 = vadd.f32 %v363, %v536
  %v589 = vadd.f32 %v364, %v538
  %v590 = vadd.f32 %v365, %v542
  %v591 = vadd.f32 %v366, %v544
  %v592 = vadd.f32 %v367, %v546
  %v593 = vadd.f32 %v368, %v548
  %v594 = vadd.f32 %v369, %v552
  %v595 = vadd.f32 %v370, %v554
  %v596 = vadd.f32 %v371, %v556
  %v597 = vadd.f32 %v372, %v558
  %v598 = vadd.f32 %v373, %v562
  %v599 = vadd.f32 %v374, %v564
  %v600 = vadd.f32 %v375, %v566
  %v601 = vadd.f32 %v376, %v568
  %602 = vst [vmem:[#allocation2] sm:$0xff] %v570
  %603 = vst [vmem:[#allocation2 + $0x8] sm:$0xff] %v571
  %604 = vst [vmem:[#allocation2 + $0x10] sm:$0xff] %v572
  %605 = vst [vmem:[#allocation2 + $0x18] sm:$0xff] %v573
  %606 = vst [vmem:[#allocation2 + $0x20] sm:$0xff] %v574
  %607 = vst [vmem:[#allocation2 + $0x28] sm:$0xff] %v575
  %608 = vst [vmem:[#allocation2 + $0x30] sm:$0xff] %v576
  %609 = vst [vmem:[#allocation2 + $0x38] sm:$0xff] %v577
  %610 = vst [vmem:[#allocation2 + $0x40] sm:$0xff] %v578
  %611 = vst [vmem:[#allocation2 + $0x48] sm:$0xff] %v579
  %612 = vst [vmem:[#allocation2 + $0x50] sm:$0xff] %v580
  %613 = vst [vmem:[#allocation2 + $0x58] sm:$0xff] %v581
  %614 = vst [vmem:[#allocation2 + $0x60] sm:$0xff] %v582
  %615 = vst [vmem:[#allocation2 + $0x68] sm:$0xff] %v583
  %616 = vst [vmem:[#allocation2 + $0x70] sm:$0xff] %v584
  %617 = vst [vmem:[#allocation2 + $0x78] sm:$0xff] %v585
  %618 = vst [vmem:[#allocation2 + $0x80] sm:$0xff] %v586
  %619 = vst [vmem:[#allocation2 + $0x88] sm:$0xff] %v587
  %620 = vst [vmem:[#allocation2 + $0x90] sm:$0xff] %v588
  %621 = vst [vmem:[#allocation2 + $0x98] sm:$0xff] %v589
  %622 = vst [vmem:[#allocation2 + $0xa0] sm:$0xff] %v590
  %623 = vst [vmem:[#allocation2 + $0xa8] sm:$0xff] %v591
  %624 = vst [vmem:[#allocation2 + $0xb0] sm:$0xff] %v592
  %625 = vst [vmem:[#allocation2 + $0xb8] sm:$0xff] %v593
  %626 = vst [vmem:[#allocation2 + $0xc0] sm:$0xff] %v594
  %627 = vst [vmem:[#allocation2 + $0xc8] sm:$0xff] %v595
  %628 = vst [vmem:[#allocation2 + $0xd0] sm:$0xff] %v596
  %629 = vst [vmem:[#allocation2 + $0xd8] sm:$0xff] %v597
  %630 = vst [vmem:[#allocation2 + $0xe0] sm:$0xff] %v598
  %631 = vst [vmem:[#allocation2 + $0xe8] sm:$0xff] %v599
  %632 = vst [vmem:[#allocation2 + $0xf0] sm:$0xff] %v600
  %633 = vst [vmem:[#allocation2 + $0xf8] sm:$0xff] %v601
  // Predicated region
  $region46: #{net10_forward.3} parent=0 // pred_check
    %p634 = pneg %p36
  $region47: #{net10_forward.3} parent=0 // pred_check_branch
    %636 = sbr.rel (%p634) target = $region49
  $region48: #{net10_forward.3} parent=0 // pred_region
    %v637 = vld [vmem:[#allocation2] sm:$0xff]
    %v638 = vld [vmem:[#allocation2 + $0x8] sm:$0xff]
    %v639 = vld [vmem:[#allocation2 + $0x10] sm:$0xff]
    %v640 = vld [vmem:[#allocation2 + $0x18] sm:$0xff]
    %v641 = vld [vmem:[#allocation2 + $0x20] sm:$0xff]
    %v642 = vld [vmem:[#allocation2 + $0x28] sm:$0xff]
    %v643 = vld [vmem:[#allocation2 + $0x30] sm:$0xff]
    %v644 = vld [vmem:[#allocation2 + $0x38] sm:$0xff]
    %v645 = vld [vmem:[#allocation2 + $0x40] sm:$0xff]
    %v646 = vld [vmem:[#allocation2 + $0x48] sm:$0xff]
    %v647 = vld [vmem:[#allocation2 + $0x50] sm:$0xff]
    %v648 = vld [vmem:[#allocation2 + $0x58] sm:$0xff]
    %v649 = vld [vmem:[#allocation2 + $0x60] sm:$0xff]
    %v650 = vld [vmem:[#allocation2 + $0x68] sm:$0xff]
    %v651 = vld [vmem:[#allocation2 + $0x70] sm:$0xff]
    %v652 = vld [vmem:[#allocation2 + $0x78] sm:$0xff]
    %v653 = vld [vmem:[#allocation2 + $0x80] sm:$0xff]
    %v654 = vld [vmem:[#allocation2 + $0x88] sm:$0xff]
    %v655 = vld [vmem:[#allocation2 + $0x90] sm:$0xff]
    %v656 = vld [vmem:[#allocation2 + $0x98] sm:$0xff]
    %v657 = vld [vmem:[#allocation2 + $0xa0] sm:$0xff]
    %v658 = vld [vmem:[#allocation2 + $0xa8] sm:$0xff]
    %v659 = vld [vmem:[#allocation2 + $0xb0] sm:$0xff]
    %v660 = vld [vmem:[#allocation2 + $0xb8] sm:$0xff]
    %v661 = vld [vmem:[#allocation2 + $0xc0] sm:$0xff]
    %v662 = vld [vmem:[#allocation2 + $0xc8] sm:$0xff]
    %v663 = vld [vmem:[#allocation2 + $0xd0] sm:$0xff]
    %v664 = vld [vmem:[#allocation2 + $0xd8] sm:$0xff]
    %v665 = vld [vmem:[#allocation2 + $0xe0] sm:$0xff]
    %v666 = vld [vmem:[#allocation2 + $0xe8] sm:$0xff]
    %v667 = vld [vmem:[#allocation2 + $0xf0] sm:$0xff]
    %v668 = vld [vmem:[#allocation2 + $0xf8] sm:$0xff]
    %v669 = vld [vmem:[%s3] sm:$0x3]
    %v671 = vlaneseq
    %v672 = vshrl.u32 %v671, 7
    %v673 = vsub.s32 0, %v672
    %v674 = vrot.slane %v669, %v673
    %v675 = vlaneseq
    %v676 = vshrl.u32 %v675, 7
    %v677 = vsub.s32 1, %v676
    %v678 = vrot.slane %v669, %v677
    %v681 = vadd.f32 %v637, %v674
    %v682 = vadd.f32 %v638, %v678
    %v683 = vadd.f32 %v639, %v674
    %v684 = vadd.f32 %v640, %v678
    %v685 = vadd.f32 %v641, %v674
    %v686 = vadd.f32 %v642, %v678
    %v687 = vadd.f32 %v643, %v674
    %v688 = vadd.f32 %v644, %v678
    %v689 = vadd.f32 %v645, %v674
    %v690 = vadd.f32 %v646, %v678
    %v691 = vadd.f32 %v647, %v674
    %v692 = vadd.f32 %v648, %v678
    %v693 = vadd.f32 %v649, %v674
    %v694 = vadd.f32 %v650, %v678
    %v695 = vadd.f32 %v651, %v674
    %v696 = vadd.f32 %v652, %v678
    %v697 = vadd.f32 %v653, %v674
    %v698 = vadd.f32 %v654, %v678
    %v699 = vadd.f32 %v655, %v674
    %v700 = vadd.f32 %v656, %v678
    %v701 = vadd.f32 %v657, %v674
    %v702 = vadd.f32 %v658, %v678
    %v703 = vadd.f32 %v659, %v674
    %v704 = vadd.f32 %v660, %v678
    %v705 = vadd.f32 %v661, %v674
    %v706 = vadd.f32 %v662, %v678
    %v707 = vadd.f32 %v663, %v674
    %v708 = vadd.f32 %v664, %v678
    %v709 = vadd.f32 %v665, %v674
    %v710 = vadd.f32 %v666, %v678
    %v711 = vadd.f32 %v667, %v674
    %v712 = vadd.f32 %v668, %v678
    %v713 = vld [vmem:[%s4] sm:$0x3]
    %714 = vmatprep.subr.mxu0 %v682
    %715 = vmatpush1.msra.mxu0 %v681
    %716 = vmatprep.subr.mxu0 %v684
    %717 = vmatpush1.msra.mxu0 %v683
    %718 = vmatprep.subr.mxu0 %v686
    %719 = vmatpush1.msra.mxu0 %v685
    %720 = vmatprep.subr.mxu0 %v688
    %721 = vmatpush1.msra.mxu0 %v687
    %722 = vmatprep.subr.mxu0 %v690
    %723 = vmatpush1.msra.mxu0 %v689
    %724 = vmatprep.subr.mxu0 %v692
    %725 = vmatpush1.msra.mxu0 %v691
    %726 = vmatprep.subr.mxu0 %v694
    %727 = vmatpush1.msra.mxu0 %v693
    %728 = vmatprep.subr.mxu0 %v696
    %729 = vmatpush1.msra.mxu0 %v695
    %730 = vmatprep.subr.mxu0 %v698
    %731 = vmatpush1.msra.mxu0 %v697
    %732 = vmatprep.subr.mxu0 %v700
    %733 = vmatpush1.msra.mxu0 %v699
    %734 = vmatprep.subr.mxu0 %v702
    %735 = vmatpush1.msra.mxu0 %v701
    %736 = vmatprep.subr.mxu0 %v704
    %737 = vmatpush1.msra.mxu0 %v703
    %738 = vmatprep.subr.mxu0 %v706
    %739 = vmatpush1.msra.mxu0 %v705
    %740 = vmatprep.subr.mxu0 %v708
    %741 = vmatpush1.msra.mxu0 %v707
    %742 = vmatprep.subr.mxu0 %v710
    %743 = vmatpush1.msra.mxu0 %v709
    %744 = vmatprep.subr.mxu0 %v712
    %745 = vmatpush1.msra.mxu0 %v711
    %746 = vmatprep.subr.mxu0 0.0
    %747 = vmatpush1.msra.mxu0 0.0
    %748 = vmatprep.subr.mxu0 0.0
    %749 = vmatpush1.msra.mxu0 0.0
    %750 = vmatprep.subr.mxu0 0.0
    %751 = vmatpush1.msra.mxu0 0.0
    %752 = vmatprep.subr.mxu0 0.0
    %753 = vmatpush1.msra.mxu0 0.0
    %754 = vmatprep.subr.mxu0 0.0
    %755 = vmatpush1.msra.mxu0 0.0
    %756 = vmatprep.subr.mxu0 0.0
    %757 = vmatpush1.msra.mxu0 0.0
    %758 = vmatprep.subr.mxu0 0.0
    %759 = vmatpush1.msra.mxu0 0.0
    %760 = vmatprep.subr.mxu0 0.0
    %761 = vmatpush1.msra.mxu0 0.0
    %762 = vmatprep.subr.mxu0 0.0
    %763 = vmatpush1.msra.mxu0 0.0
    %764 = vmatprep.subr.mxu0 0.0
    %765 = vmatpush1.msra.mxu0 0.0
    %766 = vmatprep.subr.mxu0 0.0
    %767 = vmatpush1.msra.mxu0 0.0
    %768 = vmatprep.subr.mxu0 0.0
    %769 = vmatpush1.msra.mxu0 0.0
    %770 = vmatprep.subr.mxu0 0.0
    %771 = vmatpush1.msra.mxu0 0.0
    %772 = vmatprep.subr.mxu0 0.0
    %773 = vmatpush1.msra.mxu0 0.0
    %774 = vmatprep.subr.mxu0 0.0
    %775 = vmatpush1.msra.mxu0 0.0
    %776 = vmatprep.subr.mxu0 0.0
    %777 = vmatpush1.msra.mxu0 0.0
    %778 = vmatprep.mubr.f32.mxu0 0.0
    %779 = vmatmul.mubr.f32.gmra.mrb[0].mxu0 %v713
    %v780 = vpop.f32.mrb[0].mxu0
    %v781 = vadd.f32 0.0, %v780
    %v782 = vpop.f32.mrb[0].mxu0
    %v783 = vadd.f32 0.0, %v782
    %784 = vdwg.mxu0
    %v785 = vld [vmem:[%s5] sm:$0xff]
    %v786 = vld [vmem:[%s5 + $0x8] sm:$0xff]
    %v787 = vld [vmem:[%s5 + $0x10] sm:$0xff]
    %v788 = vld [vmem:[%s5 + $0x18] sm:$0xff]
    %v789 = vld [vmem:[%s5 + $0x20] sm:$0xff]
    %v790 = vld [vmem:[%s5 + $0x28] sm:$0xff]
    %v791 = vld [vmem:[%s5 + $0x30] sm:$0xff]
    %v792 = vld [vmem:[%s5 + $0x38] sm:$0xff]
    %v793 = vld [vmem:[%s5 + $0x40] sm:$0xff]
    %v794 = vld [vmem:[%s5 + $0x48] sm:$0xff]
    %v795 = vld [vmem:[%s5 + $0x50] sm:$0xff]
    %v796 = vld [vmem:[%s5 + $0x58] sm:$0xff]
    %v797 = vld [vmem:[%s5 + $0x60] sm:$0xff]
    %v798 = vld [vmem:[%s5 + $0x68] sm:$0xff]
    %v799 = vld [vmem:[%s5 + $0x70] sm:$0xff]
    %v800 = vld [vmem:[%s5 + $0x78] sm:$0xff]
    %vm801 = vcmask 15360
    %v803 = vsel %vm801, %v785, 0
    %v806 = vsel %vm801, %v786, 0
    %v809 = vsel %vm801, %v787, 0
    %v812 = vsel %vm801, %v788, 0
    %v815 = vsel %vm801, %v789, 0
    %v818 = vsel %vm801, %v790, 0
    %v821 = vsel %vm801, %v791, 0
    %v824 = vsel %vm801, %v792, 0
    %v827 = vsel %vm801, %v793, 0
    %v830 = vsel %vm801, %v794, 0
    %v833 = vsel %vm801, %v795, 0
    %v836 = vsel %vm801, %v796, 0
    %v839 = vsel %vm801, %v797, 0
    %v842 = vsel %vm801, %v798, 0
    %v845 = vsel %vm801, %v799, 0
    %v848 = vsel %vm801, %v800, 0
    %vm850 = vcmask 1041408
    %v852 = vsel %vm850, %v781, 0
    %v855 = vsel %vm850, %v783, 0
    %857 = vmatprep.subr.mxu0 %v855
    %858 = vmatpush1.msra.mxu0 %v852
    %859 = vmatprep.subr.mxu0 0.0
    %860 = vmatpush1.msra.mxu0 0.0
    %861 = vmatprep.subr.mxu0 0.0
    %862 = vmatpush1.msra.mxu0 0.0
    %863 = vmatprep.subr.mxu0 0.0
    %864 = vmatpush1.msra.mxu0 0.0
    %865 = vmatprep.subr.mxu0 0.0
    %866 = vmatpush1.msra.mxu0 0.0
    %867 = vmatprep.subr.mxu0 0.0
    %868 = vmatpush1.msra.mxu0 0.0
    %869 = vmatprep.subr.mxu0 0.0
    %870 = vmatpush1.msra.mxu0 0.0
    %871 = vmatprep.subr.mxu0 0.0
    %872 = vmatpush1.msra.mxu0 0.0
    %873 = vmatprep.subr.mxu0 0.0
    %874 = vmatpush1.msra.mxu0 0.0
    %875 = vmatprep.subr.mxu0 0.0
    %876 = vmatpush1.msra.mxu0 0.0
    %877 = vmatprep.subr.mxu0 0.0
    %878 = vmatpush1.msra.mxu0 0.0
    %879 = vmatprep.subr.mxu0 0.0
    %880 = vmatpush1.msra.mxu0 0.0
    %881 = vmatprep.subr.mxu0 0.0
    %882 = vmatpush1.msra.mxu0 0.0
    %883 = vmatprep.subr.mxu0 0.0
    %884 = vmatpush1.msra.mxu0 0.0
    %885 = vmatprep.subr.mxu0 0.0
    %886 = vmatpush1.msra.mxu0 0.0
    %887 = vmatprep.subr.mxu0 0.0
    %888 = vmatpush1.msra.mxu0 0.0
    %889 = vmatprep.subr.mxu0 0.0
    %890 = vmatpush1.msra.mxu0 0.0
    %891 = vmatprep.subr.mxu0 0.0
    %892 = vmatpush1.msra.mxu0 0.0
    %893 = vmatprep.subr.mxu0 0.0
    %894 = vmatpush1.msra.mxu0 0.0
    %895 = vmatprep.subr.mxu0 0.0
    %896 = vmatpush1.msra.mxu0 0.0
    %897 = vmatprep.subr.mxu0 0.0
    %898 = vmatpush1.msra.mxu0 0.0
    %899 = vmatprep.subr.mxu0 0.0
    %900 = vmatpush1.msra.mxu0 0.0
    %901 = vmatprep.subr.mxu0 0.0
    %902 = vmatpush1.msra.mxu0 0.0
    %903 = vmatprep.subr.mxu0 0.0
    %904 = vmatpush1.msra.mxu0 0.0
    %905 = vmatprep.subr.mxu0 0.0
    %906 = vmatpush1.msra.mxu0 0.0
    %907 = vmatprep.subr.mxu0 0.0
    %908 = vmatpush1.msra.mxu0 0.0
    %909 = vmatprep.subr.mxu0 0.0
    %910 = vmatpush1.msra.mxu0 0.0
    %911 = vmatprep.subr.mxu0 0.0
    %912 = vmatpush1.msra.mxu0 0.0
    %913 = vmatprep.subr.mxu0 0.0
    %914 = vmatpush1.msra.mxu0 0.0
    %915 = vmatprep.subr.mxu0 0.0
    %916 = vmatpush1.msra.mxu0 0.0
    %917 = vmatprep.subr.mxu0 0.0
    %918 = vmatpush1.msra.mxu0 0.0
    %919 = vmatprep.subr.mxu0 0.0
    %920 = vmatpush1.msra.mxu0 0.0
    %921 = vmatprep.mubr.f32.mxu0 0.0
    %922 = vmatmul.mubr.f32.gmra.mrb[0].mxu0 %v803
    %v923 = vpop.f32.mrb[0].mxu0
    %v924 = vadd.f32 0.0, %v923
    %v925 = vpop.f32.mrb[0].mxu0
    %v926 = vadd.f32 0.0, %v925
    %927 = vmatprep.mubr.f32.mxu0 0.0
    %928 = vmatmul.mubr.f32.gmra.mrb[0].mxu0 %v806
    %v929 = vpop.f32.mrb[0].mxu0
    %v930 = vadd.f32 0.0, %v929
    %v931 = vpop.f32.mrb[0].mxu0
    %v932 = vadd.f32 0.0, %v931
    %933 = vmatprep.mubr.f32.mxu0 0.0
    %934 = vmatmul.mubr.f32.gmra.mrb[0].mxu0 %v809
    %v935 = vpop.f32.mrb[0].mxu0
    %v936 = vadd.f32 0.0, %v935
    %v937 = vpop.f32.mrb[0].mxu0
    %v938 = vadd.f32 0.0, %v937
    %939 = vmatprep.mubr.f32.mxu0 0.0
    %940 = vmatmul.mubr.f32.gmra.mrb[0].mxu0 %v812
    %v941 = vpop.f32.mrb[0].mxu0
    %v942 = vadd.f32 0.0, %v941
    %v943 = vpop.f32.mrb[0].mxu0
    %v944 = vadd.f32 0.0, %v943
    %945 = vmatprep.mubr.f32.mxu0 0.0
    %946 = vmatmul.mubr.f32.gmra.mrb[0].mxu0 %v815
    %v947 = vpop.f32.mrb[0].mxu0
    %v948 = vadd.f32 0.0, %v947
    %v949 = vpop.f32.mrb[0].mxu0
    %v950 = vadd.f32 0.0, %v949
    %951 = vmatprep.mubr.f32.mxu0 0.0
    %952 = vmatmul.mubr.f32.gmra.mrb[0].mxu0 %v818
    %v953 = vpop.f32.mrb[0].mxu0
    %v954 = vadd.f32 0.0, %v953
    %v955 = vpop.f32.mrb[0].mxu0
    %v956 = vadd.f32 0.0, %v955
    %957 = vmatprep.mubr.f32.mxu0 0.0
    %958 = vmatmul.mubr.f32.gmra.mrb[0].mxu0 %v821
    %v959 = vpop.f32.mrb[0].mxu0
    %v960 = vadd.f32 0.0, %v959
    %v961 = vpop.f32.mrb[0].mxu0
    %v962 = vadd.f32 0.0, %v961
    %963 = vmatprep.mubr.f32.mxu0 0.0
    %964 = vmatmul.mubr.f32.gmra.mrb[0].mxu0 %v824
    %v965 = vpop.f32.mrb[0].mxu0
    %v966 = vadd.f32 0.0, %v965
    %v967 = vpop.f32.mrb[0].mxu0
    %v968 = vadd.f32 0.0, %v967
    %969 = vmatprep.mubr.f32.mxu0 0.0
    %970 = vmatmul.mubr.f32.gmra.mrb[0].mxu0 %v827
    %v971 = vpop.f32.mrb[0].mxu0
    %v972 = vadd.f32 0.0, %v971
    %v973 = vpop.f32.mrb[0].mxu0
    %v974 = vadd.f32 0.0, %v973
    %975 = vmatprep.mubr.f32.mxu0 0.0
    %976 = vmatmul.mubr.f32.gmra.mrb[0].mxu0 %v830
    %v977 = vpop.f32.mrb[0].mxu0
    %v978 = vadd.f32 0.0, %v977
    %v979 = vpop.f32.mrb[0].mxu0
    %v980 = vadd.f32 0.0, %v979
    %981 = vmatprep.mubr.f32.mxu0 0.0
    %982 = vmatmul.mubr.f32.gmra.mrb[0].mxu0 %v833
    %v983 = vpop.f32.mrb[0].mxu0
    %v984 = vadd.f32 0.0, %v983
    %v985 = vpop.f32.mrb[0].mxu0
    %v986 = vadd.f32 0.0, %v985
    %987 = vmatprep.mubr.f32.mxu0 0.0
    %988 = vmatmul.mubr.f32.gmra.mrb[0].mxu0 %v836
    %v989 = vpop.f32.mrb[0].mxu0
    %v990 = vadd.f32 0.0, %v989
    %v991 = vpop.f32.mrb[0].mxu0
    %v992 = vadd.f32 0.0, %v991
    %993 = vmatprep.mubr.f32.mxu0 0.0
    %994 = vmatmul.mubr.f32.gmra.mrb[0].mxu0 %v839
    %v995 = vpop.f32.mrb[0].mxu0
    %v996 = vadd.f32 0.0, %v995
    %v997 = vpop.f32.mrb[0].mxu0
    %v998 = vadd.f32 0.0, %v997
    %999 = vmatprep.mubr.f32.mxu0 0.0
    %1000 = vmatmul.mubr.f32.gmra.mrb[0].mxu0 %v842
    %v1001 = vpop.f32.mrb[0].mxu0
    %v1002 = vadd.f32 0.0, %v1001
    %v1003 = vpop.f32.mrb[0].mxu0
    %v1004 = vadd.f32 0.0, %v1003
    %1005 = vmatprep.mubr.f32.mxu0 0.0
    %1006 = vmatmul.mubr.f32.gmra.mrb[0].mxu0 %v845
    %v1007 = vpop.f32.mrb[0].mxu0
    %v1008 = vadd.f32 0.0, %v1007
    %v1009 = vpop.f32.mrb[0].mxu0
    %v1010 = vadd.f32 0.0, %v1009
    %1011 = vmatprep.mubr.f32.mxu0 0.0
    %1012 = vmatmul.mubr.f32.gmra.mrb[0].mxu0 %v848
    %v1013 = vpop.f32.mrb[0].mxu0
    %v1014 = vadd.f32 0.0, %v1013
    %v1015 = vpop.f32.mrb[0].mxu0
    %v1016 = vadd.f32 0.0, %v1015
    %1017 = vdwg.mxu0
    %v1018 = vld [vmem:[%s8] sm:$0x3]
    %v1020 = vlaneseq
    %v1021 = vshrl.u32 %v1020, 7
    %v1022 = vsub.s32 0, %v1021
    %v1023 = vrot.slane %v1018, %v1022
    %v1024 = vlaneseq
    %v1025 = vshrl.u32 %v1024, 7
    %v1026 = vsub.s32 1, %v1025
    %v1027 = vrot.slane %v1018, %v1026
    %v1030 = vmul.f32 %v1023, %v924
    %v1031 = vmul.f32 %v1027, %v926
    %v1032 = vmul.f32 %v1023, %v930
    %v1033 = vmul.f32 %v1027, %v932
    %v1034 = vmul.f32 %v1023, %v936
    %v1035 = vmul.f32 %v1027, %v938
    %v1036 = vmul.f32 %v1023, %v942
    %v1037 = vmul.f32 %v1027, %v944
    %v1038 = vmul.f32 %v1023, %v948
    %v1039 = vmul.f32 %v1027, %v950
    %v1040 = vmul.f32 %v1023, %v954
    %v1041 = vmul.f32 %v1027, %v956
    %v1042 = vmul.f32 %v1023, %v960
    %v1043 = vmul.f32 %v1027, %v962
    %v1044 = vmul.f32 %v1023, %v966
    %v1045 = vmul.f32 %v1027, %v968
    %v1046 = vmul.f32 %v1023, %v972
    %v1047 = vmul.f32 %v1027, %v974
    %v1048 = vmul.f32 %v1023, %v978
    %v1049 = vmul.f32 %v1027, %v980
    %v1050 = vmul.f32 %v1023, %v984
    %v1051 = vmul.f32 %v1027, %v986
    %v1052 = vmul.f32 %v1023, %v990
    %v1053 = vmul.f32 %v1027, %v992
    %v1054 = vmul.f32 %v1023, %v996
    %v1055 = vmul.f32 %v1027, %v998
    %v1056 = vmul.f32 %v1023, %v1002
    %v1057 = vmul.f32 %v1027, %v1004
    %v1058 = vmul.f32 %v1023, %v1008
    %v1059 = vmul.f32 %v1027, %v1010
    %v1060 = vmul.f32 %v1023, %v1014
    %v1061 = vmul.f32 %v1027, %v1016
    %v1062 = vsub.f32 %v681, %v1030
    %v1063 = vsub.f32 %v682, %v1031
    %v1064 = vsub.f32 %v683, %v1032
    %v1065 = vsub.f32 %v684, %v1033
    %v1066 = vsub.f32 %v685, %v1034
    %v1067 = vsub.f32 %v686, %v1035
    %v1068 = vsub.f32 %v687, %v1036
    %v1069 = vsub.f32 %v688, %v1037
    %v1070 = vsub.f32 %v689, %v1038
    %v1071 = vsub.f32 %v690, %v1039
    %v1072 = vsub.f32 %v691, %v1040
    %v1073 = vsub.f32 %v692, %v1041
    %v1074 = vsub.f32 %v693, %v1042
    %v1075 = vsub.f32 %v694, %v1043
    %v1076 = vsub.f32 %v695, %v1044
    %v1077 = vsub.f32 %v696, %v1045
    %v1078 = vsub.f32 %v697, %v1046
    %v1079 = vsub.f32 %v698, %v1047
    %v1080 = vsub.f32 %v699, %v1048
    %v1081 = vsub.f32 %v700, %v1049
    %v1082 = vsub.f32 %v701, %v1050
    %v1083 = vsub.f32 %v702, %v1051
    %v1084 = vsub.f32 %v703, %v1052
    %v1085 = vsub.f32 %v704, %v1053
    %v1086 = vsub.f32 %v705, %v1054
    %v1087 = vsub.f32 %v706, %v1055
    %v1088 = vsub.f32 %v707, %v1056
    %v1089 = vsub.f32 %v708, %v1057
    %v1090 = vsub.f32 %v709, %v1058
    %v1091 = vsub.f32 %v710, %v1059
    %v1092 = vsub.f32 %v711, %v1060
    %v1093 = vsub.f32 %v712, %v1061
    %v1094 = vmul.f32 %v1062, %v1062
    %v1095 = vmul.f32 %v1063, %v1063
    %v1096 = vmul.f32 %v1064, %v1064
    %v1097 = vmul.f32 %v1065, %v1065
    %v1098 = vmul.f32 %v1066, %v1066
    %v1099 = vmul.f32 %v1067, %v1067
    %v1100 = vmul.f32 %v1068, %v1068
    %v1101 = vmul.f32 %v1069, %v1069
    %v1102 = vmul.f32 %v1070, %v1070
    %v1103 = vmul.f32 %v1071, %v1071
    %v1104 = vmul.f32 %v1072, %v1072
    %v1105 = vmul.f32 %v1073, %v1073
    %v1106 = vmul.f32 %v1074, %v1074
    %v1107 = vmul.f32 %v1075, %v1075
    %v1108 = vmul.f32 %v1076, %v1076
    %v1109 = vmul.f32 %v1077, %v1077
    %v1110 = vmul.f32 %v1078, %v1078
    %v1111 = vmul.f32 %v1079, %v1079
    %v1112 = vmul.f32 %v1080, %v1080
    %v1113 = vmul.f32 %v1081, %v1081
    %v1114 = vmul.f32 %v1082, %v1082
    %v1115 = vmul.f32 %v1083, %v1083
    %v1116 = vmul.f32 %v1084, %v1084
    %v1117 = vmul.f32 %v1085, %v1085
    %v1118 = vmul.f32 %v1086, %v1086
    %v1119 = vmul.f32 %v1087, %v1087
    %v1120 = vmul.f32 %v1088, %v1088
    %v1121 = vmul.f32 %v1089, %v1089
    %v1122 = vmul.f32 %v1090, %v1090
    %v1123 = vmul.f32 %v1091, %v1091
    %v1124 = vmul.f32 %v1092, %v1092
    %v1125 = vmul.f32 %v1093, %v1093
    %1126 = vmatprep.subr.mxu0 %v1095
    %1127 = vmatpush1.msra.mxu0 %v1094
    %1128 = vmatprep.subr.mxu0 %v1097
    %1129 = vmatpush1.msra.mxu0 %v1096
    %1130 = vmatprep.subr.mxu0 %v1099
    %1131 = vmatpush1.msra.mxu0 %v1098
    %1132 = vmatprep.subr.mxu0 %v1101
    %1133 = vmatpush1.msra.mxu0 %v1100
    %1134 = vmatprep.subr.mxu0 %v1103
    %1135 = vmatpush1.msra.mxu0 %v1102
    %1136 = vmatprep.subr.mxu0 %v1105
    %1137 = vmatpush1.msra.mxu0 %v1104
    %1138 = vmatprep.subr.mxu0 %v1107
    %1139 = vmatpush1.msra.mxu0 %v1106
    %1140 = vmatprep.subr.mxu0 %v1109
    %1141 = vmatpush1.msra.mxu0 %v1108
    %1142 = vmatprep.subr.mxu0 %v1111
    %1143 = vmatpush1.msra.mxu0 %v1110
    %1144 = vmatprep.subr.mxu0 %v1113
    %1145 = vmatpush1.msra.mxu0 %v1112
    %1146 = vmatprep.subr.mxu0 %v1115
    %1147 = vmatpush1.msra.mxu0 %v1114
    %1148 = vmatprep.subr.mxu0 %v1117
    %1149 = vmatpush1.msra.mxu0 %v1116
    %1150 = vmatprep.subr.mxu0 %v1119
    %1151 = vmatpush1.msra.mxu0 %v1118
    %1152 = vmatprep.subr.mxu0 %v1121
    %1153 = vmatpush1.msra.mxu0 %v1120
    %1154 = vmatprep.subr.mxu0 %v1123
    %1155 = vmatpush1.msra.mxu0 %v1122
    %1156 = vmatprep.subr.mxu0 %v1125
    %1157 = vmatpush1.msra.mxu0 %v1124
    %1158 = vmatprep.subr.mxu0 0.0
    %1159 = vmatpush1.msra.mxu0 0.0
    %1160 = vmatprep.subr.mxu0 0.0
    %1161 = vmatpush1.msra.mxu0 0.0
    %1162 = vmatprep.subr.mxu0 0.0
    %1163 = vmatpush1.msra.mxu0 0.0
    %1164 = vmatprep.subr.mxu0 0.0
    %1165 = vmatpush1.msra.mxu0 0.0
    %1166 = vmatprep.subr.mxu0 0.0
    %1167 = vmatpush1.msra.mxu0 0.0
    %1168 = vmatprep.subr.mxu0 0.0
    %1169 = vmatpush1.msra.mxu0 0.0
    %1170 = vmatprep.subr.mxu0 0.0
    %1171 = vmatpush1.msra.mxu0 0.0
    %1172 = vmatprep.subr.mxu0 0.0
    %1173 = vmatpush1.msra.mxu0 0.0
    %1174 = vmatprep.subr.mxu0 0.0
    %1175 = vmatpush1.msra.mxu0 0.0
    %1176 = vmatprep.subr.mxu0 0.0
    %1177 = vmatpush1.msra.mxu0 0.0
    %1178 = vmatprep.subr.mxu0 0.0
    %1179 = vmatpush1.msra.mxu0 0.0
    %1180 = vmatprep.subr.mxu0 0.0
    %1181 = vmatpush1.msra.mxu0 0.0
    %1182 = vmatprep.subr.mxu0 0.0
    %1183 = vmatpush1.msra.mxu0 0.0
    %1184 = vmatprep.subr.mxu0 0.0
    %1185 = vmatpush1.msra.mxu0 0.0
    %1186 = vmatprep.subr.mxu0 0.0
    %1187 = vmatpush1.msra.mxu0 0.0
    %1188 = vmatprep.subr.mxu0 0.0
    %1189 = vmatpush1.msra.mxu0 0.0
    %1190 = vmatprep.mubr.f32.mxu0 0.0
    %1191 = vmatmul.mubr.f32.gmra.mrb[0].mxu0 %v713
    %v1192 = vpop.f32.mrb[0].mxu0
    %v1193 = vadd.f32 0.0, %v1192
    %v1194 = vpop.f32.mrb[0].mxu0
    %v1195 = vadd.f32 0.0, %v1194
    %1196 = vdwg.mxu0
    %v1197 = vld [vmem:[%s6] sm:$0x3]
    %v1199 = vlaneseq
    %v1200 = vshrl.u32 %v1199, 7
    %v1201 = vsub.s32 0, %v1200
    %v1202 = vrot.slane %v1197, %v1201
    %v1203 = vlaneseq
    %v1204 = vshrl.u32 %v1203, 7
    %v1205 = vsub.s32 1, %v1204
    %v1206 = vrot.slane %v1197, %v1205
    %v1209 = vmul.f32 %v1202, %v1062
    %v1210 = vmul.f32 %v1206, %v1063
    %v1211 = vmul.f32 %v1202, %v1064
    %v1212 = vmul.f32 %v1206, %v1065
    %v1213 = vmul.f32 %v1202, %v1066
    %v1214 = vmul.f32 %v1206, %v1067
    %v1215 = vmul.f32 %v1202, %v1068
    %v1216 = vmul.f32 %v1206, %v1069
    %v1217 = vmul.f32 %v1202, %v1070
    %v1218 = vmul.f32 %v1206, %v1071
    %v1219 = vmul.f32 %v1202, %v1072
    %v1220 = vmul.f32 %v1206, %v1073
    %v1221 = vmul.f32 %v1202, %v1074
    %v1222 = vmul.f32 %v1206, %v1075
    %v1223 = vmul.f32 %v1202, %v1076
    %v1224 = vmul.f32 %v1206, %v1077
    %v1225 = vmul.f32 %v1202, %v1078
    %v1226 = vmul.f32 %v1206, %v1079
    %v1227 = vmul.f32 %v1202, %v1080
    %v1228 = vmul.f32 %v1206, %v1081
    %v1229 = vmul.f32 %v1202, %v1082
    %v1230 = vmul.f32 %v1206, %v1083
    %v1231 = vmul.f32 %v1202, %v1084
    %v1232 = vmul.f32 %v1206, %v1085
    %v1233 = vmul.f32 %v1202, %v1086
    %v1234 = vmul.f32 %v1206, %v1087
    %v1235 = vmul.f32 %v1202, %v1088
    %v1236 = vmul.f32 %v1206, %v1089
    %v1237 = vmul.f32 %v1202, %v1090
    %v1238 = vmul.f32 %v1206, %v1091
    %v1239 = vmul.f32 %v1202, %v1092
    %v1240 = vmul.f32 %v1206, %v1093
    %v1242 = vsel %vm850, %v1193, 0
    %v1245 = vsel %vm850, %v1195, 0
    %1247 = vmatprep.subr.mxu0 %v1245
    %1248 = vmatpush1.msra.mxu0 %v1242
    %1249 = vmatprep.subr.mxu0 0.0
    %1250 = vmatpush1.msra.mxu0 0.0
    %1251 = vmatprep.subr.mxu0 0.0
    %1252 = vmatpush1.msra.mxu0 0.0
    %1253 = vmatprep.subr.mxu0 0.0
    %1254 = vmatpush1.msra.mxu0 0.0
    %1255 = vmatprep.subr.mxu0 0.0
    %1256 = vmatpush1.msra.mxu0 0.0
    %1257 = vmatprep.subr.mxu0 0.0
    %1258 = vmatpush1.msra.mxu0 0.0
    %1259 = vmatprep.subr.mxu0 0.0
    %1260 = vmatpush1.msra.mxu0 0.0
    %1261 = vmatprep.subr.mxu0 0.0
    %1262 = vmatpush1.msra.mxu0 0.0
    %1263 = vmatprep.subr.mxu0 0.0
    %1264 = vmatpush1.msra.mxu0 0.0
    %1265 = vmatprep.subr.mxu0 0.0
    %1266 = vmatpush1.msra.mxu0 0.0
    %1267 = vmatprep.subr.mxu0 0.0
    %1268 = vmatpush1.msra.mxu0 0.0
    %1269 = vmatprep.subr.mxu0 0.0
    %1270 = vmatpush1.msra.mxu0 0.0
    %1271 = vmatprep.subr.mxu0 0.0
    %1272 = vmatpush1.msra.mxu0 0.0
    %1273 = vmatprep.subr.mxu0 0.0
    %1274 = vmatpush1.msra.mxu0 0.0
    %1275 = vmatprep.subr.mxu0 0.0
    %1276 = vmatpush1.msra.mxu0 0.0
    %1277 = vmatprep.subr.mxu0 0.0
    %1278 = vmatpush1.msra.mxu0 0.0
    %1279 = vmatprep.subr.mxu0 0.0
    %1280 = vmatpush1.msra.mxu0 0.0
    %1281 = vmatprep.subr.mxu0 0.0
    %1282 = vmatpush1.msra.mxu0 0.0
    %1283 = vmatprep.subr.mxu0 0.0
    %1284 = vmatpush1.msra.mxu0 0.0
    %1285 = vmatprep.subr.mxu0 0.0
    %1286 = vmatpush1.msra.mxu0 0.0
    %1287 = vmatprep.subr.mxu0 0.0
    %1288 = vmatpush1.msra.mxu0 0.0
    %1289 = vmatprep.subr.mxu0 0.0
    %1290 = vmatpush1.msra.mxu0 0.0
    %1291 = vmatprep.subr.mxu0 0.0
    %1292 = vmatpush1.msra.mxu0 0.0
    %1293 = vmatprep.subr.mxu0 0.0
    %1294 = vmatpush1.msra.mxu0 0.0
    %1295 = vmatprep.subr.mxu0 0.0
    %1296 = vmatpush1.msra.mxu0 0.0
    %1297 = vmatprep.subr.mxu0 0.0
    %1298 = vmatpush1.msra.mxu0 0.0
    %1299 = vmatprep.subr.mxu0 0.0
    %1300 = vmatpush1.msra.mxu0 0.0
    %1301 = vmatprep.subr.mxu0 0.0
    %1302 = vmatpush1.msra.mxu0 0.0
    %1303 = vmatprep.subr.mxu0 0.0
    %1304 = vmatpush1.msra.mxu0 0.0
    %1305 = vmatprep.subr.mxu0 0.0
    %1306 = vmatpush1.msra.mxu0 0.0
    %1307 = vmatprep.subr.mxu0 0.0
    %1308 = vmatpush1.msra.mxu0 0.0
    %1309 = vmatprep.subr.mxu0 0.0
    %1310 = vmatpush1.msra.mxu0 0.0
    %1311 = vmatprep.mubr.f32.mxu0 0.0
    %1312 = vmatmul.mubr.f32.gmra.mrb[0].mxu0 %v803
    %v1313 = vpop.f32.mrb[0].mxu0
    %v1314 = vadd.f32 1e-05, %v1313
    %v1315 = vpop.f32.mrb[0].mxu0
    %v1316 = vadd.f32 1e-05, %v1315
    %1317 = vmatprep.mubr.f32.mxu0 0.0
    %1318 = vmatmul.mubr.f32.gmra.mrb[0].mxu0 %v806
    %v1319 = vpop.f32.mrb[0].mxu0
    %v1320 = vadd.f32 1e-05, %v1319
    %v1321 = vpop.f32.mrb[0].mxu0
    %v1322 = vadd.f32 1e-05, %v1321
    %1323 = vmatprep.mubr.f32.mxu0 0.0
    %1324 = vmatmul.mubr.f32.gmra.mrb[0].mxu0 %v809
    %v1325 = vpop.f32.mrb[0].mxu0
    %v1326 = vadd.f32 1e-05, %v1325
    %v1327 = vpop.f32.mrb[0].mxu0
    %v1328 = vadd.f32 1e-05, %v1327
    %1329 = vmatprep.mubr.f32.mxu0 0.0
    %1330 = vmatmul.mubr.f32.gmra.mrb[0].mxu0 %v812
    %v1331 = vpop.f32.mrb[0].mxu0
    %v1332 = vadd.f32 1e-05, %v1331
    %v1333 = vpop.f32.mrb[0].mxu0
    %v1334 = vadd.f32 1e-05, %v1333
    %1335 = vmatprep.mubr.f32.mxu0 0.0
    %1336 = vmatmul.mubr.f32.gmra.mrb[0].mxu0 %v815
    %v1337 = vpop.f32.mrb[0].mxu0
    %v1338 = vadd.f32 1e-05, %v1337
    %v1339 = vpop.f32.mrb[0].mxu0
    %v1340 = vadd.f32 1e-05, %v1339
    %1341 = vmatprep.mubr.f32.mxu0 0.0
    %1342 = vmatmul.mubr.f32.gmra.mrb[0].mxu0 %v818
    %v1343 = vpop.f32.mrb[0].mxu0
    %v1344 = vadd.f32 1e-05, %v1343
    %v1345 = vpop.f32.mrb[0].mxu0
    %v1346 = vadd.f32 1e-05, %v1345
    %1347 = vmatprep.mubr.f32.mxu0 0.0
    %1348 = vmatmul.mubr.f32.gmra.mrb[0].mxu0 %v821
    %v1349 = vpop.f32.mrb[0].mxu0
    %v1350 = vadd.f32 1e-05, %v1349
    %v1351 = vpop.f32.mrb[0].mxu0
    %v1352 = vadd.f32 1e-05, %v1351
    %1353 = vmatprep.mubr.f32.mxu0 0.0
    %1354 = vmatmul.mubr.f32.gmra.mrb[0].mxu0 %v824
    %v1355 = vpop.f32.mrb[0].mxu0
    %v1356 = vadd.f32 1e-05, %v1355
    %v1357 = vpop.f32.mrb[0].mxu0
    %v1358 = vadd.f32 1e-05, %v1357
    %1359 = vmatprep.mubr.f32.mxu0 0.0
    %1360 = vmatmul.mubr.f32.gmra.mrb[0].mxu0 %v827
    %v1361 = vpop.f32.mrb[0].mxu0
    %v1362 = vadd.f32 1e-05, %v1361
    %v1363 = vpop.f32.mrb[0].mxu0
    %v1364 = vadd.f32 1e-05, %v1363
    %1365 = vmatprep.mubr.f32.mxu0 0.0
    %1366 = vmatmul.mubr.f32.gmra.mrb[0].mxu0 %v830
    %v1367 = vpop.f32.mrb[0].mxu0
    %v1368 = vadd.f32 1e-05, %v1367
    %v1369 = vpop.f32.mrb[0].mxu0
    %v1370 = vadd.f32 1e-05, %v1369
    %1371 = vmatprep.mubr.f32.mxu0 0.0
    %1372 = vmatmul.mubr.f32.gmra.mrb[0].mxu0 %v833
    %v1373 = vpop.f32.mrb[0].mxu0
    %v1374 = vadd.f32 1e-05, %v1373
    %v1375 = vpop.f32.mrb[0].mxu0
    %v1376 = vadd.f32 1e-05, %v1375
    %1377 = vmatprep.mubr.f32.mxu0 0.0
    %1378 = vmatmul.mubr.f32.gmra.mrb[0].mxu0 %v836
    %v1379 = vpop.f32.mrb[0].mxu0
    %v1380 = vadd.f32 1e-05, %v1379
    %v1381 = vpop.f32.mrb[0].mxu0
    %v1382 = vadd.f32 1e-05, %v1381
    %1383 = vmatprep.mubr.f32.mxu0 0.0
    %1384 = vmatmul.mubr.f32.gmra.mrb[0].mxu0 %v839
    %v1385 = vpop.f32.mrb[0].mxu0
    %v1386 = vadd.f32 1e-05, %v1385
    %v1387 = vpop.f32.mrb[0].mxu0
    %v1388 = vadd.f32 1e-05, %v1387
    %1389 = vmatprep.mubr.f32.mxu0 0.0
    %1390 = vmatmul.mubr.f32.gmra.mrb[0].mxu0 %v842
    %v1391 = vpop.f32.mrb[0].mxu0
    %v1392 = vadd.f32 1e-05, %v1391
    %v1393 = vpop.f32.mrb[0].mxu0
    %v1394 = vadd.f32 1e-05, %v1393
    %1395 = vmatprep.mubr.f32.mxu0 0.0
    %1396 = vmatmul.mubr.f32.gmra.mrb[0].mxu0 %v845
    %v1397 = vpop.f32.mrb[0].mxu0
    %v1398 = vadd.f32 1e-05, %v1397
    %v1399 = vpop.f32.mrb[0].mxu0
    %v1400 = vadd.f32 1e-05, %v1399
    %1401 = vmatprep.mubr.f32.mxu0 0.0
    %1402 = vmatmul.mubr.f32.gmra.mrb[0].mxu0 %v848
    %v1403 = vpop.f32.mrb[0].mxu0
    %v1404 = vadd.f32 1e-05, %v1403
    %v1405 = vpop.f32.mrb[0].mxu0
    %v1406 = vadd.f32 1e-05, %v1405
    %1407 = vdwg.mxu0
    %v1408 = vrsqrt.pop %v1314
    %v1409 = vrsqrt.pop %v1316
    %v1410 = vrsqrt.pop %v1320
    %v1411 = vrsqrt.pop %v1322
    %v1412 = vrsqrt.pop %v1326
    %v1413 = vrsqrt.pop %v1328
    %v1414 = vrsqrt.pop %v1332
    %v1415 = vrsqrt.pop %v1334
    %v1416 = vrsqrt.pop %v1338
    %v1417 = vrsqrt.pop %v1340
    %v1418 = vrsqrt.pop %v1344
    %v1419 = vrsqrt.pop %v1346
    %v1420 = vrsqrt.pop %v1350
    %v1421 = vrsqrt.pop %v1352
    %v1422 = vrsqrt.pop %v1356
    %v1423 = vrsqrt.pop %v1358
    %v1424 = vrsqrt.pop %v1362
    %v1425 = vrsqrt.pop %v1364
    %v1426 = vrsqrt.pop %v1368
    %v1427 = vrsqrt.pop %v1370
    %v1428 = vrsqrt.pop %v1374
    %v1429 = vrsqrt.pop %v1376
    %v1430 = vrsqrt.pop %v1380
    %v1431 = vrsqrt.pop %v1382
    %v1432 = vrsqrt.pop %v1386
    %v1433 = vrsqrt.pop %v1388
    %v1434 = vrsqrt.pop %v1392
    %v1435 = vrsqrt.pop %v1394
    %v1436 = vrsqrt.pop %v1398
    %v1437 = vrsqrt.pop %v1400
    %v1438 = vrsqrt.pop %v1404
    %v1439 = vrsqrt.pop %v1406
    %v1440 = vmul.f32 %v1209, %v1408
    %v1441 = vmul.f32 %v1210, %v1409
    %v1442 = vmul.f32 %v1211, %v1410
    %v1443 = vmul.f32 %v1212, %v1411
    %v1444 = vmul.f32 %v1213, %v1412
    %v1445 = vmul.f32 %v1214, %v1413
    %v1446 = vmul.f32 %v1215, %v1414
    %v1447 = vmul.f32 %v1216, %v1415
    %v1448 = vmul.f32 %v1217, %v1416
    %v1449 = vmul.f32 %v1218, %v1417
    %v1450 = vmul.f32 %v1219, %v1418
    %v1451 = vmul.f32 %v1220, %v1419
    %v1452 = vmul.f32 %v1221, %v1420
    %v1453 = vmul.f32 %v1222, %v1421
    %v1454 = vmul.f32 %v1223, %v1422
    %v1455 = vmul.f32 %v1224, %v1423
    %v1456 = vmul.f32 %v1225, %v1424
    %v1457 = vmul.f32 %v1226, %v1425
    %v1458 = vmul.f32 %v1227, %v1426
    %v1459 = vmul.f32 %v1228, %v1427
    %v1460 = vmul.f32 %v1229, %v1428
    %v1461 = vmul.f32 %v1230, %v1429
    %v1462 = vmul.f32 %v1231, %v1430
    %v1463 = vmul.f32 %v1232, %v1431
    %v1464 = vmul.f32 %v1233, %v1432
    %v1465 = vmul.f32 %v1234, %v1433
    %v1466 = vmul.f32 %v1235, %v1434
    %v1467 = vmul.f32 %v1236, %v1435
    %v1468 = vmul.f32 %v1237, %v1436
    %v1469 = vmul.f32 %v1238, %v1437
    %v1470 = vmul.f32 %v1239, %v1438
    %v1471 = vmul.f32 %v1240, %v1439
    %v1472 = vld [vmem:[%s7] sm:$0x3]
    %v1474 = vlaneseq
    %v1475 = vshrl.u32 %v1474, 7
    %v1476 = vsub.s32 0, %v1475
    %v1477 = vrot.slane %v1472, %v1476
    %v1478 = vlaneseq
    %v1479 = vshrl.u32 %v1478, 7
    %v1480 = vsub.s32 1, %v1479
    %v1481 = vrot.slane %v1472, %v1480
    %v1484 = vadd.f32 %v1440, %v1477
    %v1485 = vadd.f32 %v1441, %v1481
    %v1486 = vadd.f32 %v1442, %v1477
    %v1487 = vadd.f32 %v1443, %v1481
    %v1488 = vadd.f32 %v1444, %v1477
    %v1489 = vadd.f32 %v1445, %v1481
    %v1490 = vadd.f32 %v1446, %v1477
    %v1491 = vadd.f32 %v1447, %v1481
    %v1492 = vadd.f32 %v1448, %v1477
    %v1493 = vadd.f32 %v1449, %v1481
    %v1494 = vadd.f32 %v1450, %v1477
    %v1495 = vadd.f32 %v1451, %v1481
    %v1496 = vadd.f32 %v1452, %v1477
    %v1497 = vadd.f32 %v1453, %v1481
    %v1498 = vadd.f32 %v1454, %v1477
    %v1499 = vadd.f32 %v1455, %v1481
    %v1500 = vadd.f32 %v1456, %v1477
    %v1501 = vadd.f32 %v1457, %v1481
    %v1502 = vadd.f32 %v1458, %v1477
    %v1503 = vadd.f32 %v1459, %v1481
    %v1504 = vadd.f32 %v1460, %v1477
    %v1505 = vadd.f32 %v1461, %v1481
    %v1506 = vadd.f32 %v1462, %v1477
    %v1507 = vadd.f32 %v1463, %v1481
    %v1508 = vadd.f32 %v1464, %v1477
    %v1509 = vadd.f32 %v1465, %v1481
    %v1510 = vadd.f32 %v1466, %v1477
    %v1511 = vadd.f32 %v1467, %v1481
    %v1512 = vadd.f32 %v1468, %v1477
    %v1513 = vadd.f32 %v1469, %v1481
    %v1514 = vadd.f32 %v1470, %v1477
    %v1515 = vadd.f32 %v1471, %v1481
    %vm1516 = vcmp.ge.f32.partialorder %v1484, 0.0
    %vm1517 = vcmp.ge.f32.partialorder %v1485, 0.0
    %vm1518 = vcmp.ge.f32.partialorder %v1486, 0.0
    %vm1519 = vcmp.ge.f32.partialorder %v1487, 0.0
    %vm1520 = vcmp.ge.f32.partialorder %v1488, 0.0
    %vm1521 = vcmp.ge.f32.partialorder %v1489, 0.0
    %vm1522 = vcmp.ge.f32.partialorder %v1490, 0.0
    %vm1523 = vcmp.ge.f32.partialorder %v1491, 0.0
    %vm1524 = vcmp.ge.f32.partialorder %v1492, 0.0
    %vm1525 = vcmp.ge.f32.partialorder %v1493, 0.0
    %vm1526 = vcmp.ge.f32.partialorder %v1494, 0.0
    %vm1527 = vcmp.ge.f32.partialorder %v1495, 0.0
    %vm1528 = vcmp.ge.f32.partialorder %v1496, 0.0
    %vm1529 = vcmp.ge.f32.partialorder %v1497, 0.0
    %vm1530 = vcmp.ge.f32.partialorder %v1498, 0.0
    %vm1531 = vcmp.ge.f32.partialorder %v1499, 0.0
    %vm1532 = vcmp.ge.f32.partialorder %v1500, 0.0
    %vm1533 = vcmp.ge.f32.partialorder %v1501, 0.0
    %vm1534 = vcmp.ge.f32.partialorder %v1502, 0.0
    %vm1535 = vcmp.ge.f32.partialorder %v1503, 0.0
    %vm1536 = vcmp.ge.f32.partialorder %v1504, 0.0
    %vm1537 = vcmp.ge.f32.partialorder %v1505, 0.0
    %vm1538 = vcmp.ge.f32.partialorder %v1506, 0.0
    %vm1539 = vcmp.ge.f32.partialorder %v1507, 0.0
    %vm1540 = vcmp.ge.f32.partialorder %v1508, 0.0
    %vm1541 = vcmp.ge.f32.partialorder %v1509, 0.0
    %vm1542 = vcmp.ge.f32.partialorder %v1510, 0.0
    %vm1543 = vcmp.ge.f32.partialorder %v1511, 0.0
    %vm1544 = vcmp.ge.f32.partialorder %v1512, 0.0
    %vm1545 = vcmp.ge.f32.partialorder %v1513, 0.0
    %vm1546 = vcmp.ge.f32.partialorder %v1514, 0.0
    %vm1547 = vcmp.ge.f32.partialorder %v1515, 0.0
    %v1548 = vld [vmem:[%s9] sm:$0x3]
    %v1550 = vlaneseq
    %v1551 = vshrl.u32 %v1550, 7
    %v1552 = vsub.s32 0, %v1551
    %v1553 = vrot.slane %v1548, %v1552
    %v1554 = vlaneseq
    %v1555 = vshrl.u32 %v1554, 7
    %v1556 = vsub.s32 1, %v1555
    %v1557 = vrot.slane %v1548, %v1556
    %v1560 = vmul.f32 %v1553, %v1484
    %v1561 = vmul.f32 %v1557, %v1485
    %v1562 = vmul.f32 %v1553, %v1486
    %v1563 = vmul.f32 %v1557, %v1487
    %v1564 = vmul.f32 %v1553, %v1488
    %v1565 = vmul.f32 %v1557, %v1489
    %v1566 = vmul.f32 %v1553, %v1490
    %v1567 = vmul.f32 %v1557, %v1491
    %v1568 = vmul.f32 %v1553, %v1492
    %v1569 = vmul.f32 %v1557, %v1493
    %v1570 = vmul.f32 %v1553, %v1494
    %v1571 = vmul.f32 %v1557, %v1495
    %v1572 = vmul.f32 %v1553, %v1496
    %v1573 = vmul.f32 %v1557, %v1497
    %v1574 = vmul.f32 %v1553, %v1498
    %v1575 = vmul.f32 %v1557, %v1499
    %v1576 = vmul.f32 %v1553, %v1500
    %v1577 = vmul.f32 %v1557, %v1501
    %v1578 = vmul.f32 %v1553, %v1502
    %v1579 = vmul.f32 %v1557, %v1503
    %v1580 = vmul.f32 %v1553, %v1504
    %v1581 = vmul.f32 %v1557, %v1505
    %v1582 = vmul.f32 %v1553, %v1506
    %v1583 = vmul.f32 %v1557, %v1507
    %v1584 = vmul.f32 %v1553, %v1508
    %v1585 = vmul.f32 %v1557, %v1509
    %v1586 = vmul.f32 %v1553, %v1510
    %v1587 = vmul.f32 %v1557, %v1511
    %v1588 = vmul.f32 %v1553, %v1512
    %v1589 = vmul.f32 %v1557, %v1513
    %v1590 = vmul.f32 %v1553, %v1514
    %v1591 = vmul.f32 %v1557, %v1515
    %v1592 = vsel %vm1516, %v1484, %v1560
    %v1593 = vsel %vm1517, %v1485, %v1561
    %v1594 = vsel %vm1518, %v1486, %v1562
    %v1595 = vsel %vm1519, %v1487, %v1563
    %v1596 = vsel %vm1520, %v1488, %v1564
    %v1597 = vsel %vm1521, %v1489, %v1565
    %v1598 = vsel %vm1522, %v1490, %v1566
    %v1599 = vsel %vm1523, %v1491, %v1567
    %v1600 = vsel %vm1524, %v1492, %v1568
    %v1601 = vsel %vm1525, %v1493, %v1569
    %v1602 = vsel %vm1526, %v1494, %v1570
    %v1603 = vsel %vm1527, %v1495, %v1571
    %v1604 = vsel %vm1528, %v1496, %v1572
    %v1605 = vsel %vm1529, %v1497, %v1573
    %v1606 = vsel %vm1530, %v1498, %v1574
    %v1607 = vsel %vm1531, %v1499, %v1575
    %v1608 = vsel %vm1532, %v1500, %v1576
    %v1609 = vsel %vm1533, %v1501, %v1577
    %v1610 = vsel %vm1534, %v1502, %v1578
    %v1611 = vsel %vm1535, %v1503, %v1579
    %v1612 = vsel %vm1536, %v1504, %v1580
    %v1613 = vsel %vm1537, %v1505, %v1581
    %v1614 = vsel %vm1538, %v1506, %v1582
    %v1615 = vsel %vm1539, %v1507, %v1583
    %v1616 = vsel %vm1540, %v1508, %v1584
    %v1617 = vsel %vm1541, %v1509, %v1585
    %v1618 = vsel %vm1542, %v1510, %v1586
    %v1619 = vsel %vm1543, %v1511, %v1587
    %v1620 = vsel %vm1544, %v1512, %v1588
    %v1621 = vsel %vm1545, %v1513, %v1589
    %v1622 = vsel %vm1546, %v1514, %v1590
    %v1623 = vsel %vm1547, %v1515, %v1591
    %v1624 = vpack.c.bf16 %v1594, %v1592
    %v1625 = vpack.c.bf16 %v1595, %v1593
    %v1626 = vpack.c.bf16 %v1598, %v1596
    %v1627 = vpack.c.bf16 %v1599, %v1597
    %v1628 = vpack.c.bf16 %v1602, %v1600
    %v1629 = vpack.c.bf16 %v1603, %v1601
    %v1630 = vpack.c.bf16 %v1606, %v1604
    %v1631 = vpack.c.bf16 %v1607, %v1605
    %v1632 = vpack.c.bf16 %v1610, %v1608
    %v1633 = vpack.c.bf16 %v1611, %v1609
    %v1634 = vpack.c.bf16 %v1614, %v1612
    %v1635 = vpack.c.bf16 %v1615, %v1613
    %v1636 = vpack.c.bf16 %v1618, %v1616
    %v1637 = vpack.c.bf16 %v1619, %v1617
    %v1638 = vpack.c.bf16 %v1622, %v1620
    %v1639 = vpack.c.bf16 %v1623, %v1621
    %v1656 = vunpack.c.l.b16 %v1624
    %v1657 = vunpack.c.l.b16 %v1625
    %v1658 = vunpack.c.h.b16 %v1624
    %v1659 = vunpack.c.h.b16 %v1625
    %v1660 = vunpack.c.l.b16 %v1626
    %v1661 = vunpack.c.l.b16 %v1627
    %v1662 = vunpack.c.h.b16 %v1626
    %v1663 = vunpack.c.h.b16 %v1627
    %v1664 = vunpack.c.l.b16 %v1628
    %v1665 = vunpack.c.l.b16 %v1629
    %v1666 = vunpack.c.h.b16 %v1628
    %v1667 = vunpack.c.h.b16 %v1629
    %v1668 = vunpack.c.l.b16 %v1630
    %v1669 = vunpack.c.l.b16 %v1631
    %v1670 = vunpack.c.h.b16 %v1630
    %v1671 = vunpack.c.h.b16 %v1631
    %v1672 = vunpack.c.l.b16 %v1632
    %v1673 = vunpack.c.l.b16 %v1633
    %v1674 = vunpack.c.h.b16 %v1632
    %v1675 = vunpack.c.h.b16 %v1633
    %v1676 = vunpack.c.l.b16 %v1634
    %v1677 = vunpack.c.l.b16 %v1635
    %v1678 = vunpack.c.h.b16 %v1634
    %v1679 = vunpack.c.h.b16 %v1635
    %v1680 = vunpack.c.l.b16 %v1636
    %v1681 = vunpack.c.l.b16 %v1637
    %v1682 = vunpack.c.h.b16 %v1636
    %v1683 = vunpack.c.h.b16 %v1637
    %v1684 = vunpack.c.l.b16 %v1638
    %v1685 = vunpack.c.l.b16 %v1639
    %v1686 = vunpack.c.h.b16 %v1638
    %v1687 = vunpack.c.h.b16 %v1639
    %v1688 = vpack.c.b16 %v1657, %v1656
    %v1689 = vpack.c.b16 %v1659, %v1658
    %v1690 = vpack.c.b16 %v1661, %v1660
    %v1691 = vpack.c.b16 %v1663, %v1662
    %v1692 = vpack.c.b16 %v1665, %v1664
    %v1693 = vpack.c.b16 %v1667, %v1666
    %v1694 = vpack.c.b16 %v1669, %v1668
    %v1695 = vpack.c.b16 %v1671, %v1670
    %v1696 = vpack.c.b16 %v1673, %v1672
    %v1697 = vpack.c.b16 %v1675, %v1674
    %v1698 = vpack.c.b16 %v1677, %v1676
    %v1699 = vpack.c.b16 %v1679, %v1678
    %v1700 = vpack.c.b16 %v1681, %v1680
    %v1701 = vpack.c.b16 %v1683, %v1682
    %v1702 = vpack.c.b16 %v1685, %v1684
    %v1703 = vpack.c.b16 %v1687, %v1686
    %1720 = vst [vmem:[%s10] sm:$0xff] %v1688
    %1721 = vst [vmem:[%s10 + $0x8] sm:$0xff] %v1689
    %1722 = vst [vmem:[%s10 + $0x10] sm:$0xff] %v1690
    %1723 = vst [vmem:[%s10 + $0x18] sm:$0xff] %v1691
    %1724 = vst [vmem:[%s10 + $0x20] sm:$0xff] %v1692
    %1725 = vst [vmem:[%s10 + $0x28] sm:$0xff] %v1693
    %1726 = vst [vmem:[%s10 + $0x30] sm:$0xff] %v1694
    %1727 = vst [vmem:[%s10 + $0x38] sm:$0xff] %v1695
    %1728 = vst [vmem:[%s10 + $0x40] sm:$0xff] %v1696
    %1729 = vst [vmem:[%s10 + $0x48] sm:$0xff] %v1697
    %1730 = vst [vmem:[%s10 + $0x50] sm:$0xff] %v1698
    %1731 = vst [vmem:[%s10 + $0x58] sm:$0xff] %v1699
    %1732 = vst [vmem:[%s10 + $0x60] sm:$0xff] %v1700
    %1733 = vst [vmem:[%s10 + $0x68] sm:$0xff] %v1701
    %1734 = vst [vmem:[%s10 + $0x70] sm:$0xff] %v1702
    %1735 = vst [vmem:[%s10 + $0x78] sm:$0xff] %v1703
  $region49: #{net10_forward.3} parent=0 // pred_fallthru
    _
  // Predicated region
  $region50: #{net10_forward.3} parent=0 // pred_check
    _
  $region51: #{net10_forward.3} parent=0 // pred_check_branch
    %1737 = sbr.rel (0) target = $region53
  $region52: #{net10_forward.3} parent=0 // pred_region
    _
  $region53: #{net10_forward.3} parent=0 // pred_fallthru
    _
  // Predicated region
  $region54: #{net10_forward.3} parent=0 // pred_check
    _
  $region55: #{net10_forward.3} parent=0 // pred_check_branch
    %1739 = sbr.rel (0) target = $region57
  $region56: #{net10_forward.3} parent=0 // pred_region
    _
  $region57: #{net10_forward.3} parent=0 // pred_fallthru
    _

</llo_original>
